<compile_context>
chip_gen: v7x
topology: tpu7x:2x2x1
jax: 0.10.0
libtpu: 0.0.40
codegen_flags: <defaults>
</compile_context>

<pallas_src>
import functools

import numpy as np
import jax
import jax.numpy as jnp
from jax.experimental import pallas as pl
from jax.experimental.pallas import tpu as pltpu

NEG_SLOPE = 0.01  # nn.LeakyReLU default


# ----------------------------------------------------------------------------
# The fused Pallas kernel: whole encoder for one batch element per grid step.
# ----------------------------------------------------------------------------
def _encoder_kernel(x_ref, s_ref, v_ref, b_ref, o_ref):
    # x_ref: (1, Mpad, Lpad)        input row-matrix for this image
    # s_ref: (L, 3, Mpad, Mpad)     row-selection matrices (vertical stride-2)
    # v_ref: (L, 3, Lpad, Lpad)     scattered conv weights (horizontal stride-2)
    # b_ref: (L, 1, Lpad)           bias rows (tiled over output width)
    # o_ref: (1, Mpad, Lpad)        output row-matrix
    x = x_ref[0]
    n_layers = s_ref.shape[0]
    for layer in range(n_layers):            # static unroll: 6 layers
        rows = jnp.dot(s_ref[layer, 0], x, preferred_element_type=jnp.float32)
        acc = jnp.dot(rows, v_ref[layer, 0], preferred_element_type=jnp.float32)
        for kh in (1, 2):
            rows = jnp.dot(s_ref[layer, kh], x,
                           preferred_element_type=jnp.float32)
            acc = acc + jnp.dot(rows, v_ref[layer, kh],
                                preferred_element_type=jnp.float32)
        acc = acc + b_ref[layer]             # (1, Lpad) broadcast over rows
        x = jnp.where(acc > 0.0, acc, NEG_SLOPE * acc)   # LeakyReLU
    o_ref[0] = x.astype(o_ref.dtype)


# ----------------------------------------------------------------------------
# One-time parameter packing: conv weights -> (S, V, b_row) matrices.
# ----------------------------------------------------------------------------
def _round_up(x, m):
    return ((x + m - 1) // m) * m


def _pack_encoder(params, num_input_channels, H, W):
    n_layers = len(params)
    # Per-layer spatial/channel dims.
    dims = []
    h, w_sp, cin = H, W, num_input_channels
    for (wt, _) in params:
        cout = wt.shape[0]
        ho, wo = (h - 1) // 2 + 1, (w_sp - 1) // 2 + 1
        dims.append((h, w_sp, cin, ho, wo, cout))
        h, w_sp, cin = ho, wo, cout

    Mpad = _round_up(max(max(d[0], d[3]) for d in dims), 8)
    Lpad = _round_up(max(max(d[1] * d[2], d[4] * d[5]) for d in dims), 128)

    S_all = np.zeros((n_layers, 3, Mpad, Mpad), np.float32)
    V_all = np.zeros((n_layers, 3, Lpad, Lpad), np.float32)
    b_all = np.zeros((n_layers, 1, Lpad), np.float32)

    for l, ((wt, bias), (h, w_sp, cin, ho, wo, cout)) in enumerate(zip(params, dims)):
        wt = np.asarray(jax.device_get(wt), np.float32)     # (Cout, Cin, 3, 3)
        bias = np.asarray(jax.device_get(bias), np.float32)  # (Cout,)
        for kh in range(3):
            # Vertical stride-2 + padding: pick input row 2*ho + kh - 1.
            for r in range(ho):
                hh = 2 * r + kh - 1
                if 0 <= hh < h:
                    S_all[l, kh, r, hh] = 1.0
            # Horizontal stride-2 + padding: scatter w[:, :, kh, kw] so that
            # column block wo picks input columns 2*wo + kw - 1.
            for q in range(wo):
                for kw in range(3):
                    ww = 2 * q + kw - 1
                    if 0 <= ww < w_sp:
                        V_all[l, kh,
                              ww * cin:(ww + 1) * cin,
                              q * cout:(q + 1) * cout] = wt[:, :, kh, kw].T
        b_all[l, 0, :wo * cout] = np.tile(bias, wo)

    meta = dict(Mpad=Mpad, Lpad=Lpad, H=H, W=W, Cin=num_input_channels,
                Ho=dims[-1][3], Wo=dims[-1][4], Cout=dims[-1][5])
    return jnp.asarray(S_all), jnp.asarray(V_all), jnp.asarray(b_all), meta


# ----------------------------------------------------------------------------
# Encoder builder: packs params once, returns a jitted NCHW -> NCHW forward.
# ----------------------------------------------------------------------------
def make_encoder_forward(params, num_input_channels, H, W):
    S_all, V_all, b_all, meta = _pack_encoder(params, num_input_channels, H, W)
    Mpad, Lpad = meta["Mpad"], meta["Lpad"]
    Ho_f, Wo_f, Cout_f = meta["Ho"], meta["Wo"], meta["Cout"]

    @jax.jit
    def forward(x_nchw):
        N, Cin, Hx, Wx = x_nchw.shape
        assert (Hx, Wx, Cin) == (H, W, num_input_channels)
        # NCHW -> per-image row matrix (N, H, W*Cin), zero-pad to (Mpad, Lpad).
        x = jnp.transpose(x_nchw.astype(jnp.float32), (0, 2, 3, 1))
        x = x.reshape(N, Hx, Wx * Cin)
        x = jnp.pad(x, ((0, 0), (0, Mpad - Hx), (0, Lpad - Wx * Cin)))

        out = pl.pallas_call(
            _encoder_kernel,
            out_shape=jax.ShapeDtypeStruct((N, Mpad, Lpad), jnp.float32),
            grid=(N,),
            in_specs=[
                pl.BlockSpec((1, Mpad, Lpad), lambda n: (n, 0, 0)),
                pl.BlockSpec(S_all.shape, lambda n: (0, 0, 0, 0)),
                pl.BlockSpec(V_all.shape, lambda n: (0, 0, 0, 0)),
                pl.BlockSpec(b_all.shape, lambda n: (0, 0, 0)),
            ],
            out_specs=pl.BlockSpec((1, Mpad, Lpad), lambda n: (n, 0, 0)),
            compiler_params=pltpu.CompilerParams(
                dimension_semantics=("parallel",)),
        )(x, S_all, V_all, b_all)

        # Un-pad and map row matrix back to NCHW.
        out = out[:, :Ho_f, :Wo_f * Cout_f]
        out = out.reshape(N, Ho_f, Wo_f, Cout_f)
        return jnp.transpose(out, (0, 3, 1, 2))

    return forward


# ----------------------------------------------------------------------------
# Parameter init (matches nn.Conv2d default init shapes/layout) + reference.
# ----------------------------------------------------------------------------
def init_encoder_params(key, num_input_channels, base_channel_size):
    c = base_channel_size
    chans = [num_input_channels, c, 2 * c, 4 * c, 8 * c, 16 * c, 16 * c]
    params = []
    for li in range(6):
        cin, cout = chans[li], chans[li + 1]
        key, kw, kb = jax.random.split(key, 3)
        bound = 1.0 / np.sqrt(cin * 9)
        w = jax.random.uniform(kw, (cout, cin, 3, 3), jnp.float32, -bound, bound)
        b = jax.random.uniform(kb, (cout,), jnp.float32, -bound, bound)
        params.append((w, b))
    return params


def encoder_reference(x_nchw, params):
    x = x_nchw.astype(jnp.float32)
    for w, b in params:
        x = jax.lax.conv_general_dilated(
            x, w, window_strides=(2, 2), padding=((1, 1), (1, 1)),
            dimension_numbers=("NCHW", "OIHW", "NCHW"))
        x = x + b.reshape(1, -1, 1, 1)
        x = jnp.where(x > 0, x, NEG_SLOPE * x)
    return x


if __name__ == "__main__":
    key = jax.random.PRNGKey(0)
    k_x, k_p = jax.random.split(key)

    num_input_channels = 4
    base_channel_size = 4
    N, H, W = 2, 32, 32   # 32 -> 16 -> 8 -> 4 -> 2 -> 1 -> 1 over 6 stride-2 convs

    x = jax.random.normal(k_x, (N, num_input_channels, H, W), jnp.float32)
    params = init_encoder_params(k_p, num_input_channels, base_channel_size)

    encoder_forward = make_encoder_forward(params, num_input_channels, H, W)
    out = jax.block_until_ready(encoder_forward(x))

    ref = jax.block_until_ready(encoder_reference(x, params))
    assert out.shape == ref.shape == (N, 16 * base_channel_size, 1, 1), out.shape
    assert jnp.allclose(out, ref, rtol=1e-4, atol=1e-4), float(
        jnp.max(jnp.abs(out - ref)))

    print("KERNEL_OK")
</pallas_src>

<mosaic_0001>
module attributes {stable_mosaic.version = 11 : i64} {
  func.func @_encoder_kernel(%arg0: i32, %arg1: memref<1x32x128xf32, #tpu.memory_space<vmem>>, %arg2: memref<6x3x32x32xf32, #tpu.memory_space<vmem>>, %arg3: memref<6x3x128x128xf32, #tpu.memory_space<vmem>>, %arg4: memref<6x1x128xf32, #tpu.memory_space<vmem>>, %arg5: memref<1x32x128xf32, #tpu.memory_space<vmem>>) attributes {dimension_semantics = [#tpu.dimension_semantics<parallel>], iteration_bounds = array<i64: 2>, scalar_prefetch = 0 : i64, scratch_operands = 0 : i64, tpu.core_type = #tpu.core_type<tc>, window_params = [{transform_indices = @transform_0, window_bounds = array<i64: 1, 32, 128>}, {pipeline_mode = #tpu.pipeline_mode<synchronous>, transform_indices = @transform_1, window_bounds = array<i64: 6, 3, 32, 32>}, {pipeline_mode = #tpu.pipeline_mode<synchronous>, transform_indices = @transform_2, window_bounds = array<i64: 6, 3, 128, 128>}, {pipeline_mode = #tpu.pipeline_mode<synchronous>, transform_indices = @transform_3, window_bounds = array<i64: 6, 1, 128>}, {transform_indices = @transform_4, window_bounds = array<i64: 1, 32, 128>}]} {
    %c0 = arith.constant 0 : index
    %c0_0 = arith.constant 0 : index
    %c0_1 = arith.constant 0 : index
    %0 = vector.load %arg1[%c0, %c0_0, %c0_1] : memref<1x32x128xf32, #tpu.memory_space<vmem>>, vector<1x32x128xf32>
    %1 = vector.shape_cast %0 : vector<1x32x128xf32> to vector<32x128xf32>
    %c0_2 = arith.constant 0 : index
    %c0_3 = arith.constant 0 : index
    %c0_4 = arith.constant 0 : index
    %c0_5 = arith.constant 0 : index
    %2 = vector.load %arg2[%c0_2, %c0_3, %c0_4, %c0_5] : memref<6x3x32x32xf32, #tpu.memory_space<vmem>>, vector<1x1x32x32xf32>
    %3 = vector.shape_cast %2 : vector<1x1x32x32xf32> to vector<32x32xf32>
    %cst = arith.constant dense<0.000000e+00> : vector<32x128xf32>
    %4 = tpu.matmul %3, %1, %cst {dimension_numbers = #tpu.dot_dimension_numbers<[1], [0], [0], [1], [0, 0, 1, 1], [], []>} : vector<32x32xf32>, vector<32x128xf32>, vector<32x128xf32> -> vector<32x128xf32>
    %c0_6 = arith.constant 0 : index
    %c0_7 = arith.constant 0 : index
    %c0_8 = arith.constant 0 : index
    %c0_9 = arith.constant 0 : index
    %5 = vector.load %arg3[%c0_6, %c0_7, %c0_8, %c0_9] : memref<6x3x128x128xf32, #tpu.memory_space<vmem>>, vector<1x1x128x128xf32>
    %6 = vector.shape_cast %5 : vector<1x1x128x128xf32> to vector<128x128xf32>
    %cst_10 = arith.constant dense<0.000000e+00> : vector<32x128xf32>
    %7 = tpu.matmul %4, %6, %cst_10 {dimension_numbers = #tpu.dot_dimension_numbers<[1], [0], [0], [1], [0, 0, 1, 1], [], []>} : vector<32x128xf32>, vector<128x128xf32>, vector<32x128xf32> -> vector<32x128xf32>
    %c0_11 = arith.constant 0 : index
    %c1 = arith.constant 1 : index
    %c0_12 = arith.constant 0 : index
    %c0_13 = arith.constant 0 : index
    %8 = vector.load %arg2[%c0_11, %c1, %c0_12, %c0_13] : memref<6x3x32x32xf32, #tpu.memory_space<vmem>>, vector<1x1x32x32xf32>
    %9 = vector.shape_cast %8 : vector<1x1x32x32xf32> to vector<32x32xf32>
    %cst_14 = arith.constant dense<0.000000e+00> : vector<32x128xf32>
    %10 = tpu.matmul %9, %1, %cst_14 {dimension_numbers = #tpu.dot_dimension_numbers<[1], [0], [0], [1], [0, 0, 1, 1], [], []>} : vector<32x32xf32>, vector<32x128xf32>, vector<32x128xf32> -> vector<32x128xf32>
    %c0_15 = arith.constant 0 : index
    %c1_16 = arith.constant 1 : index
    %c0_17 = arith.constant 0 : index
    %c0_18 = arith.constant 0 : index
    %11 = vector.load %arg3[%c0_15, %c1_16, %c0_17, %c0_18] : memref<6x3x128x128xf32, #tpu.memory_space<vmem>>, vector<1x1x128x128xf32>
    %12 = vector.shape_cast %11 : vector<1x1x128x128xf32> to vector<128x128xf32>
    %cst_19 = arith.constant dense<0.000000e+00> : vector<32x128xf32>
    %13 = tpu.matmul %10, %12, %cst_19 {dimension_numbers = #tpu.dot_dimension_numbers<[1], [0], [0], [1], [0, 0, 1, 1], [], []>} : vector<32x128xf32>, vector<128x128xf32>, vector<32x128xf32> -> vector<32x128xf32>
    %14 = arith.addf %7, %13 : vector<32x128xf32>
    %c0_20 = arith.constant 0 : index
    %c2 = arith.constant 2 : index
    %c0_21 = arith.constant 0 : index
    %c0_22 = arith.constant 0 : index
    %15 = vector.load %arg2[%c0_20, %c2, %c0_21, %c0_22] : memref<6x3x32x32xf32, #tpu.memory_space<vmem>>, vector<1x1x32x32xf32>
    %16 = vector.shape_cast %15 : vector<1x1x32x32xf32> to vector<32x32xf32>
    %cst_23 = arith.constant dense<0.000000e+00> : vector<32x128xf32>
    %17 = tpu.matmul %16, %1, %cst_23 {dimension_numbers = #tpu.dot_dimension_numbers<[1], [0], [0], [1], [0, 0, 1, 1], [], []>} : vector<32x32xf32>, vector<32x128xf32>, vector<32x128xf32> -> vector<32x128xf32>
    %c0_24 = arith.constant 0 : index
    %c2_25 = arith.constant 2 : index
    %c0_26 = arith.constant 0 : index
    %c0_27 = arith.constant 0 : index
    %18 = vector.load %arg3[%c0_24, %c2_25, %c0_26, %c0_27] : memref<6x3x128x128xf32, #tpu.memory_space<vmem>>, vector<1x1x128x128xf32>
    %19 = vector.shape_cast %18 : vector<1x1x128x128xf32> to vector<128x128xf32>
    %cst_28 = arith.constant dense<0.000000e+00> : vector<32x128xf32>
    %20 = tpu.matmul %17, %19, %cst_28 {dimension_numbers = #tpu.dot_dimension_numbers<[1], [0], [0], [1], [0, 0, 1, 1], [], []>} : vector<32x128xf32>, vector<128x128xf32>, vector<32x128xf32> -> vector<32x128xf32>
    %21 = arith.addf %14, %20 : vector<32x128xf32>
    %c0_29 = arith.constant 0 : index
    %c0_30 = arith.constant 0 : index
    %c0_31 = arith.constant 0 : index
    %22 = vector.load %arg4[%c0_29, %c0_30, %c0_31] : memref<6x1x128xf32, #tpu.memory_space<vmem>>, vector<1x1x128xf32>
    %23 = vector.shape_cast %22 : vector<1x1x128xf32> to vector<1x128xf32>
    %24 = vector.broadcast %23 : vector<1x128xf32> to vector<32x128xf32>
    %25 = arith.addf %21, %24 : vector<32x128xf32>
    %cst_32 = arith.constant 0.000000e+00 : f32
    %26 = vector.broadcast %cst_32 : f32 to vector<32x128xf32>
    %27 = arith.cmpf ogt, %25, %26 : vector<32x128xf32>
    %cst_33 = arith.constant 0.00999999977 : f32
    %28 = vector.broadcast %cst_33 : f32 to vector<32x128xf32>
    %29 = arith.mulf %28, %25 : vector<32x128xf32>
    %30 = arith.select %27, %25, %29 : vector<32x128xi1>, vector<32x128xf32>
    %c1_34 = arith.constant 1 : index
    %c0_35 = arith.constant 0 : index
    %c0_36 = arith.constant 0 : index
    %c0_37 = arith.constant 0 : index
    %31 = vector.load %arg2[%c1_34, %c0_35, %c0_36, %c0_37] : memref<6x3x32x32xf32, #tpu.memory_space<vmem>>, vector<1x1x32x32xf32>
    %32 = vector.shape_cast %31 : vector<1x1x32x32xf32> to vector<32x32xf32>
    %cst_38 = arith.constant dense<0.000000e+00> : vector<32x128xf32>
    %33 = tpu.matmul %32, %30, %cst_38 {dimension_numbers = #tpu.dot_dimension_numbers<[1], [0], [0], [1], [0, 0, 1, 1], [], []>} : vector<32x32xf32>, vector<32x128xf32>, vector<32x128xf32> -> vector<32x128xf32>
    %c1_39 = arith.constant 1 : index
    %c0_40 = arith.constant 0 : index
    %c0_41 = arith.constant 0 : index
    %c0_42 = arith.constant 0 : index
    %34 = vector.load %arg3[%c1_39, %c0_40, %c0_41, %c0_42] : memref<6x3x128x128xf32, #tpu.memory_space<vmem>>, vector<1x1x128x128xf32>
    %35 = vector.shape_cast %34 : vector<1x1x128x128xf32> to vector<128x128xf32>
    %cst_43 = arith.constant dense<0.000000e+00> : vector<32x128xf32>
    %36 = tpu.matmul %33, %35, %cst_43 {dimension_numbers = #tpu.dot_dimension_numbers<[1], [0], [0], [1], [0, 0, 1, 1], [], []>} : vector<32x128xf32>, vector<128x128xf32>, vector<32x128xf32> -> vector<32x128xf32>
    %c1_44 = arith.constant 1 : index
    %c1_45 = arith.constant 1 : index
    %c0_46 = arith.constant 0 : index
    %c0_47 = arith.constant 0 : index
    %37 = vector.load %arg2[%c1_44, %c1_45, %c0_46, %c0_47] : memref<6x3x32x32xf32, #tpu.memory_space<vmem>>, vector<1x1x32x32xf32>
    %38 = vector.shape_cast %37 : vector<1x1x32x32xf32> to vector<32x32xf32>
    %cst_48 = arith.constant dense<0.000000e+00> : vector<32x128xf32>
    %39 = tpu.matmul %38, %30, %cst_48 {dimension_numbers = #tpu.dot_dimension_numbers<[1], [0], [0], [1], [0, 0, 1, 1], [], []>} : vector<32x32xf32>, vector<32x128xf32>, vector<32x128xf32> -> vector<32x128xf32>
    %c1_49 = arith.constant 1 : index
    %c1_50 = arith.constant 1 : index
    %c0_51 = arith.constant 0 : index
    %c0_52 = arith.constant 0 : index
    %40 = vector.load %arg3[%c1_49, %c1_50, %c0_51, %c0_52] : memref<6x3x128x128xf32, #tpu.memory_space<vmem>>, vector<1x1x128x128xf32>
    %41 = vector.shape_cast %40 : vector<1x1x128x128xf32> to vector<128x128xf32>
    %cst_53 = arith.constant dense<0.000000e+00> : vector<32x128xf32>
    %42 = tpu.matmul %39, %41, %cst_53 {dimension_numbers = #tpu.dot_dimension_numbers<[1], [0], [0], [1], [0, 0, 1, 1], [], []>} : vector<32x128xf32>, vector<128x128xf32>, vector<32x128xf32> -> vector<32x128xf32>
    %43 = arith.addf %36, %42 : vector<32x128xf32>
    %c1_54 = arith.constant 1 : index
    %c2_55 = arith.constant 2 : index
    %c0_56 = arith.constant 0 : index
    %c0_57 = arith.constant 0 : index
    %44 = vector.load %arg2[%c1_54, %c2_55, %c0_56, %c0_57] : memref<6x3x32x32xf32, #tpu.memory_space<vmem>>, vector<1x1x32x32xf32>
    %45 = vector.shape_cast %44 : vector<1x1x32x32xf32> to vector<32x32xf32>
    %cst_58 = arith.constant dense<0.000000e+00> : vector<32x128xf32>
    %46 = tpu.matmul %45, %30, %cst_58 {dimension_numbers = #tpu.dot_dimension_numbers<[1], [0], [0], [1], [0, 0, 1, 1], [], []>} : vector<32x32xf32>, vector<32x128xf32>, vector<32x128xf32> -> vector<32x128xf32>
    %c1_59 = arith.constant 1 : index
    %c2_60 = arith.constant 2 : index
    %c0_61 = arith.constant 0 : index
    %c0_62 = arith.constant 0 : index
    %47 = vector.load %arg3[%c1_59, %c2_60, %c0_61, %c0_62] : memref<6x3x128x128xf32, #tpu.memory_space<vmem>>, vector<1x1x128x128xf32>
    %48 = vector.shape_cast %47 : vector<1x1x128x128xf32> to vector<128x128xf32>
    %cst_63 = arith.constant dense<0.000000e+00> : vector<32x128xf32>
    %49 = tpu.matmul %46, %48, %cst_63 {dimension_numbers = #tpu.dot_dimension_numbers<[1], [0], [0], [1], [0, 0, 1, 1], [], []>} : vector<32x128xf32>, vector<128x128xf32>, vector<32x128xf32> -> vector<32x128xf32>
    %50 = arith.addf %43, %49 : vector<32x128xf32>
    %c1_64 = arith.constant 1 : index
    %c0_65 = arith.constant 0 : index
    %c0_66 = arith.constant 0 : index
    %51 = vector.load %arg4[%c1_64, %c0_65, %c0_66] : memref<6x1x128xf32, #tpu.memory_space<vmem>>, vector<1x1x128xf32>
    %52 = vector.shape_cast %51 : vector<1x1x128xf32> to vector<1x128xf32>
    %53 = vector.broadcast %52 : vector<1x128xf32> to vector<32x128xf32>
    %54 = arith.addf %50, %53 : vector<32x128xf32>
    %cst_67 = arith.constant 0.000000e+00 : f32
    %55 = vector.broadcast %cst_67 : f32 to vector<32x128xf32>
    %56 = arith.cmpf ogt, %54, %55 : vector<32x128xf32>
    %cst_68 = arith.constant 0.00999999977 : f32
    %57 = vector.broadcast %cst_68 : f32 to vector<32x128xf32>
    %58 = arith.mulf %57, %54 : vector<32x128xf32>
    %59 = arith.select %56, %54, %58 : vector<32x128xi1>, vector<32x128xf32>
    %c2_69 = arith.constant 2 : index
    %c0_70 = arith.constant 0 : index
    %c0_71 = arith.constant 0 : index
    %c0_72 = arith.constant 0 : index
    %60 = vector.load %arg2[%c2_69, %c0_70, %c0_71, %c0_72] : memref<6x3x32x32xf32, #tpu.memory_space<vmem>>, vector<1x1x32x32xf32>
    %61 = vector.shape_cast %60 : vector<1x1x32x32xf32> to vector<32x32xf32>
    %cst_73 = arith.constant dense<0.000000e+00> : vector<32x128xf32>
    %62 = tpu.matmul %61, %59, %cst_73 {dimension_numbers = #tpu.dot_dimension_numbers<[1], [0], [0], [1], [0, 0, 1, 1], [], []>} : vector<32x32xf32>, vector<32x128xf32>, vector<32x128xf32> -> vector<32x128xf32>
    %c2_74 = arith.constant 2 : index
    %c0_75 = arith.constant 0 : index
    %c0_76 = arith.constant 0 : index
    %c0_77 = arith.constant 0 : index
    %63 = vector.load %arg3[%c2_74, %c0_75, %c0_76, %c0_77] : memref<6x3x128x128xf32, #tpu.memory_space<vmem>>, vector<1x1x128x128xf32>
    %64 = vector.shape_cast %63 : vector<1x1x128x128xf32> to vector<128x128xf32>
    %cst_78 = arith.constant dense<0.000000e+00> : vector<32x128xf32>
    %65 = tpu.matmul %62, %64, %cst_78 {dimension_numbers = #tpu.dot_dimension_numbers<[1], [0], [0], [1], [0, 0, 1, 1], [], []>} : vector<32x128xf32>, vector<128x128xf32>, vector<32x128xf32> -> vector<32x128xf32>
    %c2_79 = arith.constant 2 : index
    %c1_80 = arith.constant 1 : index
    %c0_81 = arith.constant 0 : index
    %c0_82 = arith.constant 0 : index
    %66 = vector.load %arg2[%c2_79, %c1_80, %c0_81, %c0_82] : memref<6x3x32x32xf32, #tpu.memory_space<vmem>>, vector<1x1x32x32xf32>
    %67 = vector.shape_cast %66 : vector<1x1x32x32xf32> to vector<32x32xf32>
    %cst_83 = arith.constant dense<0.000000e+00> : vector<32x128xf32>
    %68 = tpu.matmul %67, %59, %cst_83 {dimension_numbers = #tpu.dot_dimension_numbers<[1], [0], [0], [1], [0, 0, 1, 1], [], []>} : vector<32x32xf32>, vector<32x128xf32>, vector<32x128xf32> -> vector<32x128xf32>
    %c2_84 = arith.constant 2 : index
    %c1_85 = arith.constant 1 : index
    %c0_86 = arith.constant 0 : index
    %c0_87 = arith.constant 0 : index
    %69 = vector.load %arg3[%c2_84, %c1_85, %c0_86, %c0_87] : memref<6x3x128x128xf32, #tpu.memory_space<vmem>>, vector<1x1x128x128xf32>
    %70 = vector.shape_cast %69 : vector<1x1x128x128xf32> to vector<128x128xf32>
    %cst_88 = arith.constant dense<0.000000e+00> : vector<32x128xf32>
    %71 = tpu.matmul %68, %70, %cst_88 {dimension_numbers = #tpu.dot_dimension_numbers<[1], [0], [0], [1], [0, 0, 1, 1], [], []>} : vector<32x128xf32>, vector<128x128xf32>, vector<32x128xf32> -> vector<32x128xf32>
    %72 = arith.addf %65, %71 : vector<32x128xf32>
    %c2_89 = arith.constant 2 : index
    %c2_90 = arith.constant 2 : index
    %c0_91 = arith.constant 0 : index
    %c0_92 = arith.constant 0 : index
    %73 = vector.load %arg2[%c2_89, %c2_90, %c0_91, %c0_92] : memref<6x3x32x32xf32, #tpu.memory_space<vmem>>, vector<1x1x32x32xf32>
    %74 = vector.shape_cast %73 : vector<1x1x32x32xf32> to vector<32x32xf32>
    %cst_93 = arith.constant dense<0.000000e+00> : vector<32x128xf32>
    %75 = tpu.matmul %74, %59, %cst_93 {dimension_numbers = #tpu.dot_dimension_numbers<[1], [0], [0], [1], [0, 0, 1, 1], [], []>} : vector<32x32xf32>, vector<32x128xf32>, vector<32x128xf32> -> vector<32x128xf32>
    %c2_94 = arith.constant 2 : index
    %c2_95 = arith.constant 2 : index
    %c0_96 = arith.constant 0 : index
    %c0_97 = arith.constant 0 : index
    %76 = vector.load %arg3[%c2_94, %c2_95, %c0_96, %c0_97] : memref<6x3x128x128xf32, #tpu.memory_space<vmem>>, vector<1x1x128x128xf32>
    %77 = vector.shape_cast %76 : vector<1x1x128x128xf32> to vector<128x128xf32>
    %cst_98 = arith.constant dense<0.000000e+00> : vector<32x128xf32>
    %78 = tpu.matmul %75, %77, %cst_98 {dimension_numbers = #tpu.dot_dimension_numbers<[1], [0], [0], [1], [0, 0, 1, 1], [], []>} : vector<32x128xf32>, vector<128x128xf32>, vector<32x128xf32> -> vector<32x128xf32>
    %79 = arith.addf %72, %78 : vector<32x128xf32>
    %c2_99 = arith.constant 2 : index
    %c0_100 = arith.constant 0 : index
    %c0_101 = arith.constant 0 : index
    %80 = vector.load %arg4[%c2_99, %c0_100, %c0_101] : memref<6x1x128xf32, #tpu.memory_space<vmem>>, vector<1x1x128xf32>
    %81 = vector.shape_cast %80 : vector<1x1x128xf32> to vector<1x128xf32>
    %82 = vector.broadcast %81 : vector<1x128xf32> to vector<32x128xf32>
    %83 = arith.addf %79, %82 : vector<32x128xf32>
    %cst_102 = arith.constant 0.000000e+00 : f32
    %84 = vector.broadcast %cst_102 : f32 to vector<32x128xf32>
    %85 = arith.cmpf ogt, %83, %84 : vector<32x128xf32>
    %cst_103 = arith.constant 0.00999999977 : f32
    %86 = vector.broadcast %cst_103 : f32 to vector<32x128xf32>
    %87 = arith.mulf %86, %83 : vector<32x128xf32>
    %88 = arith.select %85, %83, %87 : vector<32x128xi1>, vector<32x128xf32>
    %c3 = arith.constant 3 : index
    %c0_104 = arith.constant 0 : index
    %c0_105 = arith.constant 0 : index
    %c0_106 = arith.constant 0 : index
    %89 = vector.load %arg2[%c3, %c0_104, %c0_105, %c0_106] : memref<6x3x32x32xf32, #tpu.memory_space<vmem>>, vector<1x1x32x32xf32>
    %90 = vector.shape_cast %89 : vector<1x1x32x32xf32> to vector<32x32xf32>
    %cst_107 = arith.constant dense<0.000000e+00> : vector<32x128xf32>
    %91 = tpu.matmul %90, %88, %cst_107 {dimension_numbers = #tpu.dot_dimension_numbers<[1], [0], [0], [1], [0, 0, 1, 1], [], []>} : vector<32x32xf32>, vector<32x128xf32>, vector<32x128xf32> -> vector<32x128xf32>
    %c3_108 = arith.constant 3 : index
    %c0_109 = arith.constant 0 : index
    %c0_110 = arith.constant 0 : index
    %c0_111 = arith.constant 0 : index
    %92 = vector.load %arg3[%c3_108, %c0_109, %c0_110, %c0_111] : memref<6x3x128x128xf32, #tpu.memory_space<vmem>>, vector<1x1x128x128xf32>
    %93 = vector.shape_cast %92 : vector<1x1x128x128xf32> to vector<128x128xf32>
    %cst_112 = arith.constant dense<0.000000e+00> : vector<32x128xf32>
    %94 = tpu.matmul %91, %93, %cst_112 {dimension_numbers = #tpu.dot_dimension_numbers<[1], [0], [0], [1], [0, 0, 1, 1], [], []>} : vector<32x128xf32>, vector<128x128xf32>, vector<32x128xf32> -> vector<32x128xf32>
    %c3_113 = arith.constant 3 : index
    %c1_114 = arith.constant 1 : index
    %c0_115 = arith.constant 0 : index
    %c0_116 = arith.constant 0 : index
    %95 = vector.load %arg2[%c3_113, %c1_114, %c0_115, %c0_116] : memref<6x3x32x32xf32, #tpu.memory_space<vmem>>, vector<1x1x32x32xf32>
    %96 = vector.shape_cast %95 : vector<1x1x32x32xf32> to vector<32x32xf32>
    %cst_117 = arith.constant dense<0.000000e+00> : vector<32x128xf32>
    %97 = tpu.matmul %96, %88, %cst_117 {dimension_numbers = #tpu.dot_dimension_numbers<[1], [0], [0], [1], [0, 0, 1, 1], [], []>} : vector<32x32xf32>, vector<32x128xf32>, vector<32x128xf32> -> vector<32x128xf32>
    %c3_118 = arith.constant 3 : index
    %c1_119 = arith.constant 1 : index
    %c0_120 = arith.constant 0 : index
    %c0_121 = arith.constant 0 : index
    %98 = vector.load %arg3[%c3_118, %c1_119, %c0_120, %c0_121] : memref<6x3x128x128xf32, #tpu.memory_space<vmem>>, vector<1x1x128x128xf32>
    %99 = vector.shape_cast %98 : vector<1x1x128x128xf32> to vector<128x128xf32>
    %cst_122 = arith.constant dense<0.000000e+00> : vector<32x128xf32>
    %100 = tpu.matmul %97, %99, %cst_122 {dimension_numbers = #tpu.dot_dimension_numbers<[1], [0], [0], [1], [0, 0, 1, 1], [], []>} : vector<32x128xf32>, vector<128x128xf32>, vector<32x128xf32> -> vector<32x128xf32>
    %101 = arith.addf %94, %100 : vector<32x128xf32>
    %c3_123 = arith.constant 3 : index
    %c2_124 = arith.constant 2 : index
    %c0_125 = arith.constant 0 : index
    %c0_126 = arith.constant 0 : index
    %102 = vector.load %arg2[%c3_123, %c2_124, %c0_125, %c0_126] : memref<6x3x32x32xf32, #tpu.memory_space<vmem>>, vector<1x1x32x32xf32>
    %103 = vector.shape_cast %102 : vector<1x1x32x32xf32> to vector<32x32xf32>
    %cst_127 = arith.constant dense<0.000000e+00> : vector<32x128xf32>
    %104 = tpu.matmul %103, %88, %cst_127 {dimension_numbers = #tpu.dot_dimension_numbers<[1], [0], [0], [1], [0, 0, 1, 1], [], []>} : vector<32x32xf32>, vector<32x128xf32>, vector<32x128xf32> -> vector<32x128xf32>
    %c3_128 = arith.constant 3 : index
    %c2_129 = arith.constant 2 : index
    %c0_130 = arith.constant 0 : index
    %c0_131 = arith.constant 0 : index
    %105 = vector.load %arg3[%c3_128, %c2_129, %c0_130, %c0_131] : memref<6x3x128x128xf32, #tpu.memory_space<vmem>>, vector<1x1x128x128xf32>
    %106 = vector.shape_cast %105 : vector<1x1x128x128xf32> to vector<128x128xf32>
    %cst_132 = arith.constant dense<0.000000e+00> : vector<32x128xf32>
    %107 = tpu.matmul %104, %106, %cst_132 {dimension_numbers = #tpu.dot_dimension_numbers<[1], [0], [0], [1], [0, 0, 1, 1], [], []>} : vector<32x128xf32>, vector<128x128xf32>, vector<32x128xf32> -> vector<32x128xf32>
    %108 = arith.addf %101, %107 : vector<32x128xf32>
    %c3_133 = arith.constant 3 : index
    %c0_134 = arith.constant 0 : index
    %c0_135 = arith.constant 0 : index
    %109 = vector.load %arg4[%c3_133, %c0_134, %c0_135] : memref<6x1x128xf32, #tpu.memory_space<vmem>>, vector<1x1x128xf32>
    %110 = vector.shape_cast %109 : vector<1x1x128xf32> to vector<1x128xf32>
    %111 = vector.broadcast %110 : vector<1x128xf32> to vector<32x128xf32>
    %112 = arith.addf %108, %111 : vector<32x128xf32>
    %cst_136 = arith.constant 0.000000e+00 : f32
    %113 = vector.broadcast %cst_136 : f32 to vector<32x128xf32>
    %114 = arith.cmpf ogt, %112, %113 : vector<32x128xf32>
    %cst_137 = arith.constant 0.00999999977 : f32
    %115 = vector.broadcast %cst_137 : f32 to vector<32x128xf32>
    %116 = arith.mulf %115, %112 : vector<32x128xf32>
    %117 = arith.select %114, %112, %116 : vector<32x128xi1>, vector<32x128xf32>
    %c4 = arith.constant 4 : index
    %c0_138 = arith.constant 0 : index
    %c0_139 = arith.constant 0 : index
    %c0_140 = arith.constant 0 : index
    %118 = vector.load %arg2[%c4, %c0_138, %c0_139, %c0_140] : memref<6x3x32x32xf32, #tpu.memory_space<vmem>>, vector<1x1x32x32xf32>
    %119 = vector.shape_cast %118 : vector<1x1x32x32xf32> to vector<32x32xf32>
    %cst_141 = arith.constant dense<0.000000e+00> : vector<32x128xf32>
    %120 = tpu.matmul %119, %117, %cst_141 {dimension_numbers = #tpu.dot_dimension_numbers<[1], [0], [0], [1], [0, 0, 1, 1], [], []>} : vector<32x32xf32>, vector<32x128xf32>, vector<32x128xf32> -> vector<32x128xf32>
    %c4_142 = arith.constant 4 : index
    %c0_143 = arith.constant 0 : index
    %c0_144 = arith.constant 0 : index
    %c0_145 = arith.constant 0 : index
    %121 = vector.load %arg3[%c4_142, %c0_143, %c0_144, %c0_145] : memref<6x3x128x128xf32, #tpu.memory_space<vmem>>, vector<1x1x128x128xf32>
    %122 = vector.shape_cast %121 : vector<1x1x128x128xf32> to vector<128x128xf32>
    %cst_146 = arith.constant dense<0.000000e+00> : vector<32x128xf32>
    %123 = tpu.matmul %120, %122, %cst_146 {dimension_numbers = #tpu.dot_dimension_numbers<[1], [0], [0], [1], [0, 0, 1, 1], [], []>} : vector<32x128xf32>, vector<128x128xf32>, vector<32x128xf32> -> vector<32x128xf32>
    %c4_147 = arith.constant 4 : index
    %c1_148 = arith.constant 1 : index
    %c0_149 = arith.constant 0 : index
    %c0_150 = arith.constant 0 : index
    %124 = vector.load %arg2[%c4_147, %c1_148, %c0_149, %c0_150] : memref<6x3x32x32xf32, #tpu.memory_space<vmem>>, vector<1x1x32x32xf32>
    %125 = vector.shape_cast %124 : vector<1x1x32x32xf32> to vector<32x32xf32>
    %cst_151 = arith.constant dense<0.000000e+00> : vector<32x128xf32>
    %126 = tpu.matmul %125, %117, %cst_151 {dimension_numbers = #tpu.dot_dimension_numbers<[1], [0], [0], [1], [0, 0, 1, 1], [], []>} : vector<32x32xf32>, vector<32x128xf32>, vector<32x128xf32> -> vector<32x128xf32>
    %c4_152 = arith.constant 4 : index
    %c1_153 = arith.constant 1 : index
    %c0_154 = arith.constant 0 : index
    %c0_155 = arith.constant 0 : index
    %127 = vector.load %arg3[%c4_152, %c1_153, %c0_154, %c0_155] : memref<6x3x128x128xf32, #tpu.memory_space<vmem>>, vector<1x1x128x128xf32>
    %128 = vector.shape_cast %127 : vector<1x1x128x128xf32> to vector<128x128xf32>
    %cst_156 = arith.constant dense<0.000000e+00> : vector<32x128xf32>
    %129 = tpu.matmul %126, %128, %cst_156 {dimension_numbers = #tpu.dot_dimension_numbers<[1], [0], [0], [1], [0, 0, 1, 1], [], []>} : vector<32x128xf32>, vector<128x128xf32>, vector<32x128xf32> -> vector<32x128xf32>
    %130 = arith.addf %123, %129 : vector<32x128xf32>
    %c4_157 = arith.constant 4 : index
    %c2_158 = arith.constant 2 : index
    %c0_159 = arith.constant 0 : index
    %c0_160 = arith.constant 0 : index
    %131 = vector.load %arg2[%c4_157, %c2_158, %c0_159, %c0_160] : memref<6x3x32x32xf32, #tpu.memory_space<vmem>>, vector<1x1x32x32xf32>
    %132 = vector.shape_cast %131 : vector<1x1x32x32xf32> to vector<32x32xf32>
    %cst_161 = arith.constant dense<0.000000e+00> : vector<32x128xf32>
    %133 = tpu.matmul %132, %117, %cst_161 {dimension_numbers = #tpu.dot_dimension_numbers<[1], [0], [0], [1], [0, 0, 1, 1], [], []>} : vector<32x32xf32>, vector<32x128xf32>, vector<32x128xf32> -> vector<32x128xf32>
    %c4_162 = arith.constant 4 : index
    %c2_163 = arith.constant 2 : index
    %c0_164 = arith.constant 0 : index
    %c0_165 = arith.constant 0 : index
    %134 = vector.load %arg3[%c4_162, %c2_163, %c0_164, %c0_165] : memref<6x3x128x128xf32, #tpu.memory_space<vmem>>, vector<1x1x128x128xf32>
    %135 = vector.shape_cast %134 : vector<1x1x128x128xf32> to vector<128x128xf32>
    %cst_166 = arith.constant dense<0.000000e+00> : vector<32x128xf32>
    %136 = tpu.matmul %133, %135, %cst_166 {dimension_numbers = #tpu.dot_dimension_numbers<[1], [0], [0], [1], [0, 0, 1, 1], [], []>} : vector<32x128xf32>, vector<128x128xf32>, vector<32x128xf32> -> vector<32x128xf32>
    %137 = arith.addf %130, %136 : vector<32x128xf32>
    %c4_167 = arith.constant 4 : index
    %c0_168 = arith.constant 0 : index
    %c0_169 = arith.constant 0 : index
    %138 = vector.load %arg4[%c4_167, %c0_168, %c0_169] : memref<6x1x128xf32, #tpu.memory_space<vmem>>, vector<1x1x128xf32>
    %139 = vector.shape_cast %138 : vector<1x1x128xf32> to vector<1x128xf32>
    %140 = vector.broadcast %139 : vector<1x128xf32> to vector<32x128xf32>
    %141 = arith.addf %137, %140 : vector<32x128xf32>
    %cst_170 = arith.constant 0.000000e+00 : f32
    %142 = vector.broadcast %cst_170 : f32 to vector<32x128xf32>
    %143 = arith.cmpf ogt, %141, %142 : vector<32x128xf32>
    %cst_171 = arith.constant 0.00999999977 : f32
    %144 = vector.broadcast %cst_171 : f32 to vector<32x128xf32>
    %145 = arith.mulf %144, %141 : vector<32x128xf32>
    %146 = arith.select %143, %141, %145 : vector<32x128xi1>, vector<32x128xf32>
    %c5 = arith.constant 5 : index
    %c0_172 = arith.constant 0 : index
    %c0_173 = arith.constant 0 : index
    %c0_174 = arith.constant 0 : index
    %147 = vector.load %arg2[%c5, %c0_172, %c0_173, %c0_174] : memref<6x3x32x32xf32, #tpu.memory_space<vmem>>, vector<1x1x32x32xf32>
    %148 = vector.shape_cast %147 : vector<1x1x32x32xf32> to vector<32x32xf32>
    %cst_175 = arith.constant dense<0.000000e+00> : vector<32x128xf32>
    %149 = tpu.matmul %148, %146, %cst_175 {dimension_numbers = #tpu.dot_dimension_numbers<[1], [0], [0], [1], [0, 0, 1, 1], [], []>} : vector<32x32xf32>, vector<32x128xf32>, vector<32x128xf32> -> vector<32x128xf32>
    %c5_176 = arith.constant 5 : index
    %c0_177 = arith.constant 0 : index
    %c0_178 = arith.constant 0 : index
    %c0_179 = arith.constant 0 : index
    %150 = vector.load %arg3[%c5_176, %c0_177, %c0_178, %c0_179] : memref<6x3x128x128xf32, #tpu.memory_space<vmem>>, vector<1x1x128x128xf32>
    %151 = vector.shape_cast %150 : vector<1x1x128x128xf32> to vector<128x128xf32>
    %cst_180 = arith.constant dense<0.000000e+00> : vector<32x128xf32>
    %152 = tpu.matmul %149, %151, %cst_180 {dimension_numbers = #tpu.dot_dimension_numbers<[1], [0], [0], [1], [0, 0, 1, 1], [], []>} : vector<32x128xf32>, vector<128x128xf32>, vector<32x128xf32> -> vector<32x128xf32>
    %c5_181 = arith.constant 5 : index
    %c1_182 = arith.constant 1 : index
    %c0_183 = arith.constant 0 : index
    %c0_184 = arith.constant 0 : index
    %153 = vector.load %arg2[%c5_181, %c1_182, %c0_183, %c0_184] : memref<6x3x32x32xf32, #tpu.memory_space<vmem>>, vector<1x1x32x32xf32>
    %154 = vector.shape_cast %153 : vector<1x1x32x32xf32> to vector<32x32xf32>
    %cst_185 = arith.constant dense<0.000000e+00> : vector<32x128xf32>
    %155 = tpu.matmul %154, %146, %cst_185 {dimension_numbers = #tpu.dot_dimension_numbers<[1], [0], [0], [1], [0, 0, 1, 1], [], []>} : vector<32x32xf32>, vector<32x128xf32>, vector<32x128xf32> -> vector<32x128xf32>
    %c5_186 = arith.constant 5 : index
    %c1_187 = arith.constant 1 : index
    %c0_188 = arith.constant 0 : index
    %c0_189 = arith.constant 0 : index
    %156 = vector.load %arg3[%c5_186, %c1_187, %c0_188, %c0_189] : memref<6x3x128x128xf32, #tpu.memory_space<vmem>>, vector<1x1x128x128xf32>
    %157 = vector.shape_cast %156 : vector<1x1x128x128xf32> to vector<128x128xf32>
    %cst_190 = arith.constant dense<0.000000e+00> : vector<32x128xf32>
    %158 = tpu.matmul %155, %157, %cst_190 {dimension_numbers = #tpu.dot_dimension_numbers<[1], [0], [0], [1], [0, 0, 1, 1], [], []>} : vector<32x128xf32>, vector<128x128xf32>, vector<32x128xf32> -> vector<32x128xf32>
    %159 = arith.addf %152, %158 : vector<32x128xf32>
    %c5_191 = arith.constant 5 : index
    %c2_192 = arith.constant 2 : index
    %c0_193 = arith.constant 0 : index
    %c0_194 = arith.constant 0 : index
    %160 = vector.load %arg2[%c5_191, %c2_192, %c0_193, %c0_194] : memref<6x3x32x32xf32, #tpu.memory_space<vmem>>, vector<1x1x32x32xf32>
    %161 = vector.shape_cast %160 : vector<1x1x32x32xf32> to vector<32x32xf32>
    %cst_195 = arith.constant dense<0.000000e+00> : vector<32x128xf32>
    %162 = tpu.matmul %161, %146, %cst_195 {dimension_numbers = #tpu.dot_dimension_numbers<[1], [0], [0], [1], [0, 0, 1, 1], [], []>} : vector<32x32xf32>, vector<32x128xf32>, vector<32x128xf32> -> vector<32x128xf32>
    %c5_196 = arith.constant 5 : index
    %c2_197 = arith.constant 2 : index
    %c0_198 = arith.constant 0 : index
    %c0_199 = arith.constant 0 : index
    %163 = vector.load %arg3[%c5_196, %c2_197, %c0_198, %c0_199] : memref<6x3x128x128xf32, #tpu.memory_space<vmem>>, vector<1x1x128x128xf32>
    %164 = vector.shape_cast %163 : vector<1x1x128x128xf32> to vector<128x128xf32>
    %cst_200 = arith.constant dense<0.000000e+00> : vector<32x128xf32>
    %165 = tpu.matmul %162, %164, %cst_200 {dimension_numbers = #tpu.dot_dimension_numbers<[1], [0], [0], [1], [0, 0, 1, 1], [], []>} : vector<32x128xf32>, vector<128x128xf32>, vector<32x128xf32> -> vector<32x128xf32>
    %166 = arith.addf %159, %165 : vector<32x128xf32>
    %c5_201 = arith.constant 5 : index
    %c0_202 = arith.constant 0 : index
    %c0_203 = arith.constant 0 : index
    %167 = vector.load %arg4[%c5_201, %c0_202, %c0_203] : memref<6x1x128xf32, #tpu.memory_space<vmem>>, vector<1x1x128xf32>
    %168 = vector.shape_cast %167 : vector<1x1x128xf32> to vector<1x128xf32>
    %169 = vector.broadcast %168 : vector<1x128xf32> to vector<32x128xf32>
    %170 = arith.addf %166, %169 : vector<32x128xf32>
    %cst_204 = arith.constant 0.000000e+00 : f32
    %171 = vector.broadcast %cst_204 : f32 to vector<32x128xf32>
    %172 = arith.cmpf ogt, %170, %171 : vector<32x128xf32>
    %cst_205 = arith.constant 0.00999999977 : f32
    %173 = vector.broadcast %cst_205 : f32 to vector<32x128xf32>
    %174 = arith.mulf %173, %170 : vector<32x128xf32>
    %175 = arith.select %172, %170, %174 : vector<32x128xi1>, vector<32x128xf32>
    %c0_206 = arith.constant 0 : index
    %c0_207 = arith.constant 0 : index
    %c0_208 = arith.constant 0 : index
    %176 = vector.load %arg5[%c0_206, %c0_207, %c0_208] : memref<1x32x128xf32, #tpu.memory_space<vmem>>, vector<1x32x128xf32>
    %177 = vector.shape_cast %176 : vector<1x32x128xf32> to vector<32x128xf32>
    %178 = vector.shape_cast %175 : vector<32x128xf32> to vector<1x32x128xf32>
    tpu.vector_store %arg5[%c0_206, %c0_207, %c0_208], %178 {strides = array<i32>} : memref<1x32x128xf32, #tpu.memory_space<vmem>>, vector<1x32x128xf32>,
    return
  }
  func.func @transform_0(%arg0: i32) -> (i32, i32, i32) {
    %c0_i32 = arith.constant 0 : i32
    %c0_i32_0 = arith.constant 0 : i32
    %c0_i32_1 = arith.constant 0 : i32
    return %arg0, %c0_i32, %c0_i32_0 : i32, i32, i32
  }
  func.func @transform_1(%arg0: i32) -> (i32, i32, i32, i32) {
    %c0_i32 = arith.constant 0 : i32
    %c0_i32_0 = arith.constant 0 : i32
    %c0_i32_1 = arith.constant 0 : i32
    %c0_i32_2 = arith.constant 0 : i32
    %c0_i32_3 = arith.constant 0 : i32
    return %c0_i32, %c0_i32_0, %c0_i32_1, %c0_i32_2 : i32, i32, i32, i32
  }
  func.func @transform_2(%arg0: i32) -> (i32, i32, i32, i32) {
    %c0_i32 = arith.constant 0 : i32
    %c0_i32_0 = arith.constant 0 : i32
    %c0_i32_1 = arith.constant 0 : i32
    %c0_i32_2 = arith.constant 0 : i32
    %c0_i32_3 = arith.constant 0 : i32
    return %c0_i32, %c0_i32_0, %c0_i32_1, %c0_i32_2 : i32, i32, i32, i32
  }
  func.func @transform_3(%arg0: i32) -> (i32, i32, i32) {
    %c0_i32 = arith.constant 0 : i32
    %c0_i32_0 = arith.constant 0 : i32
    %c0_i32_1 = arith.constant 0 : i32
    %c0_i32_2 = arith.constant 0 : i32
    return %c0_i32, %c0_i32_0, %c0_i32_1 : i32, i32, i32
  }
  func.func @transform_4(%arg0: i32) -> (i32, i32, i32) {
    %c0_i32 = arith.constant 0 : i32
    %c0_i32_0 = arith.constant 0 : i32
    %c0_i32_1 = arith.constant 0 : i32
    return %arg0, %c0_i32, %c0_i32_0 : i32, i32, i32
  }
}

</mosaic_0001>

<llo_original>
// kernel: forward.1
$region0: #{forward.1}
  #allocation0 [shape = 'u32[]', space=smem, size = 0x4, offset = 0x4, fixed_abs, tag = 'smem constant byte address 0x4 - core index']
  #allocation1 [shape = 'u32[144,128]{1,0:T(1,128)}', space=vmem, size = 0x12000, scoped, tag = 'internal scratch']
  %s0 = inlined_call_operand.vmem [shape: f32[2,32,128], index: 0, kind: input, shape index: {}]
  %s1 = inlined_call_operand.hbm [shape: f32[6,3,32,32], index: 1, kind: input, shape index: {}]
  %s2 = inlined_call_operand.hbm [shape: f32[6,3,128,128], index: 2, kind: input, shape index: {}]
  %s3 = inlined_call_operand.hbm [shape: f32[6,1,128], index: 3, kind: input, shape index: {}]
  %s4 = inlined_call_operand.vmem [shape: f32[2,32,128], index: 4, kind: output, shape index: {}]
  %s5 = sld [smem:[#allocation0]]
  $region61: #{forward.1} parent=0
    _
  %s7 = ssub.s32 1, %s5
  %s8 = scalar_select 0, %s7, %s5
  $region1: #{forward.1} parent=0
    #allocation2 [shape = 'u8[294912]{0}', space=vmem, size = 0x48000, scoped, tag = 'input window, operand 1, single buffered']
    #allocation3 [shape = 's32[2]{0}', space=sflag, size = 0x8, scoped, tag = 'scoped memory for forward.1']
    #allocation4 [shape = 'u8[1179648]{0}', space=vmem, size = 0x120000, scoped, tag = 'input window, operand 2, single buffered']
    #allocation5 [shape = 's32[1]{0}', space=sflag, size = 0x4, scoped, tag = 'scoped memory for forward.1']
    #allocation6 [shape = 'u8[3072]{0}', space=vmem, size = 0xc00, scoped, tag = 'input window, operand 3, single buffered']
    %9 = vsyncpa [#allocation3], 0
    %10 = vsyncpa [#allocation5], 0
    loop: start=0, step=1, limit=4
    $region2: #{forward.1} parent=1 // loop_pre_header
      _
    $region3: #{forward.1} parent=1 // loop_header
      %s12 = sphi 0, %s16
      %p13 = scmp.ge.s32.totalorder %s12, 4
      %s22 = sphi 0, %s24
      %s25 = sphi 0, %s22
      %s26 = sphi 0, %s25
      %s42 = sphi 0, %s26
      %s46 = sphi 0, %s46
      %s48 = sphi 0, %s46
      %s49 = sphi 0, %s48
      %s63 = sphi 0, %s49
      %s67 = sphi 0, %s67
      %s69 = sphi 0, %s67
      %s70 = sphi 0, %s69
      %s84 = sphi 0, %s70
      %s88 = sphi 0, %s88
      %s90 = sphi 0, %s88
      %s91 = sphi 0, %s90
      %s105 = sphi 0, %s91
      %s111 = sphi 0, %s113
      %s114 = sphi 0, %s111
      %s115 = sphi 0, %s114
      %s131 = sphi 0, %s115
    $region4: #{forward.1} parent=1 // loop_header_branch
      %15 = sbr.rel (%p13) target = $region8
    $region5: #{forward.1} parent=1 // loop_body
      %s17 = ssub.s32 %s12, 1
      %s18 = ssub.s32 %s12, 2
      %s19 = sadd.s32 %s12, 1
      %s20 = ssub.s32 %s12, %s19
      %p21 = scmp.eq.s32.totalorder %s20, 0
      %s23 = sadd.s32 %s22, 1
      %s24 = scalar_select %p21, %s22, %s23
      %p27 = pneg %p21
      %p28 = scmp.eq.s32.totalorder %s12, 1
      %p29 = por %p27, %p28
      %p30 = scmp.ne.s32.totalorder %s22, %s25
      %p31 = scmp.eq.s32.totalorder %s12, 0
      %p32 = por %p30, %p31
      %p33 = scmp.ne.s32.totalorder %s22, %s25
      %p34 = scmp.eq.s32.totalorder %s17, 1
      %p35 = por %p33, %p34
      %p36 = scmp.ne.s32.totalorder %s25, %s26
      %p37 = scmp.eq.s32.totalorder %s17, 0
      %p38 = por %p36, %p37
      %p39 = scmp.ne.s32.totalorder %s25, %s26
      %p40 = scmp.eq.s32.totalorder %s18, 1
      %p41 = por %p39, %p40
      %p43 = scmp.ne.s32.totalorder %s26, %s42
      %p44 = scmp.eq.s32.totalorder %s18, 0
      %p45 = por %p43, %p44
      %s47 = sadd.s32 %s46, 1
      %p50 = scmp.eq.s32.totalorder %s12, 1
      %p51 = scmp.ne.s32.totalorder %s46, %s48
      %p52 = scmp.eq.s32.totalorder %s12, 0
      %p53 = por %p51, %p52
      %p54 = scmp.ne.s32.totalorder %s46, %s48
      %p55 = scmp.eq.s32.totalorder %s17, 1
      %p56 = por %p54, %p55
      %p57 = scmp.ne.s32.totalorder %s48, %s49
      %p58 = scmp.eq.s32.totalorder %s17, 0
      %p59 = por %p57, %p58
      %p60 = scmp.ne.s32.totalorder %s48, %s49
      %p61 = scmp.eq.s32.totalorder %s18, 1
      %p62 = por %p60, %p61
      %p64 = scmp.ne.s32.totalorder %s49, %s63
      %p65 = scmp.eq.s32.totalorder %s18, 0
      %p66 = por %p64, %p65
      %s68 = sadd.s32 %s67, 1
      %p71 = scmp.eq.s32.totalorder %s12, 1
      %p72 = scmp.ne.s32.totalorder %s67, %s69
      %p73 = scmp.eq.s32.totalorder %s12, 0
      %p74 = por %p72, %p73
      %p75 = scmp.ne.s32.totalorder %s67, %s69
      %p76 = scmp.eq.s32.totalorder %s17, 1
      %p77 = por %p75, %p76
      %p78 = scmp.ne.s32.totalorder %s69, %s70
      %p79 = scmp.eq.s32.totalorder %s17, 0
      %p80 = por %p78, %p79
      %p81 = scmp.ne.s32.totalorder %s69, %s70
      %p82 = scmp.eq.s32.totalorder %s18, 1
      %p83 = por %p81, %p82
      %p85 = scmp.ne.s32.totalorder %s70, %s84
      %p86 = scmp.eq.s32.totalorder %s18, 0
      %p87 = por %p85, %p86
      %s89 = sadd.s32 %s88, 1
      %p92 = scmp.eq.s32.totalorder %s12, 1
      %p93 = scmp.ne.s32.totalorder %s88, %s90
      %p94 = scmp.eq.s32.totalorder %s12, 0
      %p95 = por %p93, %p94
      %p96 = scmp.ne.s32.totalorder %s88, %s90
      %p97 = scmp.eq.s32.totalorder %s17, 1
      %p98 = por %p96, %p97
      %p99 = scmp.ne.s32.totalorder %s90, %s91
      %p100 = scmp.eq.s32.totalorder %s17, 0
      %p101 = por %p99, %p100
      %p102 = scmp.ne.s32.totalorder %s90, %s91
      %p103 = scmp.eq.s32.totalorder %s18, 1
      %p104 = por %p102, %p103
      %p106 = scmp.ne.s32.totalorder %s91, %s105
      %p107 = scmp.eq.s32.totalorder %s18, 0
      %p108 = por %p106, %p107
      %s109 = ssub.s32 %s12, %s19
      %p110 = scmp.eq.s32.totalorder %s109, 0
      %s112 = sadd.s32 %s111, 1
      %s113 = scalar_select %p110, %s111, %s112
      %p116 = pneg %p110
      %p117 = scmp.eq.s32.totalorder %s12, 1
      %p118 = por %p116, %p117
      %p119 = scmp.ne.s32.totalorder %s111, %s114
      %p120 = scmp.eq.s32.totalorder %s12, 0
      %p121 = por %p119, %p120
      %p122 = scmp.ne.s32.totalorder %s111, %s114
      %p123 = scmp.eq.s32.totalorder %s17, 1
      %p124 = por %p122, %p123
      %p125 = scmp.ne.s32.totalorder %s114, %s115
      %p126 = scmp.eq.s32.totalorder %s17, 0
      %p127 = por %p125, %p126
      %p128 = scmp.ne.s32.totalorder %s114, %s115
      %p129 = scmp.eq.s32.totalorder %s18, 1
      %p130 = por %p128, %p129
      %p132 = scmp.ne.s32.totalorder %s115, %s131
      %p133 = scmp.eq.s32.totalorder %s18, 0
      %p134 = por %p132, %p133
      %p135 = scmp.le.s32.totalorder 1, %s12
      %p136 = scmp.lt.s32.totalorder %s12, 3
      %p137 = pnand %p135, %p136
      %p138 = pneg %p137
      // Predicated region
      $region9: #{forward.1} parent=5 // pred_check
        _
      $region10: #{forward.1} parent=5 // pred_check_branch
        %140 = sbr.rel (%p137) target = $region12
      $region11: #{forward.1} parent=5 // pred_region
        %s141 = ssub.s32 %s12, 1
        // Predicated region
        $region13: #{forward.1} parent=11 // pred_check
          %p142 = pneg %p59
        $region14: #{forward.1} parent=11 // pred_check_branch
          %144 = sbr.rel (%p142) target = $region16
        $region15: #{forward.1} parent=11 // pred_region
          %s146 = ssub.s32 9216, 9216
          %147 = vsyncadd [#allocation3], %s146
          %s148 = sshll.u32 [#allocation2], 4
          %s149 = int_to_ptr.vmem [resolvable:$true] %s148
          %154 = dma.hbm_to_vmem [thread:$0]  %s1, 9216, %s149, [#allocation3], 128, 128, 8
        $region16: #{forward.1} parent=11 // pred_fallthru
          _
        // Predicated region
        $region17: #{forward.1} parent=11 // pred_check
          %p155 = pneg %p80
        $region18: #{forward.1} parent=11 // pred_check_branch
          %157 = sbr.rel (%p155) target = $region20
        $region19: #{forward.1} parent=11 // pred_region
          %s159 = ssub.s32 36864, 36864
          %160 = vsyncadd [#allocation5], %s159
          %s161 = sshll.u32 [#allocation4], 4
          %s162 = int_to_ptr.vmem [resolvable:$true] %s161
          %167 = dma.hbm_to_vmem [thread:$0]  %s2, 36864, %s162, [#allocation5], 128, 128, 8
        $region20: #{forward.1} parent=11 // pred_fallthru
          _
        // Predicated region
        $region21: #{forward.1} parent=11 // pred_check
          %p168 = pneg %p101
        $region22: #{forward.1} parent=11 // pred_check_branch
          %170 = sbr.rel (%p168) target = $region24
        $region23: #{forward.1} parent=11 // pred_region
          %s172 = ssub.s32 96, 96
          %173 = vsyncadd [#allocation5], %s172
          %s174 = sshll.u32 [#allocation6], 4
          %s175 = int_to_ptr.vmem [resolvable:$true] %s174
          %180 = dma.hbm_to_vmem [thread:$0]  %s3, 96, %s175, [#allocation5], 16, 16, 1
        $region24: #{forward.1} parent=11 // pred_fallthru
          _
      $region12: #{forward.1} parent=5 // pred_fallthru
        _
      %p181 = scmp.lt.s32.totalorder %s12, 2
      // Predicated region
      $region25: #{forward.1} parent=5 // pred_check
        %p182 = pneg %p181
      $region26: #{forward.1} parent=5 // pred_check_branch
        %184 = sbr.rel (%p182) target = $region28
      $region27: #{forward.1} parent=5 // pred_region
        // Predicated region
        $region29: #{forward.1} parent=27 // pred_check
          %p185 = pneg %p32
        $region30: #{forward.1} parent=27 // pred_check_branch
          %187 = sbr.rel (%p185) target = $region32
        $region31: #{forward.1} parent=27 // pred_region
          %p188 = scmp.lt.s32.totalorder %s12, 1
          %s189 = scalar_select %p188, %s12, 1
          %s190 = smul.addr %s189, 4
          %s191 = smul.addr %s190, 8
          %s192 = scalar_lea.vmem %s0, %s191
        $region32: #{forward.1} parent=27 // pred_fallthru
          _
      $region28: #{forward.1} parent=5 // pred_fallthru
        _
      %p193 = scmp.le.s32.totalorder 1, %s12
      %p194 = scmp.lt.s32.totalorder %s12, 3
      %p195 = pnand %p193, %p194
      %p196 = pneg %p195
      // Predicated region
      $region33: #{forward.1} parent=5 // pred_check
        _
      $region34: #{forward.1} parent=5 // pred_check_branch
        %198 = sbr.rel (%p195) target = $region36
      $region35: #{forward.1} parent=5 // pred_region
        %s199 = ssub.s32 %s12, 1
        // Predicated region
        $region37: #{forward.1} parent=35 // pred_check
          %p200 = pneg %p59
        $region38: #{forward.1} parent=35 // pred_check_branch
          %202 = sbr.rel (%p200) target = $region40
        $region39: #{forward.1} parent=35 // pred_region
          %203 = dma.done [#allocation3], 9216
        $region40: #{forward.1} parent=35 // pred_fallthru
          _
        // Predicated region
        $region41: #{forward.1} parent=35 // pred_check
          %p204 = pneg %p80
        $region42: #{forward.1} parent=35 // pred_check_branch
          %206 = sbr.rel (%p204) target = $region44
        $region43: #{forward.1} parent=35 // pred_region
          %207 = dma.done [#allocation5], 36864
        $region44: #{forward.1} parent=35 // pred_fallthru
          _
        // Predicated region
        $region45: #{forward.1} parent=35 // pred_check
          %p208 = pneg %p101
        $region46: #{forward.1} parent=35 // pred_check_branch
          %210 = sbr.rel (%p208) target = $region48
        $region47: #{forward.1} parent=35 // pred_region
          %211 = dma.done [#allocation5], 96
        $region48: #{forward.1} parent=35 // pred_fallthru
          _
        %p212 = scmp.lt.s32.totalorder %s17, 1
        %s213 = scalar_select %p212, %s17, 1
        %s214 = smul.addr %s213, 4
        %s215 = smul.addr %s214, 8
        %s216 = scalar_lea.vmem %s0, %s215
        %p217 = pneg %p38
        %p218 = pneg %p35
        %p219 = pneg %p59
        %p220 = pneg %p56
        %p221 = pneg %p80
        %p222 = pneg %p77
        %p223 = pneg %p101
        %p224 = pneg %p98
        %p225 = pneg %p127
        %p226 = pneg %p124
        %p227 = scmp.lt.s32.totalorder %s17, 1
        %s228 = scalar_select %p227, %s17, 1
        %s229 = smul.addr %s228, 4
        %s230 = smul.addr %s229, 8
        %s231 = scalar_lea.vmem %s4, %s230
        %p232 = scmp.lt.s32.totalorder %s17, 1
        %s233 = scalar_select %p232, %s17, 1
        %s234 = smul.addr %s233, 4
        %s235 = smul.addr %s234, 8
        %s236 = scalar_lea.vmem %s0, %s235
        %p237 = scmp.lt.s32.totalorder %s17, 1
        %s238 = scalar_select %p237, %s17, 1
        %s239 = smul.addr %s238, 4
        %s240 = smul.addr %s239, 8
        %s241 = scalar_lea.vmem %s4, %s240
        %v242 = vld [vmem:[%s236] sm:$0xff]
        %v243 = vld [vmem:[%s236 + $0x8] sm:$0xff]
        %v244 = vld [vmem:[%s236 + $0x10] sm:$0xff]
        %v245 = vld [vmem:[%s236 + $0x18] sm:$0xff]
        %v246 = vld [vmem:[#allocation2] sm:$0xff]
        %v247 = vld [vmem:[#allocation2 + $0x8] sm:$0xff]
        %v248 = vld [vmem:[#allocation2 + $0x10] sm:$0xff]
        %v249 = vld [vmem:[#allocation2 + $0x18] sm:$0xff]
        %vm250 = vcmask 261120
        %v252 = vsel %vm250, %v246, 0
        %v255 = vsel %vm250, %v247, 0
        %v258 = vsel %vm250, %v248, 0
        %v261 = vsel %vm250, %v249, 0
        %263 = vmatprep.subr.mxu0 0.0
        %264 = vmatpush1.msra.mxu0 %v242
        %265 = vmatprep.subr.mxu0 0.0
        %266 = vmatpush1.msra.mxu0 %v243
        %267 = vmatprep.subr.mxu0 0.0
        %268 = vmatpush1.msra.mxu0 %v244
        %269 = vmatprep.subr.mxu0 0.0
        %270 = vmatpush1.msra.mxu0 %v245
        %271 = vmatprep.subr.mxu0 0.0
        %272 = vmatpush1.msra.mxu0 0.0
        %273 = vmatprep.subr.mxu0 0.0
        %274 = vmatpush1.msra.mxu0 0.0
        %275 = vmatprep.subr.mxu0 0.0
        %276 = vmatpush1.msra.mxu0 0.0
        %277 = vmatprep.subr.mxu0 0.0
        %278 = vmatpush1.msra.mxu0 0.0
        %279 = vmatprep.subr.mxu0 0.0
        %280 = vmatpush1.msra.mxu0 0.0
        %281 = vmatprep.subr.mxu0 0.0
        %282 = vmatpush1.msra.mxu0 0.0
        %283 = vmatprep.subr.mxu0 0.0
        %284 = vmatpush1.msra.mxu0 0.0
        %285 = vmatprep.subr.mxu0 0.0
        %286 = vmatpush1.msra.mxu0 0.0
        %287 = vmatprep.subr.mxu0 0.0
        %288 = vmatpush1.msra.mxu0 0.0
        %289 = vmatprep.subr.mxu0 0.0
        %290 = vmatpush1.msra.mxu0 0.0
        %291 = vmatprep.subr.mxu0 0.0
        %292 = vmatpush1.msra.mxu0 0.0
        %293 = vmatprep.subr.mxu0 0.0
        %294 = vmatpush1.msra.mxu0 0.0
        %295 = vmatprep.subr.mxu0 0.0
        %296 = vmatpush1.msra.mxu0 0.0
        %297 = vmatprep.subr.mxu0 0.0
        %298 = vmatpush1.msra.mxu0 0.0
        %299 = vmatprep.subr.mxu0 0.0
        %300 = vmatpush1.msra.mxu0 0.0
        %301 = vmatprep.subr.mxu0 0.0
        %302 = vmatpush1.msra.mxu0 0.0
        %303 = vmatprep.subr.mxu0 0.0
        %304 = vmatpush1.msra.mxu0 0.0
        %305 = vmatprep.subr.mxu0 0.0
        %306 = vmatpush1.msra.mxu0 0.0
        %307 = vmatprep.subr.mxu0 0.0
        %308 = vmatpush1.msra.mxu0 0.0
        %309 = vmatprep.subr.mxu0 0.0
        %310 = vmatpush1.msra.mxu0 0.0
        %311 = vmatprep.subr.mxu0 0.0
        %312 = vmatpush1.msra.mxu0 0.0
        %313 = vmatprep.subr.mxu0 0.0
        %314 = vmatpush1.msra.mxu0 0.0
        %315 = vmatprep.subr.mxu0 0.0
        %316 = vmatpush1.msra.mxu0 0.0
        %317 = vmatprep.subr.mxu0 0.0
        %318 = vmatpush1.msra.mxu0 0.0
        %319 = vmatprep.subr.mxu0 0.0
        %320 = vmatpush1.msra.mxu0 0.0
        %321 = vmatprep.subr.mxu0 0.0
        %322 = vmatpush1.msra.mxu0 0.0
        %323 = vmatprep.subr.mxu0 0.0
        %324 = vmatpush1.msra.mxu0 0.0
        %325 = vmatprep.subr.mxu0 0.0
        %326 = vmatpush1.msra.mxu0 0.0
        %327 = vmatprep.mubr.f32.mxu0 0.0
        %328 = vmatmul.mubr.f32.gmra.mrb[0].mxu0 %v252
        %v329 = vpop.f32.mrb[0].mxu0
        %v330 = vadd.f32 0.0, %v329
        %v331 = vpop.f32.mrb[0].mxu0
        %332 = vmatprep.mubr.f32.mxu0 0.0
        %333 = vmatmul.mubr.f32.gmra.mrb[0].mxu0 %v255
        %v334 = vpop.f32.mrb[0].mxu0
        %v335 = vadd.f32 0.0, %v334
        %v336 = vpop.f32.mrb[0].mxu0
        %337 = vmatprep.mubr.f32.mxu0 0.0
        %338 = vmatmul.mubr.f32.gmra.mrb[0].mxu0 %v258
        %v339 = vpop.f32.mrb[0].mxu0
        %v340 = vadd.f32 0.0, %v339
        %v341 = vpop.f32.mrb[0].mxu0
        %342 = vmatprep.mubr.f32.mxu0 0.0
        %343 = vmatmul.mubr.f32.gmra.mrb[0].mxu0 %v261
        %v344 = vpop.f32.mrb[0].mxu0
        %v345 = vadd.f32 0.0, %v344
        %v346 = vpop.f32.mrb[0].mxu0
        %347 = vdwg.mxu0
        %v348 = vld [vmem:[#allocation4] sm:$0xff]
        %v349 = vld [vmem:[#allocation4 + $0x8] sm:$0xff]
        %v350 = vld [vmem:[#allocation4 + $0x10] sm:$0xff]
        %v351 = vld [vmem:[#allocation4 + $0x18] sm:$0xff]
        %v352 = vld [vmem:[#allocation4 + $0x20] sm:$0xff]
        %v353 = vld [vmem:[#allocation4 + $0x28] sm:$0xff]
        %v354 = vld [vmem:[#allocation4 + $0x30] sm:$0xff]
        %v355 = vld [vmem:[#allocation4 + $0x38] sm:$0xff]
        %v356 = vld [vmem:[#allocation4 + $0x40] sm:$0xff]
        %v357 = vld [vmem:[#allocation4 + $0x48] sm:$0xff]
        %v358 = vld [vmem:[#allocation4 + $0x50] sm:$0xff]
        %v359 = vld [vmem:[#allocation4 + $0x58] sm:$0xff]
        %v360 = vld [vmem:[#allocation4 + $0x60] sm:$0xff]
        %v361 = vld [vmem:[#allocation4 + $0x68] sm:$0xff]
        %v362 = vld [vmem:[#allocation4 + $0x70] sm:$0xff]
        %v363 = vld [vmem:[#allocation4 + $0x78] sm:$0xff]
        %s364 = scalar_lea.vmem [#allocation2], 32
        %v365 = vld [vmem:[%s364] sm:$0xff]
        %v366 = vld [vmem:[%s364 + $0x8] sm:$0xff]
        %v367 = vld [vmem:[%s364 + $0x10] sm:$0xff]
        %v368 = vld [vmem:[%s364 + $0x18] sm:$0xff]
        %v370 = vsel %vm250, %v365, 0
        %v373 = vsel %vm250, %v366, 0
        %v376 = vsel %vm250, %v367, 0
        %v379 = vsel %vm250, %v368, 0
        %381 = vmatprep.subr.mxu0 0.0
        %382 = vmatpush1.msra.mxu0 %v242
        %383 = vmatprep.subr.mxu0 0.0
        %384 = vmatpush1.msra.mxu0 %v243
        %385 = vmatprep.subr.mxu0 0.0
        %386 = vmatpush1.msra.mxu0 %v244
        %387 = vmatprep.subr.mxu0 0.0
        %388 = vmatpush1.msra.mxu0 %v245
        %389 = vmatprep.subr.mxu0 0.0
        %390 = vmatpush1.msra.mxu0 0.0
        %391 = vmatprep.subr.mxu0 0.0
        %392 = vmatpush1.msra.mxu0 0.0
        %393 = vmatprep.subr.mxu0 0.0
        %394 = vmatpush1.msra.mxu0 0.0
        %395 = vmatprep.subr.mxu0 0.0
        %396 = vmatpush1.msra.mxu0 0.0
        %397 = vmatprep.subr.mxu0 0.0
        %398 = vmatpush1.msra.mxu0 0.0
        %399 = vmatprep.subr.mxu0 0.0
        %400 = vmatpush1.msra.mxu0 0.0
        %401 = vmatprep.subr.mxu0 0.0
        %402 = vmatpush1.msra.mxu0 0.0
        %403 = vmatprep.subr.mxu0 0.0
        %404 = vmatpush1.msra.mxu0 0.0
        %405 = vmatprep.subr.mxu0 0.0
        %406 = vmatpush1.msra.mxu0 0.0
        %407 = vmatprep.subr.mxu0 0.0
        %408 = vmatpush1.msra.mxu0 0.0
        %409 = vmatprep.subr.mxu0 0.0
        %410 = vmatpush1.msra.mxu0 0.0
        %411 = vmatprep.subr.mxu0 0.0
        %412 = vmatpush1.msra.mxu0 0.0
        %413 = vmatprep.subr.mxu0 0.0
        %414 = vmatpush1.msra.mxu0 0.0
        %415 = vmatprep.subr.mxu0 0.0
        %416 = vmatpush1.msra.mxu0 0.0
        %417 = vmatprep.subr.mxu0 0.0
        %418 = vmatpush1.msra.mxu0 0.0
        %419 = vmatprep.subr.mxu0 0.0
        %420 = vmatpush1.msra.mxu0 0.0
        %421 = vmatprep.subr.mxu0 0.0
        %422 = vmatpush1.msra.mxu0 0.0
        %423 = vmatprep.subr.mxu0 0.0
        %424 = vmatpush1.msra.mxu0 0.0
        %425 = vmatprep.subr.mxu0 0.0
        %426 = vmatpush1.msra.mxu0 0.0
        %427 = vmatprep.subr.mxu0 0.0
        %428 = vmatpush1.msra.mxu0 0.0
        %429 = vmatprep.subr.mxu0 0.0
        %430 = vmatpush1.msra.mxu0 0.0
        %431 = vmatprep.subr.mxu0 0.0
        %432 = vmatpush1.msra.mxu0 0.0
        %433 = vmatprep.subr.mxu0 0.0
        %434 = vmatpush1.msra.mxu0 0.0
        %435 = vmatprep.subr.mxu0 0.0
        %436 = vmatpush1.msra.mxu0 0.0
        %437 = vmatprep.subr.mxu0 0.0
        %438 = vmatpush1.msra.mxu0 0.0
        %439 = vmatprep.subr.mxu0 0.0
        %440 = vmatpush1.msra.mxu0 0.0
        %441 = vmatprep.subr.mxu0 0.0
        %442 = vmatpush1.msra.mxu0 0.0
        %443 = vmatprep.subr.mxu0 0.0
        %444 = vmatpush1.msra.mxu0 0.0
        %445 = vmatprep.mubr.f32.mxu0 0.0
        %446 = vmatmul.mubr.f32.gmra.mrb[0].mxu0 %v370
        %v447 = vpop.f32.mrb[0].mxu0
        %v448 = vadd.f32 0.0, %v447
        %v449 = vpop.f32.mrb[0].mxu0
        %450 = vmatprep.mubr.f32.mxu0 0.0
        %451 = vmatmul.mubr.f32.gmra.mrb[0].mxu0 %v373
        %v452 = vpop.f32.mrb[0].mxu0
        %v453 = vadd.f32 0.0, %v452
        %v454 = vpop.f32.mrb[0].mxu0
        %455 = vmatprep.mubr.f32.mxu0 0.0
        %456 = vmatmul.mubr.f32.gmra.mrb[0].mxu0 %v376
        %v457 = vpop.f32.mrb[0].mxu0
        %v458 = vadd.f32 0.0, %v457
        %v459 = vpop.f32.mrb[0].mxu0
        %460 = vmatprep.mubr.f32.mxu0 0.0
        %461 = vmatmul.mubr.f32.gmra.mrb[0].mxu0 %v379
        %v462 = vpop.f32.mrb[0].mxu0
        %v463 = vadd.f32 0.0, %v462
        %v464 = vpop.f32.mrb[0].mxu0
        %465 = vdwg.mxu0
        %s466 = scalar_lea.vmem [#allocation4], 128
        %v467 = vld [vmem:[%s466] sm:$0xff]
        %v468 = vld [vmem:[%s466 + $0x8] sm:$0xff]
        %v469 = vld [vmem:[%s466 + $0x10] sm:$0xff]
        %v470 = vld [vmem:[%s466 + $0x18] sm:$0xff]
        %v471 = vld [vmem:[%s466 + $0x20] sm:$0xff]
        %v472 = vld [vmem:[%s466 + $0x28] sm:$0xff]
        %v473 = vld [vmem:[%s466 + $0x30] sm:$0xff]
        %v474 = vld [vmem:[%s466 + $0x38] sm:$0xff]
        %v475 = vld [vmem:[%s466 + $0x40] sm:$0xff]
        %v476 = vld [vmem:[%s466 + $0x48] sm:$0xff]
        %v477 = vld [vmem:[%s466 + $0x50] sm:$0xff]
        %v478 = vld [vmem:[%s466 + $0x58] sm:$0xff]
        %v479 = vld [vmem:[%s466 + $0x60] sm:$0xff]
        %v480 = vld [vmem:[%s466 + $0x68] sm:$0xff]
        %v481 = vld [vmem:[%s466 + $0x70] sm:$0xff]
        %v482 = vld [vmem:[%s466 + $0x78] sm:$0xff]
        %483 = vmatprep.subr.mxu0 0.0
        %484 = vmatpush1.msra.mxu0 %v467
        %485 = vmatprep.subr.mxu0 0.0
        %486 = vmatpush1.msra.mxu0 %v468
        %487 = vmatprep.subr.mxu0 0.0
        %488 = vmatpush1.msra.mxu0 %v469
        %489 = vmatprep.subr.mxu0 0.0
        %490 = vmatpush1.msra.mxu0 %v470
        %491 = vmatprep.subr.mxu0 0.0
        %492 = vmatpush1.msra.mxu0 %v471
        %493 = vmatprep.subr.mxu0 0.0
        %494 = vmatpush1.msra.mxu0 %v472
        %495 = vmatprep.subr.mxu0 0.0
        %496 = vmatpush1.msra.mxu0 %v473
        %497 = vmatprep.subr.mxu0 0.0
        %498 = vmatpush1.msra.mxu0 %v474
        %499 = vmatprep.subr.mxu0 0.0
        %500 = vmatpush1.msra.mxu0 %v475
        %501 = vmatprep.subr.mxu0 0.0
        %502 = vmatpush1.msra.mxu0 %v476
        %503 = vmatprep.subr.mxu0 0.0
        %504 = vmatpush1.msra.mxu0 %v477
        %505 = vmatprep.subr.mxu0 0.0
        %506 = vmatpush1.msra.mxu0 %v478
        %507 = vmatprep.subr.mxu0 0.0
        %508 = vmatpush1.msra.mxu0 %v479
        %509 = vmatprep.subr.mxu0 0.0
        %510 = vmatpush1.msra.mxu0 %v480
        %511 = vmatprep.subr.mxu0 0.0
        %512 = vmatpush1.msra.mxu0 %v481
        %513 = vmatprep.subr.mxu0 0.0
        %514 = vmatpush1.msra.mxu0 %v482
        %515 = vmatprep.subr.mxu0 0.0
        %516 = vmatpush1.msra.mxu0 0.0
        %517 = vmatprep.subr.mxu0 0.0
        %518 = vmatpush1.msra.mxu0 0.0
        %519 = vmatprep.subr.mxu0 0.0
        %520 = vmatpush1.msra.mxu0 0.0
        %521 = vmatprep.subr.mxu0 0.0
        %522 = vmatpush1.msra.mxu0 0.0
        %523 = vmatprep.subr.mxu0 0.0
        %524 = vmatpush1.msra.mxu0 0.0
        %525 = vmatprep.subr.mxu0 0.0
        %526 = vmatpush1.msra.mxu0 0.0
        %527 = vmatprep.subr.mxu0 0.0
        %528 = vmatpush1.msra.mxu0 0.0
        %529 = vmatprep.subr.mxu0 0.0
        %530 = vmatpush1.msra.mxu0 0.0
        %531 = vmatprep.subr.mxu0 0.0
        %532 = vmatpush1.msra.mxu0 0.0
        %533 = vmatprep.subr.mxu0 0.0
        %534 = vmatpush1.msra.mxu0 0.0
        %535 = vmatprep.subr.mxu0 0.0
        %536 = vmatpush1.msra.mxu0 0.0
        %537 = vmatprep.subr.mxu0 0.0
        %538 = vmatpush1.msra.mxu0 0.0
        %539 = vmatprep.subr.mxu0 0.0
        %540 = vmatpush1.msra.mxu0 0.0
        %541 = vmatprep.subr.mxu0 0.0
        %542 = vmatpush1.msra.mxu0 0.0
        %543 = vmatprep.subr.mxu0 0.0
        %544 = vmatpush1.msra.mxu0 0.0
        %545 = vmatprep.subr.mxu0 0.0
        %546 = vmatpush1.msra.mxu0 0.0
        %547 = vmatprep.mubr.f32.mxu0 0.0
        %548 = vmatmul.mubr.f32.gmra.mrb[0].mxu0 %v448
        %v549 = vpop.f32.mrb[0].mxu0
        %v550 = vadd.f32 0.0, %v549
        %v551 = vpop.f32.mrb[0].mxu0
        %552 = vmatprep.mubr.f32.mxu0 0.0
        %553 = vmatmul.mubr.f32.gmra.mrb[0].mxu0 %v453
        %v554 = vpop.f32.mrb[0].mxu0
        %v555 = vadd.f32 0.0, %v554
        %v556 = vpop.f32.mrb[0].mxu0
        %557 = vmatprep.mubr.f32.mxu0 0.0
        %558 = vmatmul.mubr.f32.gmra.mrb[0].mxu0 %v458
        %v559 = vpop.f32.mrb[0].mxu0
        %v560 = vadd.f32 0.0, %v559
        %v561 = vpop.f32.mrb[0].mxu0
        %562 = vmatprep.mubr.f32.mxu0 0.0
        %563 = vmatmul.mubr.f32.gmra.mrb[0].mxu0 %v463
        %v564 = vpop.f32.mrb[0].mxu0
        %v565 = vadd.f32 0.0, %v564
        %v566 = vpop.f32.mrb[0].mxu0
        %567 = vdwg.mxu0
        %568 = vmatprep.subr.mxu0 0.0
        %569 = vmatpush1.msra.mxu0 %v348
        %570 = vmatprep.subr.mxu0 0.0
        %571 = vmatpush1.msra.mxu0 %v349
        %572 = vmatprep.subr.mxu0 0.0
        %573 = vmatpush1.msra.mxu0 %v350
        %574 = vmatprep.subr.mxu0 0.0
        %575 = vmatpush1.msra.mxu0 %v351
        %576 = vmatprep.subr.mxu0 0.0
        %577 = vmatpush1.msra.mxu0 %v352
        %578 = vmatprep.subr.mxu0 0.0
        %579 = vmatpush1.msra.mxu0 %v353
        %580 = vmatprep.subr.mxu0 0.0
        %581 = vmatpush1.msra.mxu0 %v354
        %582 = vmatprep.subr.mxu0 0.0
        %583 = vmatpush1.msra.mxu0 %v355
        %584 = vmatprep.subr.mxu0 0.0
        %585 = vmatpush1.msra.mxu0 %v356
        %586 = vmatprep.subr.mxu0 0.0
        %587 = vmatpush1.msra.mxu0 %v357
        %588 = vmatprep.subr.mxu0 0.0
        %589 = vmatpush1.msra.mxu0 %v358
        %590 = vmatprep.subr.mxu0 0.0
        %591 = vmatpush1.msra.mxu0 %v359
        %592 = vmatprep.subr.mxu0 0.0
        %593 = vmatpush1.msra.mxu0 %v360
        %594 = vmatprep.subr.mxu0 0.0
        %595 = vmatpush1.msra.mxu0 %v361
        %596 = vmatprep.subr.mxu0 0.0
        %597 = vmatpush1.msra.mxu0 %v362
        %598 = vmatprep.subr.mxu0 0.0
        %599 = vmatpush1.msra.mxu0 %v363
        %600 = vmatprep.subr.mxu0 0.0
        %601 = vmatpush1.msra.mxu0 0.0
        %602 = vmatprep.subr.mxu0 0.0
        %603 = vmatpush1.msra.mxu0 0.0
        %604 = vmatprep.subr.mxu0 0.0
        %605 = vmatpush1.msra.mxu0 0.0
        %606 = vmatprep.subr.mxu0 0.0
        %607 = vmatpush1.msra.mxu0 0.0
        %608 = vmatprep.subr.mxu0 0.0
        %609 = vmatpush1.msra.mxu0 0.0
        %610 = vmatprep.subr.mxu0 0.0
        %611 = vmatpush1.msra.mxu0 0.0
        %612 = vmatprep.subr.mxu0 0.0
        %613 = vmatpush1.msra.mxu0 0.0
        %614 = vmatprep.subr.mxu0 0.0
        %615 = vmatpush1.msra.mxu0 0.0
        %616 = vmatprep.subr.mxu0 0.0
        %617 = vmatpush1.msra.mxu0 0.0
        %618 = vmatprep.subr.mxu0 0.0
        %619 = vmatpush1.msra.mxu0 0.0
        %620 = vmatprep.subr.mxu0 0.0
        %621 = vmatpush1.msra.mxu0 0.0
        %622 = vmatprep.subr.mxu0 0.0
        %623 = vmatpush1.msra.mxu0 0.0
        %624 = vmatprep.subr.mxu0 0.0
        %625 = vmatpush1.msra.mxu0 0.0
        %626 = vmatprep.subr.mxu0 0.0
        %627 = vmatpush1.msra.mxu0 0.0
        %628 = vmatprep.subr.mxu0 0.0
        %629 = vmatpush1.msra.mxu0 0.0
        %630 = vmatprep.subr.mxu0 0.0
        %631 = vmatpush1.msra.mxu0 0.0
        %632 = vmatprep.mubr.f32.mxu0 0.0
        %633 = vmatmul.mubr.f32.gmra.mrb[0].mxu0 %v330
        %v634 = vpop.f32.mrb[0].mxu0
        %v635 = vadd.f32 %v550, %v634
        %v636 = vpop.f32.mrb[0].mxu0
        %637 = vmatprep.mubr.f32.mxu0 0.0
        %638 = vmatmul.mubr.f32.gmra.mrb[0].mxu0 %v335
        %v639 = vpop.f32.mrb[0].mxu0
        %v640 = vadd.f32 %v555, %v639
        %v641 = vpop.f32.mrb[0].mxu0
        %642 = vmatprep.mubr.f32.mxu0 0.0
        %643 = vmatmul.mubr.f32.gmra.mrb[0].mxu0 %v340
        %v644 = vpop.f32.mrb[0].mxu0
        %v645 = vadd.f32 %v560, %v644
        %v646 = vpop.f32.mrb[0].mxu0
        %647 = vmatprep.mubr.f32.mxu0 0.0
        %648 = vmatmul.mubr.f32.gmra.mrb[0].mxu0 %v345
        %v649 = vpop.f32.mrb[0].mxu0
        %v650 = vadd.f32 %v565, %v649
        %v651 = vpop.f32.mrb[0].mxu0
        %652 = vdwg.mxu0
        %s653 = scalar_lea.vmem [#allocation2], 64
        %v654 = vld [vmem:[%s653] sm:$0xff]
        %v655 = vld [vmem:[%s653 + $0x8] sm:$0xff]
        %v656 = vld [vmem:[%s653 + $0x10] sm:$0xff]
        %v657 = vld [vmem:[%s653 + $0x18] sm:$0xff]
        %v659 = vsel %vm250, %v654, 0
        %v662 = vsel %vm250, %v655, 0
        %v665 = vsel %vm250, %v656, 0
        %v668 = vsel %vm250, %v657, 0
        %670 = vmatprep.subr.mxu0 0.0
        %671 = vmatpush1.msra.mxu0 %v242
        %672 = vmatprep.subr.mxu0 0.0
        %673 = vmatpush1.msra.mxu0 %v243
        %674 = vmatprep.subr.mxu0 0.0
        %675 = vmatpush1.msra.mxu0 %v244
        %676 = vmatprep.subr.mxu0 0.0
        %677 = vmatpush1.msra.mxu0 %v245
        %678 = vmatprep.subr.mxu0 0.0
        %679 = vmatpush1.msra.mxu0 0.0
        %680 = vmatprep.subr.mxu0 0.0
        %681 = vmatpush1.msra.mxu0 0.0
        %682 = vmatprep.subr.mxu0 0.0
        %683 = vmatpush1.msra.mxu0 0.0
        %684 = vmatprep.subr.mxu0 0.0
        %685 = vmatpush1.msra.mxu0 0.0
        %686 = vmatprep.subr.mxu0 0.0
        %687 = vmatpush1.msra.mxu0 0.0
        %688 = vmatprep.subr.mxu0 0.0
        %689 = vmatpush1.msra.mxu0 0.0
        %690 = vmatprep.subr.mxu0 0.0
        %691 = vmatpush1.msra.mxu0 0.0
        %692 = vmatprep.subr.mxu0 0.0
        %693 = vmatpush1.msra.mxu0 0.0
        %694 = vmatprep.subr.mxu0 0.0
        %695 = vmatpush1.msra.mxu0 0.0
        %696 = vmatprep.subr.mxu0 0.0
        %697 = vmatpush1.msra.mxu0 0.0
        %698 = vmatprep.subr.mxu0 0.0
        %699 = vmatpush1.msra.mxu0 0.0
        %700 = vmatprep.subr.mxu0 0.0
        %701 = vmatpush1.msra.mxu0 0.0
        %702 = vmatprep.subr.mxu0 0.0
        %703 = vmatpush1.msra.mxu0 0.0
        %704 = vmatprep.subr.mxu0 0.0
        %705 = vmatpush1.msra.mxu0 0.0
        %706 = vmatprep.subr.mxu0 0.0
        %707 = vmatpush1.msra.mxu0 0.0
        %708 = vmatprep.subr.mxu0 0.0
        %709 = vmatpush1.msra.mxu0 0.0
        %710 = vmatprep.subr.mxu0 0.0
        %711 = vmatpush1.msra.mxu0 0.0
        %712 = vmatprep.subr.mxu0 0.0
        %713 = vmatpush1.msra.mxu0 0.0
        %714 = vmatprep.subr.mxu0 0.0
        %715 = vmatpush1.msra.mxu0 0.0
        %716 = vmatprep.subr.mxu0 0.0
        %717 = vmatpush1.msra.mxu0 0.0
        %718 = vmatprep.subr.mxu0 0.0
        %719 = vmatpush1.msra.mxu0 0.0
        %720 = vmatprep.subr.mxu0 0.0
        %721 = vmatpush1.msra.mxu0 0.0
        %722 = vmatprep.subr.mxu0 0.0
        %723 = vmatpush1.msra.mxu0 0.0
        %724 = vmatprep.subr.mxu0 0.0
        %725 = vmatpush1.msra.mxu0 0.0
        %726 = vmatprep.subr.mxu0 0.0
        %727 = vmatpush1.msra.mxu0 0.0
        %728 = vmatprep.subr.mxu0 0.0
        %729 = vmatpush1.msra.mxu0 0.0
        %730 = vmatprep.subr.mxu0 0.0
        %731 = vmatpush1.msra.mxu0 0.0
        %732 = vmatprep.subr.mxu0 0.0
        %733 = vmatpush1.msra.mxu0 0.0
        %734 = vmatprep.mubr.f32.mxu0 0.0
        %735 = vmatmul.mubr.f32.gmra.mrb[0].mxu0 %v659
        %v736 = vpop.f32.mrb[0].mxu0
        %v737 = vadd.f32 0.0, %v736
        %v738 = vpop.f32.mrb[0].mxu0
        %739 = vmatprep.mubr.f32.mxu0 0.0
        %740 = vmatmul.mubr.f32.gmra.mrb[0].mxu0 %v662
        %v741 = vpop.f32.mrb[0].mxu0
        %v742 = vadd.f32 0.0, %v741
        %v743 = vpop.f32.mrb[0].mxu0
        %744 = vmatprep.mubr.f32.mxu0 0.0
        %745 = vmatmul.mubr.f32.gmra.mrb[0].mxu0 %v665
        %v746 = vpop.f32.mrb[0].mxu0
        %v747 = vadd.f32 0.0, %v746
        %v748 = vpop.f32.mrb[0].mxu0
        %749 = vmatprep.mubr.f32.mxu0 0.0
        %750 = vmatmul.mubr.f32.gmra.mrb[0].mxu0 %v668
        %v751 = vpop.f32.mrb[0].mxu0
        %v752 = vadd.f32 0.0, %v751
        %v753 = vpop.f32.mrb[0].mxu0
        %754 = vdwg.mxu0
        %s755 = scalar_lea.vmem [#allocation4], 256
        %v756 = vld [vmem:[%s755] sm:$0xff]
        %v757 = vld [vmem:[%s755 + $0x8] sm:$0xff]
        %v758 = vld [vmem:[%s755 + $0x10] sm:$0xff]
        %v759 = vld [vmem:[%s755 + $0x18] sm:$0xff]
        %v760 = vld [vmem:[%s755 + $0x20] sm:$0xff]
        %v761 = vld [vmem:[%s755 + $0x28] sm:$0xff]
        %v762 = vld [vmem:[%s755 + $0x30] sm:$0xff]
        %v763 = vld [vmem:[%s755 + $0x38] sm:$0xff]
        %v764 = vld [vmem:[%s755 + $0x40] sm:$0xff]
        %v765 = vld [vmem:[%s755 + $0x48] sm:$0xff]
        %v766 = vld [vmem:[%s755 + $0x50] sm:$0xff]
        %v767 = vld [vmem:[%s755 + $0x58] sm:$0xff]
        %v768 = vld [vmem:[%s755 + $0x60] sm:$0xff]
        %v769 = vld [vmem:[%s755 + $0x68] sm:$0xff]
        %v770 = vld [vmem:[%s755 + $0x70] sm:$0xff]
        %v771 = vld [vmem:[%s755 + $0x78] sm:$0xff]
        %772 = vmatprep.subr.mxu0 0.0
        %773 = vmatpush1.msra.mxu0 %v756
        %774 = vmatprep.subr.mxu0 0.0
        %775 = vmatpush1.msra.mxu0 %v757
        %776 = vmatprep.subr.mxu0 0.0
        %777 = vmatpush1.msra.mxu0 %v758
        %778 = vmatprep.subr.mxu0 0.0
        %779 = vmatpush1.msra.mxu0 %v759
        %780 = vmatprep.subr.mxu0 0.0
        %781 = vmatpush1.msra.mxu0 %v760
        %782 = vmatprep.subr.mxu0 0.0
        %783 = vmatpush1.msra.mxu0 %v761
        %784 = vmatprep.subr.mxu0 0.0
        %785 = vmatpush1.msra.mxu0 %v762
        %786 = vmatprep.subr.mxu0 0.0
        %787 = vmatpush1.msra.mxu0 %v763
        %788 = vmatprep.subr.mxu0 0.0
        %789 = vmatpush1.msra.mxu0 %v764
        %790 = vmatprep.subr.mxu0 0.0
        %791 = vmatpush1.msra.mxu0 %v765
        %792 = vmatprep.subr.mxu0 0.0
        %793 = vmatpush1.msra.mxu0 %v766
        %794 = vmatprep.subr.mxu0 0.0
        %795 = vmatpush1.msra.mxu0 %v767
        %796 = vmatprep.subr.mxu0 0.0
        %797 = vmatpush1.msra.mxu0 %v768
        %798 = vmatprep.subr.mxu0 0.0
        %799 = vmatpush1.msra.mxu0 %v769
        %800 = vmatprep.subr.mxu0 0.0
        %801 = vmatpush1.msra.mxu0 %v770
        %802 = vmatprep.subr.mxu0 0.0
        %803 = vmatpush1.msra.mxu0 %v771
        %804 = vmatprep.subr.mxu0 0.0
        %805 = vmatpush1.msra.mxu0 0.0
        %806 = vmatprep.subr.mxu0 0.0
        %807 = vmatpush1.msra.mxu0 0.0
        %808 = vmatprep.subr.mxu0 0.0
        %809 = vmatpush1.msra.mxu0 0.0
        %810 = vmatprep.subr.mxu0 0.0
        %811 = vmatpush1.msra.mxu0 0.0
        %812 = vmatprep.subr.mxu0 0.0
        %813 = vmatpush1.msra.mxu0 0.0
        %814 = vmatprep.subr.mxu0 0.0
        %815 = vmatpush1.msra.mxu0 0.0
        %816 = vmatprep.subr.mxu0 0.0
        %817 = vmatpush1.msra.mxu0 0.0
        %818 = vmatprep.subr.mxu0 0.0
        %819 = vmatpush1.msra.mxu0 0.0
        %820 = vmatprep.subr.mxu0 0.0
        %821 = vmatpush1.msra.mxu0 0.0
        %822 = vmatprep.subr.mxu0 0.0
        %823 = vmatpush1.msra.mxu0 0.0
        %824 = vmatprep.subr.mxu0 0.0
        %825 = vmatpush1.msra.mxu0 0.0
        %826 = vmatprep.subr.mxu0 0.0
        %827 = vmatpush1.msra.mxu0 0.0
        %828 = vmatprep.subr.mxu0 0.0
        %829 = vmatpush1.msra.mxu0 0.0
        %830 = vmatprep.subr.mxu0 0.0
        %831 = vmatpush1.msra.mxu0 0.0
        %832 = vmatprep.subr.mxu0 0.0
        %833 = vmatpush1.msra.mxu0 0.0
        %834 = vmatprep.subr.mxu0 0.0
        %835 = vmatpush1.msra.mxu0 0.0
        %836 = vmatprep.mubr.f32.mxu0 0.0
        %837 = vmatmul.mubr.f32.gmra.mrb[0].mxu0 %v737
        %v838 = vpop.f32.mrb[0].mxu0
        %v839 = vadd.f32 0.0, %v838
        %v840 = vpop.f32.mrb[0].mxu0
        %841 = vmatprep.mubr.f32.mxu0 0.0
        %842 = vmatmul.mubr.f32.gmra.mrb[0].mxu0 %v742
        %v843 = vpop.f32.mrb[0].mxu0
        %v844 = vadd.f32 0.0, %v843
        %v845 = vpop.f32.mrb[0].mxu0
        %846 = vmatprep.mubr.f32.mxu0 0.0
        %847 = vmatmul.mubr.f32.gmra.mrb[0].mxu0 %v747
        %v848 = vpop.f32.mrb[0].mxu0
        %v849 = vadd.f32 0.0, %v848
        %v850 = vpop.f32.mrb[0].mxu0
        %851 = vmatprep.mubr.f32.mxu0 0.0
        %852 = vmatmul.mubr.f32.gmra.mrb[0].mxu0 %v752
        %v853 = vpop.f32.mrb[0].mxu0
        %v854 = vadd.f32 0.0, %v853
        %v855 = vpop.f32.mrb[0].mxu0
        %856 = vdwg.mxu0
        %v857 = vadd.f32 %v635, %v839
        %v858 = vadd.f32 %v640, %v844
        %v859 = vadd.f32 %v645, %v849
        %v860 = vadd.f32 %v650, %v854
        %v861 = vld [vmem:[#allocation6] sm:$0x1]
        %v863 = vlaneseq
        %v864 = vshrl.u32 %v863, 7
        %v865 = vsub.s32 0, %v864
        %v866 = vrot.slane %v861, %v865
        %v868 = vadd.f32 %v857, %v866
        %v869 = vadd.f32 %v858, %v866
        %v870 = vadd.f32 %v859, %v866
        %v871 = vadd.f32 %v860, %v866
        %vm872 = vcmp.gt.f32.partialorder %v868, 0.0
        %vm873 = vcmp.gt.f32.partialorder %v869, 0.0
        %vm874 = vcmp.gt.f32.partialorder %v870, 0.0
        %vm875 = vcmp.gt.f32.partialorder %v871, 0.0
        %v876 = vmul.f32 %v868, 0.01
        %v877 = vmul.f32 %v869, 0.01
        %v878 = vmul.f32 %v870, 0.01
        %v879 = vmul.f32 %v871, 0.01
        %v880 = vsel %vm872, %v868, %v876
        %v881 = vsel %vm873, %v869, %v877
        %v882 = vsel %vm874, %v870, %v878
        %v883 = vsel %vm875, %v871, %v879
        %s884 = scalar_lea.vmem [#allocation2], 96
        %v885 = vld [vmem:[%s884] sm:$0xff]
        %v886 = vld [vmem:[%s884 + $0x8] sm:$0xff]
        %v887 = vld [vmem:[%s884 + $0x10] sm:$0xff]
        %v888 = vld [vmem:[%s884 + $0x18] sm:$0xff]
        %v890 = vsel %vm250, %v885, 0
        %v893 = vsel %vm250, %v886, 0
        %v896 = vsel %vm250, %v887, 0
        %v899 = vsel %vm250, %v888, 0
        %901 = vmatprep.subr.mxu0 0.0
        %902 = vmatpush1.msra.mxu0 %v880
        %903 = vmatprep.subr.mxu0 0.0
        %904 = vmatpush1.msra.mxu0 %v881
        %905 = vmatprep.subr.mxu0 0.0
        %906 = vmatpush1.msra.mxu0 %v882
        %907 = vmatprep.subr.mxu0 0.0
        %908 = vmatpush1.msra.mxu0 %v883
        %909 = vmatprep.subr.mxu0 0.0
        %910 = vmatpush1.msra.mxu0 0.0
        %911 = vmatprep.subr.mxu0 0.0
        %912 = vmatpush1.msra.mxu0 0.0
        %913 = vmatprep.subr.mxu0 0.0
        %914 = vmatpush1.msra.mxu0 0.0
        %915 = vmatprep.subr.mxu0 0.0
        %916 = vmatpush1.msra.mxu0 0.0
        %917 = vmatprep.subr.mxu0 0.0
        %918 = vmatpush1.msra.mxu0 0.0
        %919 = vmatprep.subr.mxu0 0.0
        %920 = vmatpush1.msra.mxu0 0.0
        %921 = vmatprep.subr.mxu0 0.0
        %922 = vmatpush1.msra.mxu0 0.0
        %923 = vmatprep.subr.mxu0 0.0
        %924 = vmatpush1.msra.mxu0 0.0
        %925 = vmatprep.subr.mxu0 0.0
        %926 = vmatpush1.msra.mxu0 0.0
        %927 = vmatprep.subr.mxu0 0.0
        %928 = vmatpush1.msra.mxu0 0.0
        %929 = vmatprep.subr.mxu0 0.0
        %930 = vmatpush1.msra.mxu0 0.0
        %931 = vmatprep.subr.mxu0 0.0
        %932 = vmatpush1.msra.mxu0 0.0
        %933 = vmatprep.subr.mxu0 0.0
        %934 = vmatpush1.msra.mxu0 0.0
        %935 = vmatprep.subr.mxu0 0.0
        %936 = vmatpush1.msra.mxu0 0.0
        %937 = vmatprep.subr.mxu0 0.0
        %938 = vmatpush1.msra.mxu0 0.0
        %939 = vmatprep.subr.mxu0 0.0
        %940 = vmatpush1.msra.mxu0 0.0
        %941 = vmatprep.subr.mxu0 0.0
        %942 = vmatpush1.msra.mxu0 0.0
        %943 = vmatprep.subr.mxu0 0.0
        %944 = vmatpush1.msra.mxu0 0.0
        %945 = vmatprep.subr.mxu0 0.0
        %946 = vmatpush1.msra.mxu0 0.0
        %947 = vmatprep.subr.mxu0 0.0
        %948 = vmatpush1.msra.mxu0 0.0
        %949 = vmatprep.subr.mxu0 0.0
        %950 = vmatpush1.msra.mxu0 0.0
        %951 = vmatprep.subr.mxu0 0.0
        %952 = vmatpush1.msra.mxu0 0.0
        %953 = vmatprep.subr.mxu0 0.0
        %954 = vmatpush1.msra.mxu0 0.0
        %955 = vmatprep.subr.mxu0 0.0
        %956 = vmatpush1.msra.mxu0 0.0
        %957 = vmatprep.subr.mxu0 0.0
        %958 = vmatpush1.msra.mxu0 0.0
        %959 = vmatprep.subr.mxu0 0.0
        %960 = vmatpush1.msra.mxu0 0.0
        %961 = vmatprep.subr.mxu0 0.0
        %962 = vmatpush1.msra.mxu0 0.0
        %963 = vmatprep.subr.mxu0 0.0
        %964 = vmatpush1.msra.mxu0 0.0
        %965 = vmatprep.mubr.f32.mxu0 0.0
        %966 = vmatmul.mubr.f32.gmra.mrb[0].mxu0 %v890
        %v967 = vpop.f32.mrb[0].mxu0
        %v968 = vadd.f32 0.0, %v967
        %v969 = vpop.f32.mrb[0].mxu0
        %970 = vmatprep.mubr.f32.mxu0 0.0
        %971 = vmatmul.mubr.f32.gmra.mrb[0].mxu0 %v893
        %v972 = vpop.f32.mrb[0].mxu0
        %v973 = vadd.f32 0.0, %v972
        %v974 = vpop.f32.mrb[0].mxu0
        %975 = vmatprep.mubr.f32.mxu0 0.0
        %976 = vmatmul.mubr.f32.gmra.mrb[0].mxu0 %v896
        %v977 = vpop.f32.mrb[0].mxu0
        %v978 = vadd.f32 0.0, %v977
        %v979 = vpop.f32.mrb[0].mxu0
        %980 = vmatprep.mubr.f32.mxu0 0.0
        %981 = vmatmul.mubr.f32.gmra.mrb[0].mxu0 %v899
        %v982 = vpop.f32.mrb[0].mxu0
        %v983 = vadd.f32 0.0, %v982
        %v984 = vpop.f32.mrb[0].mxu0
        %985 = vdwg.mxu0
        %s986 = scalar_lea.vmem [#allocation4], 384
        %v987 = vld [vmem:[%s986] sm:$0xff]
        %v988 = vld [vmem:[%s986 + $0x8] sm:$0xff]
        %v989 = vld [vmem:[%s986 + $0x10] sm:$0xff]
        %v990 = vld [vmem:[%s986 + $0x18] sm:$0xff]
        %v991 = vld [vmem:[%s986 + $0x20] sm:$0xff]
        %v992 = vld [vmem:[%s986 + $0x28] sm:$0xff]
        %v993 = vld [vmem:[%s986 + $0x30] sm:$0xff]
        %v994 = vld [vmem:[%s986 + $0x38] sm:$0xff]
        %v995 = vld [vmem:[%s986 + $0x40] sm:$0xff]
        %v996 = vld [vmem:[%s986 + $0x48] sm:$0xff]
        %v997 = vld [vmem:[%s986 + $0x50] sm:$0xff]
        %v998 = vld [vmem:[%s986 + $0x58] sm:$0xff]
        %v999 = vld [vmem:[%s986 + $0x60] sm:$0xff]
        %v1000 = vld [vmem:[%s986 + $0x68] sm:$0xff]
        %v1001 = vld [vmem:[%s986 + $0x70] sm:$0xff]
        %v1002 = vld [vmem:[%s986 + $0x78] sm:$0xff]
        %s1003 = scalar_lea.vmem [#allocation2], 128
        %v1004 = vld [vmem:[%s1003] sm:$0xff]
        %v1005 = vld [vmem:[%s1003 + $0x8] sm:$0xff]
        %v1006 = vld [vmem:[%s1003 + $0x10] sm:$0xff]
        %v1007 = vld [vmem:[%s1003 + $0x18] sm:$0xff]
        %v1009 = vsel %vm250, %v1004, 0
        %v1012 = vsel %vm250, %v1005, 0
        %v1015 = vsel %vm250, %v1006, 0
        %v1018 = vsel %vm250, %v1007, 0
        %1020 = vmatprep.subr.mxu0 0.0
        %1021 = vmatpush1.msra.mxu0 %v880
        %1022 = vmatprep.subr.mxu0 0.0
        %1023 = vmatpush1.msra.mxu0 %v881
        %1024 = vmatprep.subr.mxu0 0.0
        %1025 = vmatpush1.msra.mxu0 %v882
        %1026 = vmatprep.subr.mxu0 0.0
        %1027 = vmatpush1.msra.mxu0 %v883
        %1028 = vmatprep.subr.mxu0 0.0
        %1029 = vmatpush1.msra.mxu0 0.0
        %1030 = vmatprep.subr.mxu0 0.0
        %1031 = vmatpush1.msra.mxu0 0.0
        %1032 = vmatprep.subr.mxu0 0.0
        %1033 = vmatpush1.msra.mxu0 0.0
        %1034 = vmatprep.subr.mxu0 0.0
        %1035 = vmatpush1.msra.mxu0 0.0
        %1036 = vmatprep.subr.mxu0 0.0
        %1037 = vmatpush1.msra.mxu0 0.0
        %1038 = vmatprep.subr.mxu0 0.0
        %1039 = vmatpush1.msra.mxu0 0.0
        %1040 = vmatprep.subr.mxu0 0.0
        %1041 = vmatpush1.msra.mxu0 0.0
        %1042 = vmatprep.subr.mxu0 0.0
        %1043 = vmatpush1.msra.mxu0 0.0
        %1044 = vmatprep.subr.mxu0 0.0
        %1045 = vmatpush1.msra.mxu0 0.0
        %1046 = vmatprep.subr.mxu0 0.0
        %1047 = vmatpush1.msra.mxu0 0.0
        %1048 = vmatprep.subr.mxu0 0.0
        %1049 = vmatpush1.msra.mxu0 0.0
        %1050 = vmatprep.subr.mxu0 0.0
        %1051 = vmatpush1.msra.mxu0 0.0
        %1052 = vmatprep.subr.mxu0 0.0
        %1053 = vmatpush1.msra.mxu0 0.0
        %1054 = vmatprep.subr.mxu0 0.0
        %1055 = vmatpush1.msra.mxu0 0.0
        %1056 = vmatprep.subr.mxu0 0.0
        %1057 = vmatpush1.msra.mxu0 0.0
        %1058 = vmatprep.subr.mxu0 0.0
        %1059 = vmatpush1.msra.mxu0 0.0
        %1060 = vmatprep.subr.mxu0 0.0
        %1061 = vmatpush1.msra.mxu0 0.0
        %1062 = vmatprep.subr.mxu0 0.0
        %1063 = vmatpush1.msra.mxu0 0.0
        %1064 = vmatprep.subr.mxu0 0.0
        %1065 = vmatpush1.msra.mxu0 0.0
        %1066 = vmatprep.subr.mxu0 0.0
        %1067 = vmatpush1.msra.mxu0 0.0
        %1068 = vmatprep.subr.mxu0 0.0
        %1069 = vmatpush1.msra.mxu0 0.0
        %1070 = vmatprep.subr.mxu0 0.0
        %1071 = vmatpush1.msra.mxu0 0.0
        %1072 = vmatprep.subr.mxu0 0.0
        %1073 = vmatpush1.msra.mxu0 0.0
        %1074 = vmatprep.subr.mxu0 0.0
        %1075 = vmatpush1.msra.mxu0 0.0
        %1076 = vmatprep.subr.mxu0 0.0
        %1077 = vmatpush1.msra.mxu0 0.0
        %1078 = vmatprep.subr.mxu0 0.0
        %1079 = vmatpush1.msra.mxu0 0.0
        %1080 = vmatprep.subr.mxu0 0.0
        %1081 = vmatpush1.msra.mxu0 0.0
        %1082 = vmatprep.subr.mxu0 0.0
        %1083 = vmatpush1.msra.mxu0 0.0
        %1084 = vmatprep.mubr.f32.mxu0 0.0
        %1085 = vmatmul.mubr.f32.gmra.mrb[0].mxu0 %v1009
        %v1086 = vpop.f32.mrb[0].mxu0
        %v1087 = vadd.f32 0.0, %v1086
        %v1088 = vpop.f32.mrb[0].mxu0
        %1089 = vmatprep.mubr.f32.mxu0 0.0
        %1090 = vmatmul.mubr.f32.gmra.mrb[0].mxu0 %v1012
        %v1091 = vpop.f32.mrb[0].mxu0
        %v1092 = vadd.f32 0.0, %v1091
        %v1093 = vpop.f32.mrb[0].mxu0
        %1094 = vmatprep.mubr.f32.mxu0 0.0
        %1095 = vmatmul.mubr.f32.gmra.mrb[0].mxu0 %v1015
        %v1096 = vpop.f32.mrb[0].mxu0
        %v1097 = vadd.f32 0.0, %v1096
        %v1098 = vpop.f32.mrb[0].mxu0
        %1099 = vmatprep.mubr.f32.mxu0 0.0
        %1100 = vmatmul.mubr.f32.gmra.mrb[0].mxu0 %v1018
        %v1101 = vpop.f32.mrb[0].mxu0
        %v1102 = vadd.f32 0.0, %v1101
        %v1103 = vpop.f32.mrb[0].mxu0
        %1104 = vdwg.mxu0
        %s1105 = scalar_lea.vmem [#allocation4], 512
        %v1106 = vld [vmem:[%s1105] sm:$0xff]
        %v1107 = vld [vmem:[%s1105 + $0x8] sm:$0xff]
        %v1108 = vld [vmem:[%s1105 + $0x10] sm:$0xff]
        %v1109 = vld [vmem:[%s1105 + $0x18] sm:$0xff]
        %v1110 = vld [vmem:[%s1105 + $0x20] sm:$0xff]
        %v1111 = vld [vmem:[%s1105 + $0x28] sm:$0xff]
        %v1112 = vld [vmem:[%s1105 + $0x30] sm:$0xff]
        %v1113 = vld [vmem:[%s1105 + $0x38] sm:$0xff]
        %v1114 = vld [vmem:[%s1105 + $0x40] sm:$0xff]
        %v1115 = vld [vmem:[%s1105 + $0x48] sm:$0xff]
        %v1116 = vld [vmem:[%s1105 + $0x50] sm:$0xff]
        %v1117 = vld [vmem:[%s1105 + $0x58] sm:$0xff]
        %v1118 = vld [vmem:[%s1105 + $0x60] sm:$0xff]
        %v1119 = vld [vmem:[%s1105 + $0x68] sm:$0xff]
        %v1120 = vld [vmem:[%s1105 + $0x70] sm:$0xff]
        %v1121 = vld [vmem:[%s1105 + $0x78] sm:$0xff]
        %1122 = vmatprep.subr.mxu0 0.0
        %1123 = vmatpush1.msra.mxu0 %v1106
        %1124 = vmatprep.subr.mxu0 0.0
        %1125 = vmatpush1.msra.mxu0 %v1107
        %1126 = vmatprep.subr.mxu0 0.0
        %1127 = vmatpush1.msra.mxu0 %v1108
        %1128 = vmatprep.subr.mxu0 0.0
        %1129 = vmatpush1.msra.mxu0 %v1109
        %1130 = vmatprep.subr.mxu0 0.0
        %1131 = vmatpush1.msra.mxu0 %v1110
        %1132 = vmatprep.subr.mxu0 0.0
        %1133 = vmatpush1.msra.mxu0 %v1111
        %1134 = vmatprep.subr.mxu0 0.0
        %1135 = vmatpush1.msra.mxu0 %v1112
        %1136 = vmatprep.subr.mxu0 0.0
        %1137 = vmatpush1.msra.mxu0 %v1113
        %1138 = vmatprep.subr.mxu0 0.0
        %1139 = vmatpush1.msra.mxu0 %v1114
        %1140 = vmatprep.subr.mxu0 0.0
        %1141 = vmatpush1.msra.mxu0 %v1115
        %1142 = vmatprep.subr.mxu0 0.0
        %1143 = vmatpush1.msra.mxu0 %v1116
        %1144 = vmatprep.subr.mxu0 0.0
        %1145 = vmatpush1.msra.mxu0 %v1117
        %1146 = vmatprep.subr.mxu0 0.0
        %1147 = vmatpush1.msra.mxu0 %v1118
        %1148 = vmatprep.subr.mxu0 0.0
        %1149 = vmatpush1.msra.mxu0 %v1119
        %1150 = vmatprep.subr.mxu0 0.0
        %1151 = vmatpush1.msra.mxu0 %v1120
        %1152 = vmatprep.subr.mxu0 0.0
        %1153 = vmatpush1.msra.mxu0 %v1121
        %1154 = vmatprep.subr.mxu0 0.0
        %1155 = vmatpush1.msra.mxu0 0.0
        %1156 = vmatprep.subr.mxu0 0.0
        %1157 = vmatpush1.msra.mxu0 0.0
        %1158 = vmatprep.subr.mxu0 0.0
        %1159 = vmatpush1.msra.mxu0 0.0
        %1160 = vmatprep.subr.mxu0 0.0
        %1161 = vmatpush1.msra.mxu0 0.0
        %1162 = vmatprep.subr.mxu0 0.0
        %1163 = vmatpush1.msra.mxu0 0.0
        %1164 = vmatprep.subr.mxu0 0.0
        %1165 = vmatpush1.msra.mxu0 0.0
        %1166 = vmatprep.subr.mxu0 0.0
        %1167 = vmatpush1.msra.mxu0 0.0
        %1168 = vmatprep.subr.mxu0 0.0
        %1169 = vmatpush1.msra.mxu0 0.0
        %1170 = vmatprep.subr.mxu0 0.0
        %1171 = vmatpush1.msra.mxu0 0.0
        %1172 = vmatprep.subr.mxu0 0.0
        %1173 = vmatpush1.msra.mxu0 0.0
        %1174 = vmatprep.subr.mxu0 0.0
        %1175 = vmatpush1.msra.mxu0 0.0
        %1176 = vmatprep.subr.mxu0 0.0
        %1177 = vmatpush1.msra.mxu0 0.0
        %1178 = vmatprep.subr.mxu0 0.0
        %1179 = vmatpush1.msra.mxu0 0.0
        %1180 = vmatprep.subr.mxu0 0.0
        %1181 = vmatpush1.msra.mxu0 0.0
        %1182 = vmatprep.subr.mxu0 0.0
        %1183 = vmatpush1.msra.mxu0 0.0
        %1184 = vmatprep.subr.mxu0 0.0
        %1185 = vmatpush1.msra.mxu0 0.0
        %1186 = vmatprep.mubr.f32.mxu0 0.0
        %1187 = vmatmul.mubr.f32.gmra.mrb[0].mxu0 %v1087
        %v1188 = vpop.f32.mrb[0].mxu0
        %v1189 = vadd.f32 0.0, %v1188
        %v1190 = vpop.f32.mrb[0].mxu0
        %1191 = vmatprep.mubr.f32.mxu0 0.0
        %1192 = vmatmul.mubr.f32.gmra.mrb[0].mxu0 %v1092
        %v1193 = vpop.f32.mrb[0].mxu0
        %v1194 = vadd.f32 0.0, %v1193
        %v1195 = vpop.f32.mrb[0].mxu0
        %1196 = vmatprep.mubr.f32.mxu0 0.0
        %1197 = vmatmul.mubr.f32.gmra.mrb[0].mxu0 %v1097
        %v1198 = vpop.f32.mrb[0].mxu0
        %v1199 = vadd.f32 0.0, %v1198
        %v1200 = vpop.f32.mrb[0].mxu0
        %1201 = vmatprep.mubr.f32.mxu0 0.0
        %1202 = vmatmul.mubr.f32.gmra.mrb[0].mxu0 %v1102
        %v1203 = vpop.f32.mrb[0].mxu0
        %v1204 = vadd.f32 0.0, %v1203
        %v1205 = vpop.f32.mrb[0].mxu0
        %1206 = vdwg.mxu0
        %1207 = vmatprep.subr.mxu0 0.0
        %1208 = vmatpush1.msra.mxu0 %v987
        %1209 = vmatprep.subr.mxu0 0.0
        %1210 = vmatpush1.msra.mxu0 %v988
        %1211 = vmatprep.subr.mxu0 0.0
        %1212 = vmatpush1.msra.mxu0 %v989
        %1213 = vmatprep.subr.mxu0 0.0
        %1214 = vmatpush1.msra.mxu0 %v990
        %1215 = vmatprep.subr.mxu0 0.0
        %1216 = vmatpush1.msra.mxu0 %v991
        %1217 = vmatprep.subr.mxu0 0.0
        %1218 = vmatpush1.msra.mxu0 %v992
        %1219 = vmatprep.subr.mxu0 0.0
        %1220 = vmatpush1.msra.mxu0 %v993
        %1221 = vmatprep.subr.mxu0 0.0
        %1222 = vmatpush1.msra.mxu0 %v994
        %1223 = vmatprep.subr.mxu0 0.0
        %1224 = vmatpush1.msra.mxu0 %v995
        %1225 = vmatprep.subr.mxu0 0.0
        %1226 = vmatpush1.msra.mxu0 %v996
        %1227 = vmatprep.subr.mxu0 0.0
        %1228 = vmatpush1.msra.mxu0 %v997
        %1229 = vmatprep.subr.mxu0 0.0
        %1230 = vmatpush1.msra.mxu0 %v998
        %1231 = vmatprep.subr.mxu0 0.0
        %1232 = vmatpush1.msra.mxu0 %v999
        %1233 = vmatprep.subr.mxu0 0.0
        %1234 = vmatpush1.msra.mxu0 %v1000
        %1235 = vmatprep.subr.mxu0 0.0
        %1236 = vmatpush1.msra.mxu0 %v1001
        %1237 = vmatprep.subr.mxu0 0.0
        %1238 = vmatpush1.msra.mxu0 %v1002
        %1239 = vmatprep.subr.mxu0 0.0
        %1240 = vmatpush1.msra.mxu0 0.0
        %1241 = vmatprep.subr.mxu0 0.0
        %1242 = vmatpush1.msra.mxu0 0.0
        %1243 = vmatprep.subr.mxu0 0.0
        %1244 = vmatpush1.msra.mxu0 0.0
        %1245 = vmatprep.subr.mxu0 0.0
        %1246 = vmatpush1.msra.mxu0 0.0
        %1247 = vmatprep.subr.mxu0 0.0
        %1248 = vmatpush1.msra.mxu0 0.0
        %1249 = vmatprep.subr.mxu0 0.0
        %1250 = vmatpush1.msra.mxu0 0.0
        %1251 = vmatprep.subr.mxu0 0.0
        %1252 = vmatpush1.msra.mxu0 0.0
        %1253 = vmatprep.subr.mxu0 0.0
        %1254 = vmatpush1.msra.mxu0 0.0
        %1255 = vmatprep.subr.mxu0 0.0
        %1256 = vmatpush1.msra.mxu0 0.0
        %1257 = vmatprep.subr.mxu0 0.0
        %1258 = vmatpush1.msra.mxu0 0.0
        %1259 = vmatprep.subr.mxu0 0.0
        %1260 = vmatpush1.msra.mxu0 0.0
        %1261 = vmatprep.subr.mxu0 0.0
        %1262 = vmatpush1.msra.mxu0 0.0
        %1263 = vmatprep.subr.mxu0 0.0
        %1264 = vmatpush1.msra.mxu0 0.0
        %1265 = vmatprep.subr.mxu0 0.0
        %1266 = vmatpush1.msra.mxu0 0.0
        %1267 = vmatprep.subr.mxu0 0.0
        %1268 = vmatpush1.msra.mxu0 0.0
        %1269 = vmatprep.subr.mxu0 0.0
        %1270 = vmatpush1.msra.mxu0 0.0
        %1271 = vmatprep.mubr.f32.mxu0 0.0
        %1272 = vmatmul.mubr.f32.gmra.mrb[0].mxu0 %v968
        %v1273 = vpop.f32.mrb[0].mxu0
        %v1274 = vadd.f32 %v1189, %v1273
        %v1275 = vpop.f32.mrb[0].mxu0
        %1276 = vmatprep.mubr.f32.mxu0 0.0
        %1277 = vmatmul.mubr.f32.gmra.mrb[0].mxu0 %v973
        %v1278 = vpop.f32.mrb[0].mxu0
        %v1279 = vadd.f32 %v1194, %v1278
        %v1280 = vpop.f32.mrb[0].mxu0
        %1281 = vmatprep.mubr.f32.mxu0 0.0
        %1282 = vmatmul.mubr.f32.gmra.mrb[0].mxu0 %v978
        %v1283 = vpop.f32.mrb[0].mxu0
        %v1284 = vadd.f32 %v1199, %v1283
        %v1285 = vpop.f32.mrb[0].mxu0
        %1286 = vmatprep.mubr.f32.mxu0 0.0
        %1287 = vmatmul.mubr.f32.gmra.mrb[0].mxu0 %v983
        %v1288 = vpop.f32.mrb[0].mxu0
        %v1289 = vadd.f32 %v1204, %v1288
        %v1290 = vpop.f32.mrb[0].mxu0
        %1291 = vdwg.mxu0
        %s1292 = scalar_lea.vmem [#allocation2], 160
        %v1293 = vld [vmem:[%s1292] sm:$0xff]
        %v1294 = vld [vmem:[%s1292 + $0x8] sm:$0xff]
        %v1295 = vld [vmem:[%s1292 + $0x10] sm:$0xff]
        %v1296 = vld [vmem:[%s1292 + $0x18] sm:$0xff]
        %v1298 = vsel %vm250, %v1293, 0
        %v1301 = vsel %vm250, %v1294, 0
        %v1304 = vsel %vm250, %v1295, 0
        %v1307 = vsel %vm250, %v1296, 0
        %1309 = vmatprep.subr.mxu0 0.0
        %1310 = vmatpush1.msra.mxu0 %v880
        %1311 = vmatprep.subr.mxu0 0.0
        %1312 = vmatpush1.msra.mxu0 %v881
        %1313 = vmatprep.subr.mxu0 0.0
        %1314 = vmatpush1.msra.mxu0 %v882
        %1315 = vmatprep.subr.mxu0 0.0
        %1316 = vmatpush1.msra.mxu0 %v883
        %1317 = vmatprep.subr.mxu0 0.0
        %1318 = vmatpush1.msra.mxu0 0.0
        %1319 = vmatprep.subr.mxu0 0.0
        %1320 = vmatpush1.msra.mxu0 0.0
        %1321 = vmatprep.subr.mxu0 0.0
        %1322 = vmatpush1.msra.mxu0 0.0
        %1323 = vmatprep.subr.mxu0 0.0
        %1324 = vmatpush1.msra.mxu0 0.0
        %1325 = vmatprep.subr.mxu0 0.0
        %1326 = vmatpush1.msra.mxu0 0.0
        %1327 = vmatprep.subr.mxu0 0.0
        %1328 = vmatpush1.msra.mxu0 0.0
        %1329 = vmatprep.subr.mxu0 0.0
        %1330 = vmatpush1.msra.mxu0 0.0
        %1331 = vmatprep.subr.mxu0 0.0
        %1332 = vmatpush1.msra.mxu0 0.0
        %1333 = vmatprep.subr.mxu0 0.0
        %1334 = vmatpush1.msra.mxu0 0.0
        %1335 = vmatprep.subr.mxu0 0.0
        %1336 = vmatpush1.msra.mxu0 0.0
        %1337 = vmatprep.subr.mxu0 0.0
        %1338 = vmatpush1.msra.mxu0 0.0
        %1339 = vmatprep.subr.mxu0 0.0
        %1340 = vmatpush1.msra.mxu0 0.0
        %1341 = vmatprep.subr.mxu0 0.0
        %1342 = vmatpush1.msra.mxu0 0.0
        %1343 = vmatprep.subr.mxu0 0.0
        %1344 = vmatpush1.msra.mxu0 0.0
        %1345 = vmatprep.subr.mxu0 0.0
        %1346 = vmatpush1.msra.mxu0 0.0
        %1347 = vmatprep.subr.mxu0 0.0
        %1348 = vmatpush1.msra.mxu0 0.0
        %1349 = vmatprep.subr.mxu0 0.0
        %1350 = vmatpush1.msra.mxu0 0.0
        %1351 = vmatprep.subr.mxu0 0.0
        %1352 = vmatpush1.msra.mxu0 0.0
        %1353 = vmatprep.subr.mxu0 0.0
        %1354 = vmatpush1.msra.mxu0 0.0
        %1355 = vmatprep.subr.mxu0 0.0
        %1356 = vmatpush1.msra.mxu0 0.0
        %1357 = vmatprep.subr.mxu0 0.0
        %1358 = vmatpush1.msra.mxu0 0.0
        %1359 = vmatprep.subr.mxu0 0.0
        %1360 = vmatpush1.msra.mxu0 0.0
        %1361 = vmatprep.subr.mxu0 0.0
        %1362 = vmatpush1.msra.mxu0 0.0
        %1363 = vmatprep.subr.mxu0 0.0
        %1364 = vmatpush1.msra.mxu0 0.0
        %1365 = vmatprep.subr.mxu0 0.0
        %1366 = vmatpush1.msra.mxu0 0.0
        %1367 = vmatprep.subr.mxu0 0.0
        %1368 = vmatpush1.msra.mxu0 0.0
        %1369 = vmatprep.subr.mxu0 0.0
        %1370 = vmatpush1.msra.mxu0 0.0
        %1371 = vmatprep.subr.mxu0 0.0
        %1372 = vmatpush1.msra.mxu0 0.0
        %1373 = vmatprep.mubr.f32.mxu0 0.0
        %1374 = vmatmul.mubr.f32.gmra.mrb[0].mxu0 %v1298
        %v1375 = vpop.f32.mrb[0].mxu0
        %v1376 = vadd.f32 0.0, %v1375
        %v1377 = vpop.f32.mrb[0].mxu0
        %1378 = vmatprep.mubr.f32.mxu0 0.0
        %1379 = vmatmul.mubr.f32.gmra.mrb[0].mxu0 %v1301
        %v1380 = vpop.f32.mrb[0].mxu0
        %v1381 = vadd.f32 0.0, %v1380
        %v1382 = vpop.f32.mrb[0].mxu0
        %1383 = vmatprep.mubr.f32.mxu0 0.0
        %1384 = vmatmul.mubr.f32.gmra.mrb[0].mxu0 %v1304
        %v1385 = vpop.f32.mrb[0].mxu0
        %v1386 = vadd.f32 0.0, %v1385
        %v1387 = vpop.f32.mrb[0].mxu0
        %1388 = vmatprep.mubr.f32.mxu0 0.0
        %1389 = vmatmul.mubr.f32.gmra.mrb[0].mxu0 %v1307
        %v1390 = vpop.f32.mrb[0].mxu0
        %v1391 = vadd.f32 0.0, %v1390
        %v1392 = vpop.f32.mrb[0].mxu0
        %1393 = vdwg.mxu0
        %s1394 = scalar_lea.vmem [#allocation4], 640
        %v1395 = vld [vmem:[%s1394] sm:$0xff]
        %v1396 = vld [vmem:[%s1394 + $0x8] sm:$0xff]
        %v1397 = vld [vmem:[%s1394 + $0x10] sm:$0xff]
        %v1398 = vld [vmem:[%s1394 + $0x18] sm:$0xff]
        %v1399 = vld [vmem:[%s1394 + $0x20] sm:$0xff]
        %v1400 = vld [vmem:[%s1394 + $0x28] sm:$0xff]
        %v1401 = vld [vmem:[%s1394 + $0x30] sm:$0xff]
        %v1402 = vld [vmem:[%s1394 + $0x38] sm:$0xff]
        %v1403 = vld [vmem:[%s1394 + $0x40] sm:$0xff]
        %v1404 = vld [vmem:[%s1394 + $0x48] sm:$0xff]
        %v1405 = vld [vmem:[%s1394 + $0x50] sm:$0xff]
        %v1406 = vld [vmem:[%s1394 + $0x58] sm:$0xff]
        %v1407 = vld [vmem:[%s1394 + $0x60] sm:$0xff]
        %v1408 = vld [vmem:[%s1394 + $0x68] sm:$0xff]
        %v1409 = vld [vmem:[%s1394 + $0x70] sm:$0xff]
        %v1410 = vld [vmem:[%s1394 + $0x78] sm:$0xff]
        %1411 = vmatprep.subr.mxu0 0.0
        %1412 = vmatpush1.msra.mxu0 %v1395
        %1413 = vmatprep.subr.mxu0 0.0
        %1414 = vmatpush1.msra.mxu0 %v1396
        %1415 = vmatprep.subr.mxu0 0.0
        %1416 = vmatpush1.msra.mxu0 %v1397
        %1417 = vmatprep.subr.mxu0 0.0
        %1418 = vmatpush1.msra.mxu0 %v1398
        %1419 = vmatprep.subr.mxu0 0.0
        %1420 = vmatpush1.msra.mxu0 %v1399
        %1421 = vmatprep.subr.mxu0 0.0
        %1422 = vmatpush1.msra.mxu0 %v1400
        %1423 = vmatprep.subr.mxu0 0.0
        %1424 = vmatpush1.msra.mxu0 %v1401
        %1425 = vmatprep.subr.mxu0 0.0
        %1426 = vmatpush1.msra.mxu0 %v1402
        %1427 = vmatprep.subr.mxu0 0.0
        %1428 = vmatpush1.msra.mxu0 %v1403
        %1429 = vmatprep.subr.mxu0 0.0
        %1430 = vmatpush1.msra.mxu0 %v1404
        %1431 = vmatprep.subr.mxu0 0.0
        %1432 = vmatpush1.msra.mxu0 %v1405
        %1433 = vmatprep.subr.mxu0 0.0
        %1434 = vmatpush1.msra.mxu0 %v1406
        %1435 = vmatprep.subr.mxu0 0.0
        %1436 = vmatpush1.msra.mxu0 %v1407
        %1437 = vmatprep.subr.mxu0 0.0
        %1438 = vmatpush1.msra.mxu0 %v1408
        %1439 = vmatprep.subr.mxu0 0.0
        %1440 = vmatpush1.msra.mxu0 %v1409
        %1441 = vmatprep.subr.mxu0 0.0
        %1442 = vmatpush1.msra.mxu0 %v1410
        %1443 = vmatprep.subr.mxu0 0.0
        %1444 = vmatpush1.msra.mxu0 0.0
        %1445 = vmatprep.subr.mxu0 0.0
        %1446 = vmatpush1.msra.mxu0 0.0
        %1447 = vmatprep.subr.mxu0 0.0
        %1448 = vmatpush1.msra.mxu0 0.0
        %1449 = vmatprep.subr.mxu0 0.0
        %1450 = vmatpush1.msra.mxu0 0.0
        %1451 = vmatprep.subr.mxu0 0.0
        %1452 = vmatpush1.msra.mxu0 0.0
        %1453 = vmatprep.subr.mxu0 0.0
        %1454 = vmatpush1.msra.mxu0 0.0
        %1455 = vmatprep.subr.mxu0 0.0
        %1456 = vmatpush1.msra.mxu0 0.0
        %1457 = vmatprep.subr.mxu0 0.0
        %1458 = vmatpush1.msra.mxu0 0.0
        %1459 = vmatprep.subr.mxu0 0.0
        %1460 = vmatpush1.msra.mxu0 0.0
        %1461 = vmatprep.subr.mxu0 0.0
        %1462 = vmatpush1.msra.mxu0 0.0
        %1463 = vmatprep.subr.mxu0 0.0
        %1464 = vmatpush1.msra.mxu0 0.0
        %1465 = vmatprep.subr.mxu0 0.0
        %1466 = vmatpush1.msra.mxu0 0.0
        %1467 = vmatprep.subr.mxu0 0.0
        %1468 = vmatpush1.msra.mxu0 0.0
        %1469 = vmatprep.subr.mxu0 0.0
        %1470 = vmatpush1.msra.mxu0 0.0
        %1471 = vmatprep.subr.mxu0 0.0
        %1472 = vmatpush1.msra.mxu0 0.0
        %1473 = vmatprep.subr.mxu0 0.0
        %1474 = vmatpush1.msra.mxu0 0.0
        %1475 = vmatprep.mubr.f32.mxu0 0.0
        %1476 = vmatmul.mubr.f32.gmra.mrb[0].mxu0 %v1376
        %v1477 = vpop.f32.mrb[0].mxu0
        %v1478 = vadd.f32 0.0, %v1477
        %v1479 = vpop.f32.mrb[0].mxu0
        %1480 = vmatprep.mubr.f32.mxu0 0.0
        %1481 = vmatmul.mubr.f32.gmra.mrb[0].mxu0 %v1381
        %v1482 = vpop.f32.mrb[0].mxu0
        %v1483 = vadd.f32 0.0, %v1482
        %v1484 = vpop.f32.mrb[0].mxu0
        %1485 = vmatprep.mubr.f32.mxu0 0.0
        %1486 = vmatmul.mubr.f32.gmra.mrb[0].mxu0 %v1386
        %v1487 = vpop.f32.mrb[0].mxu0
        %v1488 = vadd.f32 0.0, %v1487
        %v1489 = vpop.f32.mrb[0].mxu0
        %1490 = vmatprep.mubr.f32.mxu0 0.0
        %1491 = vmatmul.mubr.f32.gmra.mrb[0].mxu0 %v1391
        %v1492 = vpop.f32.mrb[0].mxu0
        %v1493 = vadd.f32 0.0, %v1492
        %v1494 = vpop.f32.mrb[0].mxu0
        %1495 = vdwg.mxu0
        %v1496 = vadd.f32 %v1274, %v1478
        %v1497 = vadd.f32 %v1279, %v1483
        %v1498 = vadd.f32 %v1284, %v1488
        %v1499 = vadd.f32 %v1289, %v1493
        %s1500 = scalar_lea.vmem [#allocation6], 1
        %v1501 = vld [vmem:[%s1500] sm:$0x1]
        %v1503 = vlaneseq
        %v1504 = vshrl.u32 %v1503, 7
        %v1505 = vsub.s32 0, %v1504
        %v1506 = vrot.slane %v1501, %v1505
        %v1508 = vadd.f32 %v1496, %v1506
        %v1509 = vadd.f32 %v1497, %v1506
        %v1510 = vadd.f32 %v1498, %v1506
        %v1511 = vadd.f32 %v1499, %v1506
        %vm1512 = vcmp.gt.f32.partialorder %v1508, 0.0
        %vm1513 = vcmp.gt.f32.partialorder %v1509, 0.0
        %vm1514 = vcmp.gt.f32.partialorder %v1510, 0.0
        %vm1515 = vcmp.gt.f32.partialorder %v1511, 0.0
        %v1516 = vmul.f32 %v1508, 0.01
        %v1517 = vmul.f32 %v1509, 0.01
        %v1518 = vmul.f32 %v1510, 0.01
        %v1519 = vmul.f32 %v1511, 0.01
        %v1520 = vsel %vm1512, %v1508, %v1516
        %v1521 = vsel %vm1513, %v1509, %v1517
        %v1522 = vsel %vm1514, %v1510, %v1518
        %v1523 = vsel %vm1515, %v1511, %v1519
        %s1524 = scalar_lea.vmem [#allocation2], 192
        %v1525 = vld [vmem:[%s1524] sm:$0xff]
        %v1526 = vld [vmem:[%s1524 + $0x8] sm:$0xff]
        %v1527 = vld [vmem:[%s1524 + $0x10] sm:$0xff]
        %v1528 = vld [vmem:[%s1524 + $0x18] sm:$0xff]
        %v1530 = vsel %vm250, %v1525, 0
        %v1533 = vsel %vm250, %v1526, 0
        %v1536 = vsel %vm250, %v1527, 0
        %v1539 = vsel %vm250, %v1528, 0
        %1541 = vmatprep.subr.mxu0 0.0
        %1542 = vmatpush1.msra.mxu0 %v1520
        %1543 = vmatprep.subr.mxu0 0.0
        %1544 = vmatpush1.msra.mxu0 %v1521
        %1545 = vmatprep.subr.mxu0 0.0
        %1546 = vmatpush1.msra.mxu0 %v1522
        %1547 = vmatprep.subr.mxu0 0.0
        %1548 = vmatpush1.msra.mxu0 %v1523
        %1549 = vmatprep.subr.mxu0 0.0
        %1550 = vmatpush1.msra.mxu0 0.0
        %1551 = vmatprep.subr.mxu0 0.0
        %1552 = vmatpush1.msra.mxu0 0.0
        %1553 = vmatprep.subr.mxu0 0.0
        %1554 = vmatpush1.msra.mxu0 0.0
        %1555 = vmatprep.subr.mxu0 0.0
        %1556 = vmatpush1.msra.mxu0 0.0
        %1557 = vmatprep.subr.mxu0 0.0
        %1558 = vmatpush1.msra.mxu0 0.0
        %1559 = vmatprep.subr.mxu0 0.0
        %1560 = vmatpush1.msra.mxu0 0.0
        %1561 = vmatprep.subr.mxu0 0.0
        %1562 = vmatpush1.msra.mxu0 0.0
        %1563 = vmatprep.subr.mxu0 0.0
        %1564 = vmatpush1.msra.mxu0 0.0
        %1565 = vmatprep.subr.mxu0 0.0
        %1566 = vmatpush1.msra.mxu0 0.0
        %1567 = vmatprep.subr.mxu0 0.0
        %1568 = vmatpush1.msra.mxu0 0.0
        %1569 = vmatprep.subr.mxu0 0.0
        %1570 = vmatpush1.msra.mxu0 0.0
        %1571 = vmatprep.subr.mxu0 0.0
        %1572 = vmatpush1.msra.mxu0 0.0
        %1573 = vmatprep.subr.mxu0 0.0
        %1574 = vmatpush1.msra.mxu0 0.0
        %1575 = vmatprep.subr.mxu0 0.0
        %1576 = vmatpush1.msra.mxu0 0.0
        %1577 = vmatprep.subr.mxu0 0.0
        %1578 = vmatpush1.msra.mxu0 0.0
        %1579 = vmatprep.subr.mxu0 0.0
        %1580 = vmatpush1.msra.mxu0 0.0
        %1581 = vmatprep.subr.mxu0 0.0
        %1582 = vmatpush1.msra.mxu0 0.0
        %1583 = vmatprep.subr.mxu0 0.0
        %1584 = vmatpush1.msra.mxu0 0.0
        %1585 = vmatprep.subr.mxu0 0.0
        %1586 = vmatpush1.msra.mxu0 0.0
        %1587 = vmatprep.subr.mxu0 0.0
        %1588 = vmatpush1.msra.mxu0 0.0
        %1589 = vmatprep.subr.mxu0 0.0
        %1590 = vmatpush1.msra.mxu0 0.0
        %1591 = vmatprep.subr.mxu0 0.0
        %1592 = vmatpush1.msra.mxu0 0.0
        %1593 = vmatprep.subr.mxu0 0.0
        %1594 = vmatpush1.msra.mxu0 0.0
        %1595 = vmatprep.subr.mxu0 0.0
        %1596 = vmatpush1.msra.mxu0 0.0
        %1597 = vmatprep.subr.mxu0 0.0
        %1598 = vmatpush1.msra.mxu0 0.0
        %1599 = vmatprep.subr.mxu0 0.0
        %1600 = vmatpush1.msra.mxu0 0.0
        %1601 = vmatprep.subr.mxu0 0.0
        %1602 = vmatpush1.msra.mxu0 0.0
        %1603 = vmatprep.subr.mxu0 0.0
        %1604 = vmatpush1.msra.mxu0 0.0
        %1605 = vmatprep.mubr.f32.mxu0 0.0
        %1606 = vmatmul.mubr.f32.gmra.mrb[0].mxu0 %v1530
        %v1607 = vpop.f32.mrb[0].mxu0
        %v1608 = vadd.f32 0.0, %v1607
        %v1609 = vpop.f32.mrb[0].mxu0
        %1610 = vmatprep.mubr.f32.mxu0 0.0
        %1611 = vmatmul.mubr.f32.gmra.mrb[0].mxu0 %v1533
        %v1612 = vpop.f32.mrb[0].mxu0
        %v1613 = vadd.f32 0.0, %v1612
        %v1614 = vpop.f32.mrb[0].mxu0
        %1615 = vmatprep.mubr.f32.mxu0 0.0
        %1616 = vmatmul.mubr.f32.gmra.mrb[0].mxu0 %v1536
        %v1617 = vpop.f32.mrb[0].mxu0
        %v1618 = vadd.f32 0.0, %v1617
        %v1619 = vpop.f32.mrb[0].mxu0
        %1620 = vmatprep.mubr.f32.mxu0 0.0
        %1621 = vmatmul.mubr.f32.gmra.mrb[0].mxu0 %v1539
        %v1622 = vpop.f32.mrb[0].mxu0
        %v1623 = vadd.f32 0.0, %v1622
        %v1624 = vpop.f32.mrb[0].mxu0
        %1625 = vdwg.mxu0
        %s1626 = scalar_lea.vmem [#allocation4], 768
        %v1627 = vld [vmem:[%s1626] sm:$0xff]
        %v1628 = vld [vmem:[%s1626 + $0x8] sm:$0xff]
        %v1629 = vld [vmem:[%s1626 + $0x10] sm:$0xff]
        %v1630 = vld [vmem:[%s1626 + $0x18] sm:$0xff]
        %v1631 = vld [vmem:[%s1626 + $0x20] sm:$0xff]
        %v1632 = vld [vmem:[%s1626 + $0x28] sm:$0xff]
        %v1633 = vld [vmem:[%s1626 + $0x30] sm:$0xff]
        %v1634 = vld [vmem:[%s1626 + $0x38] sm:$0xff]
        %v1635 = vld [vmem:[%s1626 + $0x40] sm:$0xff]
        %v1636 = vld [vmem:[%s1626 + $0x48] sm:$0xff]
        %v1637 = vld [vmem:[%s1626 + $0x50] sm:$0xff]
        %v1638 = vld [vmem:[%s1626 + $0x58] sm:$0xff]
        %v1639 = vld [vmem:[%s1626 + $0x60] sm:$0xff]
        %v1640 = vld [vmem:[%s1626 + $0x68] sm:$0xff]
        %v1641 = vld [vmem:[%s1626 + $0x70] sm:$0xff]
        %v1642 = vld [vmem:[%s1626 + $0x78] sm:$0xff]
        %s1643 = scalar_lea.vmem [#allocation2], 224
        %v1644 = vld [vmem:[%s1643] sm:$0xff]
        %v1645 = vld [vmem:[%s1643 + $0x8] sm:$0xff]
        %v1646 = vld [vmem:[%s1643 + $0x10] sm:$0xff]
        %v1647 = vld [vmem:[%s1643 + $0x18] sm:$0xff]
        %v1649 = vsel %vm250, %v1644, 0
        %v1652 = vsel %vm250, %v1645, 0
        %v1655 = vsel %vm250, %v1646, 0
        %v1658 = vsel %vm250, %v1647, 0
        %1660 = vmatprep.subr.mxu0 0.0
        %1661 = vmatpush1.msra.mxu0 %v1520
        %1662 = vmatprep.subr.mxu0 0.0
        %1663 = vmatpush1.msra.mxu0 %v1521
        %1664 = vmatprep.subr.mxu0 0.0
        %1665 = vmatpush1.msra.mxu0 %v1522
        %1666 = vmatprep.subr.mxu0 0.0
        %1667 = vmatpush1.msra.mxu0 %v1523
        %1668 = vmatprep.subr.mxu0 0.0
        %1669 = vmatpush1.msra.mxu0 0.0
        %1670 = vmatprep.subr.mxu0 0.0
        %1671 = vmatpush1.msra.mxu0 0.0
        %1672 = vmatprep.subr.mxu0 0.0
        %1673 = vmatpush1.msra.mxu0 0.0
        %1674 = vmatprep.subr.mxu0 0.0
        %1675 = vmatpush1.msra.mxu0 0.0
        %1676 = vmatprep.subr.mxu0 0.0
        %1677 = vmatpush1.msra.mxu0 0.0
        %1678 = vmatprep.subr.mxu0 0.0
        %1679 = vmatpush1.msra.mxu0 0.0
        %1680 = vmatprep.subr.mxu0 0.0
        %1681 = vmatpush1.msra.mxu0 0.0
        %1682 = vmatprep.subr.mxu0 0.0
        %1683 = vmatpush1.msra.mxu0 0.0
        %1684 = vmatprep.subr.mxu0 0.0
        %1685 = vmatpush1.msra.mxu0 0.0
        %1686 = vmatprep.subr.mxu0 0.0
        %1687 = vmatpush1.msra.mxu0 0.0
        %1688 = vmatprep.subr.mxu0 0.0
        %1689 = vmatpush1.msra.mxu0 0.0
        %1690 = vmatprep.subr.mxu0 0.0
        %1691 = vmatpush1.msra.mxu0 0.0
        %1692 = vmatprep.subr.mxu0 0.0
        %1693 = vmatpush1.msra.mxu0 0.0
        %1694 = vmatprep.subr.mxu0 0.0
        %1695 = vmatpush1.msra.mxu0 0.0
        %1696 = vmatprep.subr.mxu0 0.0
        %1697 = vmatpush1.msra.mxu0 0.0
        %1698 = vmatprep.subr.mxu0 0.0
        %1699 = vmatpush1.msra.mxu0 0.0
        %1700 = vmatprep.subr.mxu0 0.0
        %1701 = vmatpush1.msra.mxu0 0.0
        %1702 = vmatprep.subr.mxu0 0.0
        %1703 = vmatpush1.msra.mxu0 0.0
        %1704 = vmatprep.subr.mxu0 0.0
        %1705 = vmatpush1.msra.mxu0 0.0
        %1706 = vmatprep.subr.mxu0 0.0
        %1707 = vmatpush1.msra.mxu0 0.0
        %1708 = vmatprep.subr.mxu0 0.0
        %1709 = vmatpush1.msra.mxu0 0.0
        %1710 = vmatprep.subr.mxu0 0.0
        %1711 = vmatpush1.msra.mxu0 0.0
        %1712 = vmatprep.subr.mxu0 0.0
        %1713 = vmatpush1.msra.mxu0 0.0
        %1714 = vmatprep.subr.mxu0 0.0
        %1715 = vmatpush1.msra.mxu0 0.0
        %1716 = vmatprep.subr.mxu0 0.0
        %1717 = vmatpush1.msra.mxu0 0.0
        %1718 = vmatprep.subr.mxu0 0.0
        %1719 = vmatpush1.msra.mxu0 0.0
        %1720 = vmatprep.subr.mxu0 0.0
        %1721 = vmatpush1.msra.mxu0 0.0
        %1722 = vmatprep.subr.mxu0 0.0
        %1723 = vmatpush1.msra.mxu0 0.0
        %1724 = vmatprep.mubr.f32.mxu0 0.0
        %1725 = vmatmul.mubr.f32.gmra.mrb[0].mxu0 %v1649
        %v1726 = vpop.f32.mrb[0].mxu0
        %v1727 = vadd.f32 0.0, %v1726
        %v1728 = vpop.f32.mrb[0].mxu0
        %1729 = vmatprep.mubr.f32.mxu0 0.0
        %1730 = vmatmul.mubr.f32.gmra.mrb[0].mxu0 %v1652
        %v1731 = vpop.f32.mrb[0].mxu0
        %v1732 = vadd.f32 0.0, %v1731
        %v1733 = vpop.f32.mrb[0].mxu0
        %1734 = vmatprep.mubr.f32.mxu0 0.0
        %1735 = vmatmul.mubr.f32.gmra.mrb[0].mxu0 %v1655
        %v1736 = vpop.f32.mrb[0].mxu0
        %v1737 = vadd.f32 0.0, %v1736
        %v1738 = vpop.f32.mrb[0].mxu0
        %1739 = vmatprep.mubr.f32.mxu0 0.0
        %1740 = vmatmul.mubr.f32.gmra.mrb[0].mxu0 %v1658
        %v1741 = vpop.f32.mrb[0].mxu0
        %v1742 = vadd.f32 0.0, %v1741
        %v1743 = vpop.f32.mrb[0].mxu0
        %1744 = vdwg.mxu0
        %s1745 = scalar_lea.vmem [#allocation4], 896
        %v1746 = vld [vmem:[%s1745] sm:$0xff]
        %v1747 = vld [vmem:[%s1745 + $0x8] sm:$0xff]
        %v1748 = vld [vmem:[%s1745 + $0x10] sm:$0xff]
        %v1749 = vld [vmem:[%s1745 + $0x18] sm:$0xff]
        %v1750 = vld [vmem:[%s1745 + $0x20] sm:$0xff]
        %v1751 = vld [vmem:[%s1745 + $0x28] sm:$0xff]
        %v1752 = vld [vmem:[%s1745 + $0x30] sm:$0xff]
        %v1753 = vld [vmem:[%s1745 + $0x38] sm:$0xff]
        %v1754 = vld [vmem:[%s1745 + $0x40] sm:$0xff]
        %v1755 = vld [vmem:[%s1745 + $0x48] sm:$0xff]
        %v1756 = vld [vmem:[%s1745 + $0x50] sm:$0xff]
        %v1757 = vld [vmem:[%s1745 + $0x58] sm:$0xff]
        %v1758 = vld [vmem:[%s1745 + $0x60] sm:$0xff]
        %v1759 = vld [vmem:[%s1745 + $0x68] sm:$0xff]
        %v1760 = vld [vmem:[%s1745 + $0x70] sm:$0xff]
        %v1761 = vld [vmem:[%s1745 + $0x78] sm:$0xff]
        %1762 = vmatprep.subr.mxu0 0.0
        %1763 = vmatpush1.msra.mxu0 %v1746
        %1764 = vmatprep.subr.mxu0 0.0
        %1765 = vmatpush1.msra.mxu0 %v1747
        %1766 = vmatprep.subr.mxu0 0.0
        %1767 = vmatpush1.msra.mxu0 %v1748
        %1768 = vmatprep.subr.mxu0 0.0
        %1769 = vmatpush1.msra.mxu0 %v1749
        %1770 = vmatprep.subr.mxu0 0.0
        %1771 = vmatpush1.msra.mxu0 %v1750
        %1772 = vmatprep.subr.mxu0 0.0
        %1773 = vmatpush1.msra.mxu0 %v1751
        %1774 = vmatprep.subr.mxu0 0.0
        %1775 = vmatpush1.msra.mxu0 %v1752
        %1776 = vmatprep.subr.mxu0 0.0
        %1777 = vmatpush1.msra.mxu0 %v1753
        %1778 = vmatprep.subr.mxu0 0.0
        %1779 = vmatpush1.msra.mxu0 %v1754
        %1780 = vmatprep.subr.mxu0 0.0
        %1781 = vmatpush1.msra.mxu0 %v1755
        %1782 = vmatprep.subr.mxu0 0.0
        %1783 = vmatpush1.msra.mxu0 %v1756
        %1784 = vmatprep.subr.mxu0 0.0
        %1785 = vmatpush1.msra.mxu0 %v1757
        %1786 = vmatprep.subr.mxu0 0.0
        %1787 = vmatpush1.msra.mxu0 %v1758
        %1788 = vmatprep.subr.mxu0 0.0
        %1789 = vmatpush1.msra.mxu0 %v1759
        %1790 = vmatprep.subr.mxu0 0.0
        %1791 = vmatpush1.msra.mxu0 %v1760
        %1792 = vmatprep.subr.mxu0 0.0
        %1793 = vmatpush1.msra.mxu0 %v1761
        %1794 = vmatprep.subr.mxu0 0.0
        %1795 = vmatpush1.msra.mxu0 0.0
        %1796 = vmatprep.subr.mxu0 0.0
        %1797 = vmatpush1.msra.mxu0 0.0
        %1798 = vmatprep.subr.mxu0 0.0
        %1799 = vmatpush1.msra.mxu0 0.0
        %1800 = vmatprep.subr.mxu0 0.0
        %1801 = vmatpush1.msra.mxu0 0.0
        %1802 = vmatprep.subr.mxu0 0.0
        %1803 = vmatpush1.msra.mxu0 0.0
        %1804 = vmatprep.subr.mxu0 0.0
        %1805 = vmatpush1.msra.mxu0 0.0
        %1806 = vmatprep.subr.mxu0 0.0
        %1807 = vmatpush1.msra.mxu0 0.0
        %1808 = vmatprep.subr.mxu0 0.0
        %1809 = vmatpush1.msra.mxu0 0.0
        %1810 = vmatprep.subr.mxu0 0.0
        %1811 = vmatpush1.msra.mxu0 0.0
        %1812 = vmatprep.subr.mxu0 0.0
        %1813 = vmatpush1.msra.mxu0 0.0
        %1814 = vmatprep.subr.mxu0 0.0
        %1815 = vmatpush1.msra.mxu0 0.0
        %1816 = vmatprep.subr.mxu0 0.0
        %1817 = vmatpush1.msra.mxu0 0.0
        %1818 = vmatprep.subr.mxu0 0.0
        %1819 = vmatpush1.msra.mxu0 0.0
        %1820 = vmatprep.subr.mxu0 0.0
        %1821 = vmatpush1.msra.mxu0 0.0
        %1822 = vmatprep.subr.mxu0 0.0
        %1823 = vmatpush1.msra.mxu0 0.0
        %1824 = vmatprep.subr.mxu0 0.0
        %1825 = vmatpush1.msra.mxu0 0.0
        %1826 = vmatprep.mubr.f32.mxu0 0.0
        %1827 = vmatmul.mubr.f32.gmra.mrb[0].mxu0 %v1727
        %v1828 = vpop.f32.mrb[0].mxu0
        %v1829 = vadd.f32 0.0, %v1828
        %v1830 = vpop.f32.mrb[0].mxu0
        %1831 = vmatprep.mubr.f32.mxu0 0.0
        %1832 = vmatmul.mubr.f32.gmra.mrb[0].mxu0 %v1732
        %v1833 = vpop.f32.mrb[0].mxu0
        %v1834 = vadd.f32 0.0, %v1833
        %v1835 = vpop.f32.mrb[0].mxu0
        %1836 = vmatprep.mubr.f32.mxu0 0.0
        %1837 = vmatmul.mubr.f32.gmra.mrb[0].mxu0 %v1737
        %v1838 = vpop.f32.mrb[0].mxu0
        %v1839 = vadd.f32 0.0, %v1838
        %v1840 = vpop.f32.mrb[0].mxu0
        %1841 = vmatprep.mubr.f32.mxu0 0.0
        %1842 = vmatmul.mubr.f32.gmra.mrb[0].mxu0 %v1742
        %v1843 = vpop.f32.mrb[0].mxu0
        %v1844 = vadd.f32 0.0, %v1843
        %v1845 = vpop.f32.mrb[0].mxu0
        %1846 = vdwg.mxu0
        %1847 = vmatprep.subr.mxu0 0.0
        %1848 = vmatpush1.msra.mxu0 %v1627
        %1849 = vmatprep.subr.mxu0 0.0
        %1850 = vmatpush1.msra.mxu0 %v1628
        %1851 = vmatprep.subr.mxu0 0.0
        %1852 = vmatpush1.msra.mxu0 %v1629
        %1853 = vmatprep.subr.mxu0 0.0
        %1854 = vmatpush1.msra.mxu0 %v1630
        %1855 = vmatprep.subr.mxu0 0.0
        %1856 = vmatpush1.msra.mxu0 %v1631
        %1857 = vmatprep.subr.mxu0 0.0
        %1858 = vmatpush1.msra.mxu0 %v1632
        %1859 = vmatprep.subr.mxu0 0.0
        %1860 = vmatpush1.msra.mxu0 %v1633
        %1861 = vmatprep.subr.mxu0 0.0
        %1862 = vmatpush1.msra.mxu0 %v1634
        %1863 = vmatprep.subr.mxu0 0.0
        %1864 = vmatpush1.msra.mxu0 %v1635
        %1865 = vmatprep.subr.mxu0 0.0
        %1866 = vmatpush1.msra.mxu0 %v1636
        %1867 = vmatprep.subr.mxu0 0.0
        %1868 = vmatpush1.msra.mxu0 %v1637
        %1869 = vmatprep.subr.mxu0 0.0
        %1870 = vmatpush1.msra.mxu0 %v1638
        %1871 = vmatprep.subr.mxu0 0.0
        %1872 = vmatpush1.msra.mxu0 %v1639
        %1873 = vmatprep.subr.mxu0 0.0
        %1874 = vmatpush1.msra.mxu0 %v1640
        %1875 = vmatprep.subr.mxu0 0.0
        %1876 = vmatpush1.msra.mxu0 %v1641
        %1877 = vmatprep.subr.mxu0 0.0
        %1878 = vmatpush1.msra.mxu0 %v1642
        %1879 = vmatprep.subr.mxu0 0.0
        %1880 = vmatpush1.msra.mxu0 0.0
        %1881 = vmatprep.subr.mxu0 0.0
        %1882 = vmatpush1.msra.mxu0 0.0
        %1883 = vmatprep.subr.mxu0 0.0
        %1884 = vmatpush1.msra.mxu0 0.0
        %1885 = vmatprep.subr.mxu0 0.0
        %1886 = vmatpush1.msra.mxu0 0.0
        %1887 = vmatprep.subr.mxu0 0.0
        %1888 = vmatpush1.msra.mxu0 0.0
        %1889 = vmatprep.subr.mxu0 0.0
        %1890 = vmatpush1.msra.mxu0 0.0
        %1891 = vmatprep.subr.mxu0 0.0
        %1892 = vmatpush1.msra.mxu0 0.0
        %1893 = vmatprep.subr.mxu0 0.0
        %1894 = vmatpush1.msra.mxu0 0.0
        %1895 = vmatprep.subr.mxu0 0.0
        %1896 = vmatpush1.msra.mxu0 0.0
        %1897 = vmatprep.subr.mxu0 0.0
        %1898 = vmatpush1.msra.mxu0 0.0
        %1899 = vmatprep.subr.mxu0 0.0
        %1900 = vmatpush1.msra.mxu0 0.0
        %1901 = vmatprep.subr.mxu0 0.0
        %1902 = vmatpush1.msra.mxu0 0.0
        %1903 = vmatprep.subr.mxu0 0.0
        %1904 = vmatpush1.msra.mxu0 0.0
        %1905 = vmatprep.subr.mxu0 0.0
        %1906 = vmatpush1.msra.mxu0 0.0
        %1907 = vmatprep.subr.mxu0 0.0
        %1908 = vmatpush1.msra.mxu0 0.0
        %1909 = vmatprep.subr.mxu0 0.0
        %1910 = vmatpush1.msra.mxu0 0.0
        %1911 = vmatprep.mubr.f32.mxu0 0.0
        %1912 = vmatmul.mubr.f32.gmra.mrb[0].mxu0 %v1608
        %v1913 = vpop.f32.mrb[0].mxu0
        %v1914 = vadd.f32 %v1829, %v1913
        %v1915 = vpop.f32.mrb[0].mxu0
        %1916 = vmatprep.mubr.f32.mxu0 0.0
        %1917 = vmatmul.mubr.f32.gmra.mrb[0].mxu0 %v1613
        %v1918 = vpop.f32.mrb[0].mxu0
        %v1919 = vadd.f32 %v1834, %v1918
        %v1920 = vpop.f32.mrb[0].mxu0
        %1921 = vmatprep.mubr.f32.mxu0 0.0
        %1922 = vmatmul.mubr.f32.gmra.mrb[0].mxu0 %v1618
        %v1923 = vpop.f32.mrb[0].mxu0
        %v1924 = vadd.f32 %v1839, %v1923
        %v1925 = vpop.f32.mrb[0].mxu0
        %1926 = vmatprep.mubr.f32.mxu0 0.0
        %1927 = vmatmul.mubr.f32.gmra.mrb[0].mxu0 %v1623
        %v1928 = vpop.f32.mrb[0].mxu0
        %v1929 = vadd.f32 %v1844, %v1928
        %v1930 = vpop.f32.mrb[0].mxu0
        %1931 = vdwg.mxu0
        %s1932 = scalar_lea.vmem [#allocation2], 256
        %v1933 = vld [vmem:[%s1932] sm:$0xff]
        %v1934 = vld [vmem:[%s1932 + $0x8] sm:$0xff]
        %v1935 = vld [vmem:[%s1932 + $0x10] sm:$0xff]
        %v1936 = vld [vmem:[%s1932 + $0x18] sm:$0xff]
        %v1938 = vsel %vm250, %v1933, 0
        %v1941 = vsel %vm250, %v1934, 0
        %v1944 = vsel %vm250, %v1935, 0
        %v1947 = vsel %vm250, %v1936, 0
        %1949 = vmatprep.subr.mxu0 0.0
        %1950 = vmatpush1.msra.mxu0 %v1520
        %1951 = vmatprep.subr.mxu0 0.0
        %1952 = vmatpush1.msra.mxu0 %v1521
        %1953 = vmatprep.subr.mxu0 0.0
        %1954 = vmatpush1.msra.mxu0 %v1522
        %1955 = vmatprep.subr.mxu0 0.0
        %1956 = vmatpush1.msra.mxu0 %v1523
        %1957 = vmatprep.subr.mxu0 0.0
        %1958 = vmatpush1.msra.mxu0 0.0
        %1959 = vmatprep.subr.mxu0 0.0
        %1960 = vmatpush1.msra.mxu0 0.0
        %1961 = vmatprep.subr.mxu0 0.0
        %1962 = vmatpush1.msra.mxu0 0.0
        %1963 = vmatprep.subr.mxu0 0.0
        %1964 = vmatpush1.msra.mxu0 0.0
        %1965 = vmatprep.subr.mxu0 0.0
        %1966 = vmatpush1.msra.mxu0 0.0
        %1967 = vmatprep.subr.mxu0 0.0
        %1968 = vmatpush1.msra.mxu0 0.0
        %1969 = vmatprep.subr.mxu0 0.0
        %1970 = vmatpush1.msra.mxu0 0.0
        %1971 = vmatprep.subr.mxu0 0.0
        %1972 = vmatpush1.msra.mxu0 0.0
        %1973 = vmatprep.subr.mxu0 0.0
        %1974 = vmatpush1.msra.mxu0 0.0
        %1975 = vmatprep.subr.mxu0 0.0
        %1976 = vmatpush1.msra.mxu0 0.0
        %1977 = vmatprep.subr.mxu0 0.0
        %1978 = vmatpush1.msra.mxu0 0.0
        %1979 = vmatprep.subr.mxu0 0.0
        %1980 = vmatpush1.msra.mxu0 0.0
        %1981 = vmatprep.subr.mxu0 0.0
        %1982 = vmatpush1.msra.mxu0 0.0
        %1983 = vmatprep.subr.mxu0 0.0
        %1984 = vmatpush1.msra.mxu0 0.0
        %1985 = vmatprep.subr.mxu0 0.0
        %1986 = vmatpush1.msra.mxu0 0.0
        %1987 = vmatprep.subr.mxu0 0.0
        %1988 = vmatpush1.msra.mxu0 0.0
        %1989 = vmatprep.subr.mxu0 0.0
        %1990 = vmatpush1.msra.mxu0 0.0
        %1991 = vmatprep.subr.mxu0 0.0
        %1992 = vmatpush1.msra.mxu0 0.0
        %1993 = vmatprep.subr.mxu0 0.0
        %1994 = vmatpush1.msra.mxu0 0.0
        %1995 = vmatprep.subr.mxu0 0.0
        %1996 = vmatpush1.msra.mxu0 0.0
        %1997 = vmatprep.subr.mxu0 0.0
        %1998 = vmatpush1.msra.mxu0 0.0
        %1999 = vmatprep.subr.mxu0 0.0
        %2000 = vmatpush1.msra.mxu0 0.0
        %2001 = vmatprep.subr.mxu0 0.0
        %2002 = vmatpush1.msra.mxu0 0.0
        %2003 = vmatprep.subr.mxu0 0.0
        %2004 = vmatpush1.msra.mxu0 0.0
        %2005 = vmatprep.subr.mxu0 0.0
        %2006 = vmatpush1.msra.mxu0 0.0
        %2007 = vmatprep.subr.mxu0 0.0
        %2008 = vmatpush1.msra.mxu0 0.0
        %2009 = vmatprep.subr.mxu0 0.0
        %2010 = vmatpush1.msra.mxu0 0.0
        %2011 = vmatprep.subr.mxu0 0.0
        %2012 = vmatpush1.msra.mxu0 0.0
        %2013 = vmatprep.mubr.f32.mxu0 0.0
        %2014 = vmatmul.mubr.f32.gmra.mrb[0].mxu0 %v1938
        %v2015 = vpop.f32.mrb[0].mxu0
        %v2016 = vadd.f32 0.0, %v2015
        %v2017 = vpop.f32.mrb[0].mxu0
        %2018 = vmatprep.mubr.f32.mxu0 0.0
        %2019 = vmatmul.mubr.f32.gmra.mrb[0].mxu0 %v1941
        %v2020 = vpop.f32.mrb[0].mxu0
        %v2021 = vadd.f32 0.0, %v2020
        %v2022 = vpop.f32.mrb[0].mxu0
        %2023 = vmatprep.mubr.f32.mxu0 0.0
        %2024 = vmatmul.mubr.f32.gmra.mrb[0].mxu0 %v1944
        %v2025 = vpop.f32.mrb[0].mxu0
        %v2026 = vadd.f32 0.0, %v2025
        %v2027 = vpop.f32.mrb[0].mxu0
        %2028 = vmatprep.mubr.f32.mxu0 0.0
        %2029 = vmatmul.mubr.f32.gmra.mrb[0].mxu0 %v1947
        %v2030 = vpop.f32.mrb[0].mxu0
        %v2031 = vadd.f32 0.0, %v2030
        %v2032 = vpop.f32.mrb[0].mxu0
        %2033 = vdwg.mxu0
        %s2034 = scalar_lea.vmem [#allocation4], 1024
        %v2035 = vld [vmem:[%s2034] sm:$0xff]
        %v2036 = vld [vmem:[%s2034 + $0x8] sm:$0xff]
        %v2037 = vld [vmem:[%s2034 + $0x10] sm:$0xff]
        %v2038 = vld [vmem:[%s2034 + $0x18] sm:$0xff]
        %v2039 = vld [vmem:[%s2034 + $0x20] sm:$0xff]
        %v2040 = vld [vmem:[%s2034 + $0x28] sm:$0xff]
        %v2041 = vld [vmem:[%s2034 + $0x30] sm:$0xff]
        %v2042 = vld [vmem:[%s2034 + $0x38] sm:$0xff]
        %v2043 = vld [vmem:[%s2034 + $0x40] sm:$0xff]
        %v2044 = vld [vmem:[%s2034 + $0x48] sm:$0xff]
        %v2045 = vld [vmem:[%s2034 + $0x50] sm:$0xff]
        %v2046 = vld [vmem:[%s2034 + $0x58] sm:$0xff]
        %v2047 = vld [vmem:[%s2034 + $0x60] sm:$0xff]
        %v2048 = vld [vmem:[%s2034 + $0x68] sm:$0xff]
        %v2049 = vld [vmem:[%s2034 + $0x70] sm:$0xff]
        %v2050 = vld [vmem:[%s2034 + $0x78] sm:$0xff]
        %2051 = vmatprep.subr.mxu0 0.0
        %2052 = vmatpush1.msra.mxu0 %v2035
        %2053 = vmatprep.subr.mxu0 0.0
        %2054 = vmatpush1.msra.mxu0 %v2036
        %2055 = vmatprep.subr.mxu0 0.0
        %2056 = vmatpush1.msra.mxu0 %v2037
        %2057 = vmatprep.subr.mxu0 0.0
        %2058 = vmatpush1.msra.mxu0 %v2038
        %2059 = vmatprep.subr.mxu0 0.0
        %2060 = vmatpush1.msra.mxu0 %v2039
        %2061 = vmatprep.subr.mxu0 0.0
        %2062 = vmatpush1.msra.mxu0 %v2040
        %2063 = vmatprep.subr.mxu0 0.0
        %2064 = vmatpush1.msra.mxu0 %v2041
        %2065 = vmatprep.subr.mxu0 0.0
        %2066 = vmatpush1.msra.mxu0 %v2042
        %2067 = vmatprep.subr.mxu0 0.0
        %2068 = vmatpush1.msra.mxu0 %v2043
        %2069 = vmatprep.subr.mxu0 0.0
        %2070 = vmatpush1.msra.mxu0 %v2044
        %2071 = vmatprep.subr.mxu0 0.0
        %2072 = vmatpush1.msra.mxu0 %v2045
        %2073 = vmatprep.subr.mxu0 0.0
        %2074 = vmatpush1.msra.mxu0 %v2046
        %2075 = vmatprep.subr.mxu0 0.0
        %2076 = vmatpush1.msra.mxu0 %v2047
        %2077 = vmatprep.subr.mxu0 0.0
        %2078 = vmatpush1.msra.mxu0 %v2048
        %2079 = vmatprep.subr.mxu0 0.0
        %2080 = vmatpush1.msra.mxu0 %v2049
        %2081 = vmatprep.subr.mxu0 0.0
        %2082 = vmatpush1.msra.mxu0 %v2050
        %2083 = vmatprep.subr.mxu0 0.0
        %2084 = vmatpush1.msra.mxu0 0.0
        %2085 = vmatprep.subr.mxu0 0.0
        %2086 = vmatpush1.msra.mxu0 0.0
        %2087 = vmatprep.subr.mxu0 0.0
        %2088 = vmatpush1.msra.mxu0 0.0
        %2089 = vmatprep.subr.mxu0 0.0
        %2090 = vmatpush1.msra.mxu0 0.0
        %2091 = vmatprep.subr.mxu0 0.0
        %2092 = vmatpush1.msra.mxu0 0.0
        %2093 = vmatprep.subr.mxu0 0.0
        %2094 = vmatpush1.msra.mxu0 0.0
        %2095 = vmatprep.subr.mxu0 0.0
        %2096 = vmatpush1.msra.mxu0 0.0
        %2097 = vmatprep.subr.mxu0 0.0
        %2098 = vmatpush1.msra.mxu0 0.0
        %2099 = vmatprep.subr.mxu0 0.0
        %2100 = vmatpush1.msra.mxu0 0.0
        %2101 = vmatprep.subr.mxu0 0.0
        %2102 = vmatpush1.msra.mxu0 0.0
        %2103 = vmatprep.subr.mxu0 0.0
        %2104 = vmatpush1.msra.mxu0 0.0
        %2105 = vmatprep.subr.mxu0 0.0
        %2106 = vmatpush1.msra.mxu0 0.0
        %2107 = vmatprep.subr.mxu0 0.0
        %2108 = vmatpush1.msra.mxu0 0.0
        %2109 = vmatprep.subr.mxu0 0.0
        %2110 = vmatpush1.msra.mxu0 0.0
        %2111 = vmatprep.subr.mxu0 0.0
        %2112 = vmatpush1.msra.mxu0 0.0
        %2113 = vmatprep.subr.mxu0 0.0
        %2114 = vmatpush1.msra.mxu0 0.0
        %2115 = vmatprep.mubr.f32.mxu0 0.0
        %2116 = vmatmul.mubr.f32.gmra.mrb[0].mxu0 %v2016
        %v2117 = vpop.f32.mrb[0].mxu0
        %v2118 = vadd.f32 0.0, %v2117
        %v2119 = vpop.f32.mrb[0].mxu0
        %2120 = vmatprep.mubr.f32.mxu0 0.0
        %2121 = vmatmul.mubr.f32.gmra.mrb[0].mxu0 %v2021
        %v2122 = vpop.f32.mrb[0].mxu0
        %v2123 = vadd.f32 0.0, %v2122
        %v2124 = vpop.f32.mrb[0].mxu0
        %2125 = vmatprep.mubr.f32.mxu0 0.0
        %2126 = vmatmul.mubr.f32.gmra.mrb[0].mxu0 %v2026
        %v2127 = vpop.f32.mrb[0].mxu0
        %v2128 = vadd.f32 0.0, %v2127
        %v2129 = vpop.f32.mrb[0].mxu0
        %2130 = vmatprep.mubr.f32.mxu0 0.0
        %2131 = vmatmul.mubr.f32.gmra.mrb[0].mxu0 %v2031
        %v2132 = vpop.f32.mrb[0].mxu0
        %v2133 = vadd.f32 0.0, %v2132
        %v2134 = vpop.f32.mrb[0].mxu0
        %2135 = vdwg.mxu0
        %v2136 = vadd.f32 %v1914, %v2118
        %v2137 = vadd.f32 %v1919, %v2123
        %v2138 = vadd.f32 %v1924, %v2128
        %v2139 = vadd.f32 %v1929, %v2133
        %s2140 = scalar_lea.vmem [#allocation6], 2
        %v2141 = vld [vmem:[%s2140] sm:$0x1]
        %v2143 = vlaneseq
        %v2144 = vshrl.u32 %v2143, 7
        %v2145 = vsub.s32 0, %v2144
        %v2146 = vrot.slane %v2141, %v2145
        %v2148 = vadd.f32 %v2136, %v2146
        %v2149 = vadd.f32 %v2137, %v2146
        %v2150 = vadd.f32 %v2138, %v2146
        %v2151 = vadd.f32 %v2139, %v2146
        %vm2152 = vcmp.gt.f32.partialorder %v2148, 0.0
        %vm2153 = vcmp.gt.f32.partialorder %v2149, 0.0
        %vm2154 = vcmp.gt.f32.partialorder %v2150, 0.0
        %vm2155 = vcmp.gt.f32.partialorder %v2151, 0.0
        %v2156 = vmul.f32 %v2148, 0.01
        %v2157 = vmul.f32 %v2149, 0.01
        %v2158 = vmul.f32 %v2150, 0.01
        %v2159 = vmul.f32 %v2151, 0.01
        %v2160 = vsel %vm2152, %v2148, %v2156
        %v2161 = vsel %vm2153, %v2149, %v2157
        %v2162 = vsel %vm2154, %v2150, %v2158
        %v2163 = vsel %vm2155, %v2151, %v2159
        %s2164 = scalar_lea.vmem [#allocation2], 288
        %v2165 = vld [vmem:[%s2164] sm:$0xff]
        %v2166 = vld [vmem:[%s2164 + $0x8] sm:$0xff]
        %v2167 = vld [vmem:[%s2164 + $0x10] sm:$0xff]
        %v2168 = vld [vmem:[%s2164 + $0x18] sm:$0xff]
        %v2170 = vsel %vm250, %v2165, 0
        %v2173 = vsel %vm250, %v2166, 0
        %v2176 = vsel %vm250, %v2167, 0
        %v2179 = vsel %vm250, %v2168, 0
        %2181 = vmatprep.subr.mxu0 0.0
        %2182 = vmatpush1.msra.mxu0 %v2160
        %2183 = vmatprep.subr.mxu0 0.0
        %2184 = vmatpush1.msra.mxu0 %v2161
        %2185 = vmatprep.subr.mxu0 0.0
        %2186 = vmatpush1.msra.mxu0 %v2162
        %2187 = vmatprep.subr.mxu0 0.0
        %2188 = vmatpush1.msra.mxu0 %v2163
        %2189 = vmatprep.subr.mxu0 0.0
        %2190 = vmatpush1.msra.mxu0 0.0
        %2191 = vmatprep.subr.mxu0 0.0
        %2192 = vmatpush1.msra.mxu0 0.0
        %2193 = vmatprep.subr.mxu0 0.0
        %2194 = vmatpush1.msra.mxu0 0.0
        %2195 = vmatprep.subr.mxu0 0.0
        %2196 = vmatpush1.msra.mxu0 0.0
        %2197 = vmatprep.subr.mxu0 0.0
        %2198 = vmatpush1.msra.mxu0 0.0
        %2199 = vmatprep.subr.mxu0 0.0
        %2200 = vmatpush1.msra.mxu0 0.0
        %2201 = vmatprep.subr.mxu0 0.0
        %2202 = vmatpush1.msra.mxu0 0.0
        %2203 = vmatprep.subr.mxu0 0.0
        %2204 = vmatpush1.msra.mxu0 0.0
        %2205 = vmatprep.subr.mxu0 0.0
        %2206 = vmatpush1.msra.mxu0 0.0
        %2207 = vmatprep.subr.mxu0 0.0
        %2208 = vmatpush1.msra.mxu0 0.0
        %2209 = vmatprep.subr.mxu0 0.0
        %2210 = vmatpush1.msra.mxu0 0.0
        %2211 = vmatprep.subr.mxu0 0.0
        %2212 = vmatpush1.msra.mxu0 0.0
        %2213 = vmatprep.subr.mxu0 0.0
        %2214 = vmatpush1.msra.mxu0 0.0
        %2215 = vmatprep.subr.mxu0 0.0
        %2216 = vmatpush1.msra.mxu0 0.0
        %2217 = vmatprep.subr.mxu0 0.0
        %2218 = vmatpush1.msra.mxu0 0.0
        %2219 = vmatprep.subr.mxu0 0.0
        %2220 = vmatpush1.msra.mxu0 0.0
        %2221 = vmatprep.subr.mxu0 0.0
        %2222 = vmatpush1.msra.mxu0 0.0
        %2223 = vmatprep.subr.mxu0 0.0
        %2224 = vmatpush1.msra.mxu0 0.0
        %2225 = vmatprep.subr.mxu0 0.0
        %2226 = vmatpush1.msra.mxu0 0.0
        %2227 = vmatprep.subr.mxu0 0.0
        %2228 = vmatpush1.msra.mxu0 0.0
        %2229 = vmatprep.subr.mxu0 0.0
        %2230 = vmatpush1.msra.mxu0 0.0
        %2231 = vmatprep.subr.mxu0 0.0
        %2232 = vmatpush1.msra.mxu0 0.0
        %2233 = vmatprep.subr.mxu0 0.0
        %2234 = vmatpush1.msra.mxu0 0.0
        %2235 = vmatprep.subr.mxu0 0.0
        %2236 = vmatpush1.msra.mxu0 0.0
        %2237 = vmatprep.subr.mxu0 0.0
        %2238 = vmatpush1.msra.mxu0 0.0
        %2239 = vmatprep.subr.mxu0 0.0
        %2240 = vmatpush1.msra.mxu0 0.0
        %2241 = vmatprep.subr.mxu0 0.0
        %2242 = vmatpush1.msra.mxu0 0.0
        %2243 = vmatprep.subr.mxu0 0.0
        %2244 = vmatpush1.msra.mxu0 0.0
        %2245 = vmatprep.mubr.f32.mxu0 0.0
        %2246 = vmatmul.mubr.f32.gmra.mrb[0].mxu0 %v2170
        %v2247 = vpop.f32.mrb[0].mxu0
        %v2248 = vadd.f32 0.0, %v2247
        %v2249 = vpop.f32.mrb[0].mxu0
        %2250 = vmatprep.mubr.f32.mxu0 0.0
        %2251 = vmatmul.mubr.f32.gmra.mrb[0].mxu0 %v2173
        %v2252 = vpop.f32.mrb[0].mxu0
        %v2253 = vadd.f32 0.0, %v2252
        %v2254 = vpop.f32.mrb[0].mxu0
        %2255 = vmatprep.mubr.f32.mxu0 0.0
        %2256 = vmatmul.mubr.f32.gmra.mrb[0].mxu0 %v2176
        %v2257 = vpop.f32.mrb[0].mxu0
        %v2258 = vadd.f32 0.0, %v2257
        %v2259 = vpop.f32.mrb[0].mxu0
        %2260 = vmatprep.mubr.f32.mxu0 0.0
        %2261 = vmatmul.mubr.f32.gmra.mrb[0].mxu0 %v2179
        %v2262 = vpop.f32.mrb[0].mxu0
        %v2263 = vadd.f32 0.0, %v2262
        %v2264 = vpop.f32.mrb[0].mxu0
        %2265 = vdwg.mxu0
        %s2266 = scalar_lea.vmem [#allocation4], 1152
        %v2267 = vld [vmem:[%s2266] sm:$0xff]
        %v2268 = vld [vmem:[%s2266 + $0x8] sm:$0xff]
        %v2269 = vld [vmem:[%s2266 + $0x10] sm:$0xff]
        %v2270 = vld [vmem:[%s2266 + $0x18] sm:$0xff]
        %v2271 = vld [vmem:[%s2266 + $0x20] sm:$0xff]
        %v2272 = vld [vmem:[%s2266 + $0x28] sm:$0xff]
        %v2273 = vld [vmem:[%s2266 + $0x30] sm:$0xff]
        %v2274 = vld [vmem:[%s2266 + $0x38] sm:$0xff]
        %v2275 = vld [vmem:[%s2266 + $0x40] sm:$0xff]
        %v2276 = vld [vmem:[%s2266 + $0x48] sm:$0xff]
        %v2277 = vld [vmem:[%s2266 + $0x50] sm:$0xff]
        %v2278 = vld [vmem:[%s2266 + $0x58] sm:$0xff]
        %v2279 = vld [vmem:[%s2266 + $0x60] sm:$0xff]
        %v2280 = vld [vmem:[%s2266 + $0x68] sm:$0xff]
        %v2281 = vld [vmem:[%s2266 + $0x70] sm:$0xff]
        %v2282 = vld [vmem:[%s2266 + $0x78] sm:$0xff]
        %s2283 = scalar_lea.vmem [#allocation2], 320
        %v2284 = vld [vmem:[%s2283] sm:$0xff]
        %v2285 = vld [vmem:[%s2283 + $0x8] sm:$0xff]
        %v2286 = vld [vmem:[%s2283 + $0x10] sm:$0xff]
        %v2287 = vld [vmem:[%s2283 + $0x18] sm:$0xff]
        %v2289 = vsel %vm250, %v2284, 0
        %v2292 = vsel %vm250, %v2285, 0
        %v2295 = vsel %vm250, %v2286, 0
        %v2298 = vsel %vm250, %v2287, 0
        %2300 = vmatprep.subr.mxu0 0.0
        %2301 = vmatpush1.msra.mxu0 %v2160
        %2302 = vmatprep.subr.mxu0 0.0
        %2303 = vmatpush1.msra.mxu0 %v2161
        %2304 = vmatprep.subr.mxu0 0.0
        %2305 = vmatpush1.msra.mxu0 %v2162
        %2306 = vmatprep.subr.mxu0 0.0
        %2307 = vmatpush1.msra.mxu0 %v2163
        %2308 = vmatprep.subr.mxu0 0.0
        %2309 = vmatpush1.msra.mxu0 0.0
        %2310 = vmatprep.subr.mxu0 0.0
        %2311 = vmatpush1.msra.mxu0 0.0
        %2312 = vmatprep.subr.mxu0 0.0
        %2313 = vmatpush1.msra.mxu0 0.0
        %2314 = vmatprep.subr.mxu0 0.0
        %2315 = vmatpush1.msra.mxu0 0.0
        %2316 = vmatprep.subr.mxu0 0.0
        %2317 = vmatpush1.msra.mxu0 0.0
        %2318 = vmatprep.subr.mxu0 0.0
        %2319 = vmatpush1.msra.mxu0 0.0
        %2320 = vmatprep.subr.mxu0 0.0
        %2321 = vmatpush1.msra.mxu0 0.0
        %2322 = vmatprep.subr.mxu0 0.0
        %2323 = vmatpush1.msra.mxu0 0.0
        %2324 = vmatprep.subr.mxu0 0.0
        %2325 = vmatpush1.msra.mxu0 0.0
        %2326 = vmatprep.subr.mxu0 0.0
        %2327 = vmatpush1.msra.mxu0 0.0
        %2328 = vmatprep.subr.mxu0 0.0
        %2329 = vmatpush1.msra.mxu0 0.0
        %2330 = vmatprep.subr.mxu0 0.0
        %2331 = vmatpush1.msra.mxu0 0.0
        %2332 = vmatprep.subr.mxu0 0.0
        %2333 = vmatpush1.msra.mxu0 0.0
        %2334 = vmatprep.subr.mxu0 0.0
        %2335 = vmatpush1.msra.mxu0 0.0
        %2336 = vmatprep.subr.mxu0 0.0
        %2337 = vmatpush1.msra.mxu0 0.0
        %2338 = vmatprep.subr.mxu0 0.0
        %2339 = vmatpush1.msra.mxu0 0.0
        %2340 = vmatprep.subr.mxu0 0.0
        %2341 = vmatpush1.msra.mxu0 0.0
        %2342 = vmatprep.subr.mxu0 0.0
        %2343 = vmatpush1.msra.mxu0 0.0
        %2344 = vmatprep.subr.mxu0 0.0
        %2345 = vmatpush1.msra.mxu0 0.0
        %2346 = vmatprep.subr.mxu0 0.0
        %2347 = vmatpush1.msra.mxu0 0.0
        %2348 = vmatprep.subr.mxu0 0.0
        %2349 = vmatpush1.msra.mxu0 0.0
        %2350 = vmatprep.subr.mxu0 0.0
        %2351 = vmatpush1.msra.mxu0 0.0
        %2352 = vmatprep.subr.mxu0 0.0
        %2353 = vmatpush1.msra.mxu0 0.0
        %2354 = vmatprep.subr.mxu0 0.0
        %2355 = vmatpush1.msra.mxu0 0.0
        %2356 = vmatprep.subr.mxu0 0.0
        %2357 = vmatpush1.msra.mxu0 0.0
        %2358 = vmatprep.subr.mxu0 0.0
        %2359 = vmatpush1.msra.mxu0 0.0
        %2360 = vmatprep.subr.mxu0 0.0
        %2361 = vmatpush1.msra.mxu0 0.0
        %2362 = vmatprep.subr.mxu0 0.0
        %2363 = vmatpush1.msra.mxu0 0.0
        %2364 = vmatprep.mubr.f32.mxu0 0.0
        %2365 = vmatmul.mubr.f32.gmra.mrb[0].mxu0 %v2289
        %v2366 = vpop.f32.mrb[0].mxu0
        %v2367 = vadd.f32 0.0, %v2366
        %v2368 = vpop.f32.mrb[0].mxu0
        %2369 = vmatprep.mubr.f32.mxu0 0.0
        %2370 = vmatmul.mubr.f32.gmra.mrb[0].mxu0 %v2292
        %v2371 = vpop.f32.mrb[0].mxu0
        %v2372 = vadd.f32 0.0, %v2371
        %v2373 = vpop.f32.mrb[0].mxu0
        %2374 = vmatprep.mubr.f32.mxu0 0.0
        %2375 = vmatmul.mubr.f32.gmra.mrb[0].mxu0 %v2295
        %v2376 = vpop.f32.mrb[0].mxu0
        %v2377 = vadd.f32 0.0, %v2376
        %v2378 = vpop.f32.mrb[0].mxu0
        %2379 = vmatprep.mubr.f32.mxu0 0.0
        %2380 = vmatmul.mubr.f32.gmra.mrb[0].mxu0 %v2298
        %v2381 = vpop.f32.mrb[0].mxu0
        %v2382 = vadd.f32 0.0, %v2381
        %v2383 = vpop.f32.mrb[0].mxu0
        %2384 = vdwg.mxu0
        %s2385 = scalar_lea.vmem [#allocation4], 1280
        %v2386 = vld [vmem:[%s2385] sm:$0xff]
        %v2387 = vld [vmem:[%s2385 + $0x8] sm:$0xff]
        %v2388 = vld [vmem:[%s2385 + $0x10] sm:$0xff]
        %v2389 = vld [vmem:[%s2385 + $0x18] sm:$0xff]
        %v2390 = vld [vmem:[%s2385 + $0x20] sm:$0xff]
        %v2391 = vld [vmem:[%s2385 + $0x28] sm:$0xff]
        %v2392 = vld [vmem:[%s2385 + $0x30] sm:$0xff]
        %v2393 = vld [vmem:[%s2385 + $0x38] sm:$0xff]
        %v2394 = vld [vmem:[%s2385 + $0x40] sm:$0xff]
        %v2395 = vld [vmem:[%s2385 + $0x48] sm:$0xff]
        %v2396 = vld [vmem:[%s2385 + $0x50] sm:$0xff]
        %v2397 = vld [vmem:[%s2385 + $0x58] sm:$0xff]
        %v2398 = vld [vmem:[%s2385 + $0x60] sm:$0xff]
        %v2399 = vld [vmem:[%s2385 + $0x68] sm:$0xff]
        %v2400 = vld [vmem:[%s2385 + $0x70] sm:$0xff]
        %v2401 = vld [vmem:[%s2385 + $0x78] sm:$0xff]
        %2402 = vmatprep.subr.mxu0 0.0
        %2403 = vmatpush1.msra.mxu0 %v2386
        %2404 = vmatprep.subr.mxu0 0.0
        %2405 = vmatpush1.msra.mxu0 %v2387
        %2406 = vmatprep.subr.mxu0 0.0
        %2407 = vmatpush1.msra.mxu0 %v2388
        %2408 = vmatprep.subr.mxu0 0.0
        %2409 = vmatpush1.msra.mxu0 %v2389
        %2410 = vmatprep.subr.mxu0 0.0
        %2411 = vmatpush1.msra.mxu0 %v2390
        %2412 = vmatprep.subr.mxu0 0.0
        %2413 = vmatpush1.msra.mxu0 %v2391
        %2414 = vmatprep.subr.mxu0 0.0
        %2415 = vmatpush1.msra.mxu0 %v2392
        %2416 = vmatprep.subr.mxu0 0.0
        %2417 = vmatpush1.msra.mxu0 %v2393
        %2418 = vmatprep.subr.mxu0 0.0
        %2419 = vmatpush1.msra.mxu0 %v2394
        %2420 = vmatprep.subr.mxu0 0.0
        %2421 = vmatpush1.msra.mxu0 %v2395
        %2422 = vmatprep.subr.mxu0 0.0
        %2423 = vmatpush1.msra.mxu0 %v2396
        %2424 = vmatprep.subr.mxu0 0.0
        %2425 = vmatpush1.msra.mxu0 %v2397
        %2426 = vmatprep.subr.mxu0 0.0
        %2427 = vmatpush1.msra.mxu0 %v2398
        %2428 = vmatprep.subr.mxu0 0.0
        %2429 = vmatpush1.msra.mxu0 %v2399
        %2430 = vmatprep.subr.mxu0 0.0
        %2431 = vmatpush1.msra.mxu0 %v2400
        %2432 = vmatprep.subr.mxu0 0.0
        %2433 = vmatpush1.msra.mxu0 %v2401
        %2434 = vmatprep.subr.mxu0 0.0
        %2435 = vmatpush1.msra.mxu0 0.0
        %2436 = vmatprep.subr.mxu0 0.0
        %2437 = vmatpush1.msra.mxu0 0.0
        %2438 = vmatprep.subr.mxu0 0.0
        %2439 = vmatpush1.msra.mxu0 0.0
        %2440 = vmatprep.subr.mxu0 0.0
        %2441 = vmatpush1.msra.mxu0 0.0
        %2442 = vmatprep.subr.mxu0 0.0
        %2443 = vmatpush1.msra.mxu0 0.0
        %2444 = vmatprep.subr.mxu0 0.0
        %2445 = vmatpush1.msra.mxu0 0.0
        %2446 = vmatprep.subr.mxu0 0.0
        %2447 = vmatpush1.msra.mxu0 0.0
        %2448 = vmatprep.subr.mxu0 0.0
        %2449 = vmatpush1.msra.mxu0 0.0
        %2450 = vmatprep.subr.mxu0 0.0
        %2451 = vmatpush1.msra.mxu0 0.0
        %2452 = vmatprep.subr.mxu0 0.0
        %2453 = vmatpush1.msra.mxu0 0.0
        %2454 = vmatprep.subr.mxu0 0.0
        %2455 = vmatpush1.msra.mxu0 0.0
        %2456 = vmatprep.subr.mxu0 0.0
        %2457 = vmatpush1.msra.mxu0 0.0
        %2458 = vmatprep.subr.mxu0 0.0
        %2459 = vmatpush1.msra.mxu0 0.0
        %2460 = vmatprep.subr.mxu0 0.0
        %2461 = vmatpush1.msra.mxu0 0.0
        %2462 = vmatprep.subr.mxu0 0.0
        %2463 = vmatpush1.msra.mxu0 0.0
        %2464 = vmatprep.subr.mxu0 0.0
        %2465 = vmatpush1.msra.mxu0 0.0
        %2466 = vmatprep.mubr.f32.mxu0 0.0
        %2467 = vmatmul.mubr.f32.gmra.mrb[0].mxu0 %v2367
        %v2468 = vpop.f32.mrb[0].mxu0
        %v2469 = vadd.f32 0.0, %v2468
        %v2470 = vpop.f32.mrb[0].mxu0
        %2471 = vmatprep.mubr.f32.mxu0 0.0
        %2472 = vmatmul.mubr.f32.gmra.mrb[0].mxu0 %v2372
        %v2473 = vpop.f32.mrb[0].mxu0
        %v2474 = vadd.f32 0.0, %v2473
        %v2475 = vpop.f32.mrb[0].mxu0
        %2476 = vmatprep.mubr.f32.mxu0 0.0
        %2477 = vmatmul.mubr.f32.gmra.mrb[0].mxu0 %v2377
        %v2478 = vpop.f32.mrb[0].mxu0
        %v2479 = vadd.f32 0.0, %v2478
        %v2480 = vpop.f32.mrb[0].mxu0
        %2481 = vmatprep.mubr.f32.mxu0 0.0
        %2482 = vmatmul.mubr.f32.gmra.mrb[0].mxu0 %v2382
        %v2483 = vpop.f32.mrb[0].mxu0
        %v2484 = vadd.f32 0.0, %v2483
        %v2485 = vpop.f32.mrb[0].mxu0
        %2486 = vdwg.mxu0
        %2487 = vmatprep.subr.mxu0 0.0
        %2488 = vmatpush1.msra.mxu0 %v2267
        %2489 = vmatprep.subr.mxu0 0.0
        %2490 = vmatpush1.msra.mxu0 %v2268
        %2491 = vmatprep.subr.mxu0 0.0
        %2492 = vmatpush1.msra.mxu0 %v2269
        %2493 = vmatprep.subr.mxu0 0.0
        %2494 = vmatpush1.msra.mxu0 %v2270
        %2495 = vmatprep.subr.mxu0 0.0
        %2496 = vmatpush1.msra.mxu0 %v2271
        %2497 = vmatprep.subr.mxu0 0.0
        %2498 = vmatpush1.msra.mxu0 %v2272
        %2499 = vmatprep.subr.mxu0 0.0
        %2500 = vmatpush1.msra.mxu0 %v2273
        %2501 = vmatprep.subr.mxu0 0.0
        %2502 = vmatpush1.msra.mxu0 %v2274
        %2503 = vmatprep.subr.mxu0 0.0
        %2504 = vmatpush1.msra.mxu0 %v2275
        %2505 = vmatprep.subr.mxu0 0.0
        %2506 = vmatpush1.msra.mxu0 %v2276
        %2507 = vmatprep.subr.mxu0 0.0
        %2508 = vmatpush1.msra.mxu0 %v2277
        %2509 = vmatprep.subr.mxu0 0.0
        %2510 = vmatpush1.msra.mxu0 %v2278
        %2511 = vmatprep.subr.mxu0 0.0
        %2512 = vmatpush1.msra.mxu0 %v2279
        %2513 = vmatprep.subr.mxu0 0.0
        %2514 = vmatpush1.msra.mxu0 %v2280
        %2515 = vmatprep.subr.mxu0 0.0
        %2516 = vmatpush1.msra.mxu0 %v2281
        %2517 = vmatprep.subr.mxu0 0.0
        %2518 = vmatpush1.msra.mxu0 %v2282
        %2519 = vmatprep.subr.mxu0 0.0
        %2520 = vmatpush1.msra.mxu0 0.0
        %2521 = vmatprep.subr.mxu0 0.0
        %2522 = vmatpush1.msra.mxu0 0.0
        %2523 = vmatprep.subr.mxu0 0.0
        %2524 = vmatpush1.msra.mxu0 0.0
        %2525 = vmatprep.subr.mxu0 0.0
        %2526 = vmatpush1.msra.mxu0 0.0
        %2527 = vmatprep.subr.mxu0 0.0
        %2528 = vmatpush1.msra.mxu0 0.0
        %2529 = vmatprep.subr.mxu0 0.0
        %2530 = vmatpush1.msra.mxu0 0.0
        %2531 = vmatprep.subr.mxu0 0.0
        %2532 = vmatpush1.msra.mxu0 0.0
        %2533 = vmatprep.subr.mxu0 0.0
        %2534 = vmatpush1.msra.mxu0 0.0
        %2535 = vmatprep.subr.mxu0 0.0
        %2536 = vmatpush1.msra.mxu0 0.0
        %2537 = vmatprep.subr.mxu0 0.0
        %2538 = vmatpush1.msra.mxu0 0.0
        %2539 = vmatprep.subr.mxu0 0.0
        %2540 = vmatpush1.msra.mxu0 0.0
        %2541 = vmatprep.subr.mxu0 0.0
        %2542 = vmatpush1.msra.mxu0 0.0
        %2543 = vmatprep.subr.mxu0 0.0
        %2544 = vmatpush1.msra.mxu0 0.0
        %2545 = vmatprep.subr.mxu0 0.0
        %2546 = vmatpush1.msra.mxu0 0.0
        %2547 = vmatprep.subr.mxu0 0.0
        %2548 = vmatpush1.msra.mxu0 0.0
        %2549 = vmatprep.subr.mxu0 0.0
        %2550 = vmatpush1.msra.mxu0 0.0
        %2551 = vmatprep.mubr.f32.mxu0 0.0
        %2552 = vmatmul.mubr.f32.gmra.mrb[0].mxu0 %v2248
        %v2553 = vpop.f32.mrb[0].mxu0
        %v2554 = vadd.f32 %v2469, %v2553
        %v2555 = vpop.f32.mrb[0].mxu0
        %2556 = vmatprep.mubr.f32.mxu0 0.0
        %2557 = vmatmul.mubr.f32.gmra.mrb[0].mxu0 %v2253
        %v2558 = vpop.f32.mrb[0].mxu0
        %v2559 = vadd.f32 %v2474, %v2558
        %v2560 = vpop.f32.mrb[0].mxu0
        %2561 = vmatprep.mubr.f32.mxu0 0.0
        %2562 = vmatmul.mubr.f32.gmra.mrb[0].mxu0 %v2258
        %v2563 = vpop.f32.mrb[0].mxu0
        %v2564 = vadd.f32 %v2479, %v2563
        %v2565 = vpop.f32.mrb[0].mxu0
        %2566 = vmatprep.mubr.f32.mxu0 0.0
        %2567 = vmatmul.mubr.f32.gmra.mrb[0].mxu0 %v2263
        %v2568 = vpop.f32.mrb[0].mxu0
        %v2569 = vadd.f32 %v2484, %v2568
        %v2570 = vpop.f32.mrb[0].mxu0
        %2571 = vdwg.mxu0
        %s2572 = scalar_lea.vmem [#allocation2], 352
        %v2573 = vld [vmem:[%s2572] sm:$0xff]
        %v2574 = vld [vmem:[%s2572 + $0x8] sm:$0xff]
        %v2575 = vld [vmem:[%s2572 + $0x10] sm:$0xff]
        %v2576 = vld [vmem:[%s2572 + $0x18] sm:$0xff]
        %v2578 = vsel %vm250, %v2573, 0
        %v2581 = vsel %vm250, %v2574, 0
        %v2584 = vsel %vm250, %v2575, 0
        %v2587 = vsel %vm250, %v2576, 0
        %2589 = vmatprep.subr.mxu0 0.0
        %2590 = vmatpush1.msra.mxu0 %v2160
        %2591 = vmatprep.subr.mxu0 0.0
        %2592 = vmatpush1.msra.mxu0 %v2161
        %2593 = vmatprep.subr.mxu0 0.0
        %2594 = vmatpush1.msra.mxu0 %v2162
        %2595 = vmatprep.subr.mxu0 0.0
        %2596 = vmatpush1.msra.mxu0 %v2163
        %2597 = vmatprep.subr.mxu0 0.0
        %2598 = vmatpush1.msra.mxu0 0.0
        %2599 = vmatprep.subr.mxu0 0.0
        %2600 = vmatpush1.msra.mxu0 0.0
        %2601 = vmatprep.subr.mxu0 0.0
        %2602 = vmatpush1.msra.mxu0 0.0
        %2603 = vmatprep.subr.mxu0 0.0
        %2604 = vmatpush1.msra.mxu0 0.0
        %2605 = vmatprep.subr.mxu0 0.0
        %2606 = vmatpush1.msra.mxu0 0.0
        %2607 = vmatprep.subr.mxu0 0.0
        %2608 = vmatpush1.msra.mxu0 0.0
        %2609 = vmatprep.subr.mxu0 0.0
        %2610 = vmatpush1.msra.mxu0 0.0
        %2611 = vmatprep.subr.mxu0 0.0
        %2612 = vmatpush1.msra.mxu0 0.0
        %2613 = vmatprep.subr.mxu0 0.0
        %2614 = vmatpush1.msra.mxu0 0.0
        %2615 = vmatprep.subr.mxu0 0.0
        %2616 = vmatpush1.msra.mxu0 0.0
        %2617 = vmatprep.subr.mxu0 0.0
        %2618 = vmatpush1.msra.mxu0 0.0
        %2619 = vmatprep.subr.mxu0 0.0
        %2620 = vmatpush1.msra.mxu0 0.0
        %2621 = vmatprep.subr.mxu0 0.0
        %2622 = vmatpush1.msra.mxu0 0.0
        %2623 = vmatprep.subr.mxu0 0.0
        %2624 = vmatpush1.msra.mxu0 0.0
        %2625 = vmatprep.subr.mxu0 0.0
        %2626 = vmatpush1.msra.mxu0 0.0
        %2627 = vmatprep.subr.mxu0 0.0
        %2628 = vmatpush1.msra.mxu0 0.0
        %2629 = vmatprep.subr.mxu0 0.0
        %2630 = vmatpush1.msra.mxu0 0.0
        %2631 = vmatprep.subr.mxu0 0.0
        %2632 = vmatpush1.msra.mxu0 0.0
        %2633 = vmatprep.subr.mxu0 0.0
        %2634 = vmatpush1.msra.mxu0 0.0
        %2635 = vmatprep.subr.mxu0 0.0
        %2636 = vmatpush1.msra.mxu0 0.0
        %2637 = vmatprep.subr.mxu0 0.0
        %2638 = vmatpush1.msra.mxu0 0.0
        %2639 = vmatprep.subr.mxu0 0.0
        %2640 = vmatpush1.msra.mxu0 0.0
        %2641 = vmatprep.subr.mxu0 0.0
        %2642 = vmatpush1.msra.mxu0 0.0
        %2643 = vmatprep.subr.mxu0 0.0
        %2644 = vmatpush1.msra.mxu0 0.0
        %2645 = vmatprep.subr.mxu0 0.0
        %2646 = vmatpush1.msra.mxu0 0.0
        %2647 = vmatprep.subr.mxu0 0.0
        %2648 = vmatpush1.msra.mxu0 0.0
        %2649 = vmatprep.subr.mxu0 0.0
        %2650 = vmatpush1.msra.mxu0 0.0
        %2651 = vmatprep.subr.mxu0 0.0
        %2652 = vmatpush1.msra.mxu0 0.0
        %2653 = vmatprep.mubr.f32.mxu0 0.0
        %2654 = vmatmul.mubr.f32.gmra.mrb[0].mxu0 %v2578
        %v2655 = vpop.f32.mrb[0].mxu0
        %v2656 = vadd.f32 0.0, %v2655
        %v2657 = vpop.f32.mrb[0].mxu0
        %2658 = vmatprep.mubr.f32.mxu0 0.0
        %2659 = vmatmul.mubr.f32.gmra.mrb[0].mxu0 %v2581
        %v2660 = vpop.f32.mrb[0].mxu0
        %v2661 = vadd.f32 0.0, %v2660
        %v2662 = vpop.f32.mrb[0].mxu0
        %2663 = vmatprep.mubr.f32.mxu0 0.0
        %2664 = vmatmul.mubr.f32.gmra.mrb[0].mxu0 %v2584
        %v2665 = vpop.f32.mrb[0].mxu0
        %v2666 = vadd.f32 0.0, %v2665
        %v2667 = vpop.f32.mrb[0].mxu0
        %2668 = vmatprep.mubr.f32.mxu0 0.0
        %2669 = vmatmul.mubr.f32.gmra.mrb[0].mxu0 %v2587
        %v2670 = vpop.f32.mrb[0].mxu0
        %v2671 = vadd.f32 0.0, %v2670
        %v2672 = vpop.f32.mrb[0].mxu0
        %2673 = vdwg.mxu0
        %s2674 = scalar_lea.vmem [#allocation4], 1408
        %v2675 = vld [vmem:[%s2674] sm:$0xff]
        %v2676 = vld [vmem:[%s2674 + $0x8] sm:$0xff]
        %v2677 = vld [vmem:[%s2674 + $0x10] sm:$0xff]
        %v2678 = vld [vmem:[%s2674 + $0x18] sm:$0xff]
        %v2679 = vld [vmem:[%s2674 + $0x20] sm:$0xff]
        %v2680 = vld [vmem:[%s2674 + $0x28] sm:$0xff]
        %v2681 = vld [vmem:[%s2674 + $0x30] sm:$0xff]
        %v2682 = vld [vmem:[%s2674 + $0x38] sm:$0xff]
        %v2683 = vld [vmem:[%s2674 + $0x40] sm:$0xff]
        %v2684 = vld [vmem:[%s2674 + $0x48] sm:$0xff]
        %v2685 = vld [vmem:[%s2674 + $0x50] sm:$0xff]
        %v2686 = vld [vmem:[%s2674 + $0x58] sm:$0xff]
        %v2687 = vld [vmem:[%s2674 + $0x60] sm:$0xff]
        %v2688 = vld [vmem:[%s2674 + $0x68] sm:$0xff]
        %v2689 = vld [vmem:[%s2674 + $0x70] sm:$0xff]
        %v2690 = vld [vmem:[%s2674 + $0x78] sm:$0xff]
        %2691 = vmatprep.subr.mxu0 0.0
        %2692 = vmatpush1.msra.mxu0 %v2675
        %2693 = vmatprep.subr.mxu0 0.0
        %2694 = vmatpush1.msra.mxu0 %v2676
        %2695 = vmatprep.subr.mxu0 0.0
        %2696 = vmatpush1.msra.mxu0 %v2677
        %2697 = vmatprep.subr.mxu0 0.0
        %2698 = vmatpush1.msra.mxu0 %v2678
        %2699 = vmatprep.subr.mxu0 0.0
        %2700 = vmatpush1.msra.mxu0 %v2679
        %2701 = vmatprep.subr.mxu0 0.0
        %2702 = vmatpush1.msra.mxu0 %v2680
        %2703 = vmatprep.subr.mxu0 0.0
        %2704 = vmatpush1.msra.mxu0 %v2681
        %2705 = vmatprep.subr.mxu0 0.0
        %2706 = vmatpush1.msra.mxu0 %v2682
        %2707 = vmatprep.subr.mxu0 0.0
        %2708 = vmatpush1.msra.mxu0 %v2683
        %2709 = vmatprep.subr.mxu0 0.0
        %2710 = vmatpush1.msra.mxu0 %v2684
        %2711 = vmatprep.subr.mxu0 0.0
        %2712 = vmatpush1.msra.mxu0 %v2685
        %2713 = vmatprep.subr.mxu0 0.0
        %2714 = vmatpush1.msra.mxu0 %v2686
        %2715 = vmatprep.subr.mxu0 0.0
        %2716 = vmatpush1.msra.mxu0 %v2687
        %2717 = vmatprep.subr.mxu0 0.0
        %2718 = vmatpush1.msra.mxu0 %v2688
        %2719 = vmatprep.subr.mxu0 0.0
        %2720 = vmatpush1.msra.mxu0 %v2689
        %2721 = vmatprep.subr.mxu0 0.0
        %2722 = vmatpush1.msra.mxu0 %v2690
        %2723 = vmatprep.subr.mxu0 0.0
        %2724 = vmatpush1.msra.mxu0 0.0
        %2725 = vmatprep.subr.mxu0 0.0
        %2726 = vmatpush1.msra.mxu0 0.0
        %2727 = vmatprep.subr.mxu0 0.0
        %2728 = vmatpush1.msra.mxu0 0.0
        %2729 = vmatprep.subr.mxu0 0.0
        %2730 = vmatpush1.msra.mxu0 0.0
        %2731 = vmatprep.subr.mxu0 0.0
        %2732 = vmatpush1.msra.mxu0 0.0
        %2733 = vmatprep.subr.mxu0 0.0
        %2734 = vmatpush1.msra.mxu0 0.0
        %2735 = vmatprep.subr.mxu0 0.0
        %2736 = vmatpush1.msra.mxu0 0.0
        %2737 = vmatprep.subr.mxu0 0.0
        %2738 = vmatpush1.msra.mxu0 0.0
        %2739 = vmatprep.subr.mxu0 0.0
        %2740 = vmatpush1.msra.mxu0 0.0
        %2741 = vmatprep.subr.mxu0 0.0
        %2742 = vmatpush1.msra.mxu0 0.0
        %2743 = vmatprep.subr.mxu0 0.0
        %2744 = vmatpush1.msra.mxu0 0.0
        %2745 = vmatprep.subr.mxu0 0.0
        %2746 = vmatpush1.msra.mxu0 0.0
        %2747 = vmatprep.subr.mxu0 0.0
        %2748 = vmatpush1.msra.mxu0 0.0
        %2749 = vmatprep.subr.mxu0 0.0
        %2750 = vmatpush1.msra.mxu0 0.0
        %2751 = vmatprep.subr.mxu0 0.0
        %2752 = vmatpush1.msra.mxu0 0.0
        %2753 = vmatprep.subr.mxu0 0.0
        %2754 = vmatpush1.msra.mxu0 0.0
        %2755 = vmatprep.mubr.f32.mxu0 0.0
        %2756 = vmatmul.mubr.f32.gmra.mrb[0].mxu0 %v2656
        %v2757 = vpop.f32.mrb[0].mxu0
        %v2758 = vadd.f32 0.0, %v2757
        %v2759 = vpop.f32.mrb[0].mxu0
        %2760 = vmatprep.mubr.f32.mxu0 0.0
        %2761 = vmatmul.mubr.f32.gmra.mrb[0].mxu0 %v2661
        %v2762 = vpop.f32.mrb[0].mxu0
        %v2763 = vadd.f32 0.0, %v2762
        %v2764 = vpop.f32.mrb[0].mxu0
        %2765 = vmatprep.mubr.f32.mxu0 0.0
        %2766 = vmatmul.mubr.f32.gmra.mrb[0].mxu0 %v2666
        %v2767 = vpop.f32.mrb[0].mxu0
        %v2768 = vadd.f32 0.0, %v2767
        %v2769 = vpop.f32.mrb[0].mxu0
        %2770 = vmatprep.mubr.f32.mxu0 0.0
        %2771 = vmatmul.mubr.f32.gmra.mrb[0].mxu0 %v2671
        %v2772 = vpop.f32.mrb[0].mxu0
        %v2773 = vadd.f32 0.0, %v2772
        %v2774 = vpop.f32.mrb[0].mxu0
        %2775 = vdwg.mxu0
        %v2776 = vadd.f32 %v2554, %v2758
        %v2777 = vadd.f32 %v2559, %v2763
        %v2778 = vadd.f32 %v2564, %v2768
        %v2779 = vadd.f32 %v2569, %v2773
        %s2780 = scalar_lea.vmem [#allocation6], 3
        %v2781 = vld [vmem:[%s2780] sm:$0x1]
        %v2783 = vlaneseq
        %v2784 = vshrl.u32 %v2783, 7
        %v2785 = vsub.s32 0, %v2784
        %v2786 = vrot.slane %v2781, %v2785
        %v2788 = vadd.f32 %v2776, %v2786
        %v2789 = vadd.f32 %v2777, %v2786
        %v2790 = vadd.f32 %v2778, %v2786
        %v2791 = vadd.f32 %v2779, %v2786
        %vm2792 = vcmp.gt.f32.partialorder %v2788, 0.0
        %vm2793 = vcmp.gt.f32.partialorder %v2789, 0.0
        %vm2794 = vcmp.gt.f32.partialorder %v2790, 0.0
        %vm2795 = vcmp.gt.f32.partialorder %v2791, 0.0
        %v2796 = vmul.f32 %v2788, 0.01
        %v2797 = vmul.f32 %v2789, 0.01
        %v2798 = vmul.f32 %v2790, 0.01
        %v2799 = vmul.f32 %v2791, 0.01
        %v2800 = vsel %vm2792, %v2788, %v2796
        %v2801 = vsel %vm2793, %v2789, %v2797
        %v2802 = vsel %vm2794, %v2790, %v2798
        %v2803 = vsel %vm2795, %v2791, %v2799
        %s2804 = scalar_lea.vmem [#allocation2], 384
        %v2805 = vld [vmem:[%s2804] sm:$0xff]
        %v2806 = vld [vmem:[%s2804 + $0x8] sm:$0xff]
        %v2807 = vld [vmem:[%s2804 + $0x10] sm:$0xff]
        %v2808 = vld [vmem:[%s2804 + $0x18] sm:$0xff]
        %v2810 = vsel %vm250, %v2805, 0
        %v2813 = vsel %vm250, %v2806, 0
        %v2816 = vsel %vm250, %v2807, 0
        %v2819 = vsel %vm250, %v2808, 0
        %2821 = vmatprep.subr.mxu0 0.0
        %2822 = vmatpush1.msra.mxu0 %v2800
        %2823 = vmatprep.subr.mxu0 0.0
        %2824 = vmatpush1.msra.mxu0 %v2801
        %2825 = vmatprep.subr.mxu0 0.0
        %2826 = vmatpush1.msra.mxu0 %v2802
        %2827 = vmatprep.subr.mxu0 0.0
        %2828 = vmatpush1.msra.mxu0 %v2803
        %2829 = vmatprep.subr.mxu0 0.0
        %2830 = vmatpush1.msra.mxu0 0.0
        %2831 = vmatprep.subr.mxu0 0.0
        %2832 = vmatpush1.msra.mxu0 0.0
        %2833 = vmatprep.subr.mxu0 0.0
        %2834 = vmatpush1.msra.mxu0 0.0
        %2835 = vmatprep.subr.mxu0 0.0
        %2836 = vmatpush1.msra.mxu0 0.0
        %2837 = vmatprep.subr.mxu0 0.0
        %2838 = vmatpush1.msra.mxu0 0.0
        %2839 = vmatprep.subr.mxu0 0.0
        %2840 = vmatpush1.msra.mxu0 0.0
        %2841 = vmatprep.subr.mxu0 0.0
        %2842 = vmatpush1.msra.mxu0 0.0
        %2843 = vmatprep.subr.mxu0 0.0
        %2844 = vmatpush1.msra.mxu0 0.0
        %2845 = vmatprep.subr.mxu0 0.0
        %2846 = vmatpush1.msra.mxu0 0.0
        %2847 = vmatprep.subr.mxu0 0.0
        %2848 = vmatpush1.msra.mxu0 0.0
        %2849 = vmatprep.subr.mxu0 0.0
        %2850 = vmatpush1.msra.mxu0 0.0
        %2851 = vmatprep.subr.mxu0 0.0
        %2852 = vmatpush1.msra.mxu0 0.0
        %2853 = vmatprep.subr.mxu0 0.0
        %2854 = vmatpush1.msra.mxu0 0.0
        %2855 = vmatprep.subr.mxu0 0.0
        %2856 = vmatpush1.msra.mxu0 0.0
        %2857 = vmatprep.subr.mxu0 0.0
        %2858 = vmatpush1.msra.mxu0 0.0
        %2859 = vmatprep.subr.mxu0 0.0
        %2860 = vmatpush1.msra.mxu0 0.0
        %2861 = vmatprep.subr.mxu0 0.0
        %2862 = vmatpush1.msra.mxu0 0.0
        %2863 = vmatprep.subr.mxu0 0.0
        %2864 = vmatpush1.msra.mxu0 0.0
        %2865 = vmatprep.subr.mxu0 0.0
        %2866 = vmatpush1.msra.mxu0 0.0
        %2867 = vmatprep.subr.mxu0 0.0
        %2868 = vmatpush1.msra.mxu0 0.0
        %2869 = vmatprep.subr.mxu0 0.0
        %2870 = vmatpush1.msra.mxu0 0.0
        %2871 = vmatprep.subr.mxu0 0.0
        %2872 = vmatpush1.msra.mxu0 0.0
        %2873 = vmatprep.subr.mxu0 0.0
        %2874 = vmatpush1.msra.mxu0 0.0
        %2875 = vmatprep.subr.mxu0 0.0
        %2876 = vmatpush1.msra.mxu0 0.0
        %2877 = vmatprep.subr.mxu0 0.0
        %2878 = vmatpush1.msra.mxu0 0.0
        %2879 = vmatprep.subr.mxu0 0.0
        %2880 = vmatpush1.msra.mxu0 0.0
        %2881 = vmatprep.subr.mxu0 0.0
        %2882 = vmatpush1.msra.mxu0 0.0
        %2883 = vmatprep.subr.mxu0 0.0
        %2884 = vmatpush1.msra.mxu0 0.0
        %2885 = vmatprep.mubr.f32.mxu0 0.0
        %2886 = vmatmul.mubr.f32.gmra.mrb[0].mxu0 %v2810
        %v2887 = vpop.f32.mrb[0].mxu0
        %v2888 = vadd.f32 0.0, %v2887
        %v2889 = vpop.f32.mrb[0].mxu0
        %2890 = vmatprep.mubr.f32.mxu0 0.0
        %2891 = vmatmul.mubr.f32.gmra.mrb[0].mxu0 %v2813
        %v2892 = vpop.f32.mrb[0].mxu0
        %v2893 = vadd.f32 0.0, %v2892
        %v2894 = vpop.f32.mrb[0].mxu0
        %2895 = vmatprep.mubr.f32.mxu0 0.0
        %2896 = vmatmul.mubr.f32.gmra.mrb[0].mxu0 %v2816
        %v2897 = vpop.f32.mrb[0].mxu0
        %v2898 = vadd.f32 0.0, %v2897
        %v2899 = vpop.f32.mrb[0].mxu0
        %2900 = vmatprep.mubr.f32.mxu0 0.0
        %2901 = vmatmul.mubr.f32.gmra.mrb[0].mxu0 %v2819
        %v2902 = vpop.f32.mrb[0].mxu0
        %v2903 = vadd.f32 0.0, %v2902
        %v2904 = vpop.f32.mrb[0].mxu0
        %2905 = vdwg.mxu0
        %s2906 = scalar_lea.vmem [#allocation4], 1536
        %v2907 = vld [vmem:[%s2906] sm:$0xff]
        %v2908 = vld [vmem:[%s2906 + $0x8] sm:$0xff]
        %v2909 = vld [vmem:[%s2906 + $0x10] sm:$0xff]
        %v2910 = vld [vmem:[%s2906 + $0x18] sm:$0xff]
        %v2911 = vld [vmem:[%s2906 + $0x20] sm:$0xff]
        %v2912 = vld [vmem:[%s2906 + $0x28] sm:$0xff]
        %v2913 = vld [vmem:[%s2906 + $0x30] sm:$0xff]
        %v2914 = vld [vmem:[%s2906 + $0x38] sm:$0xff]
        %v2915 = vld [vmem:[%s2906 + $0x40] sm:$0xff]
        %v2916 = vld [vmem:[%s2906 + $0x48] sm:$0xff]
        %v2917 = vld [vmem:[%s2906 + $0x50] sm:$0xff]
        %v2918 = vld [vmem:[%s2906 + $0x58] sm:$0xff]
        %v2919 = vld [vmem:[%s2906 + $0x60] sm:$0xff]
        %v2920 = vld [vmem:[%s2906 + $0x68] sm:$0xff]
        %v2921 = vld [vmem:[%s2906 + $0x70] sm:$0xff]
        %v2922 = vld [vmem:[%s2906 + $0x78] sm:$0xff]
        %s2923 = scalar_lea.vmem [#allocation2], 416
        %v2924 = vld [vmem:[%s2923] sm:$0xff]
        %v2925 = vld [vmem:[%s2923 + $0x8] sm:$0xff]
        %v2926 = vld [vmem:[%s2923 + $0x10] sm:$0xff]
        %v2927 = vld [vmem:[%s2923 + $0x18] sm:$0xff]
        %v2929 = vsel %vm250, %v2924, 0
        %v2932 = vsel %vm250, %v2925, 0
        %v2935 = vsel %vm250, %v2926, 0
        %v2938 = vsel %vm250, %v2927, 0
        %2940 = vmatprep.subr.mxu0 0.0
        %2941 = vmatpush1.msra.mxu0 %v2800
        %2942 = vmatprep.subr.mxu0 0.0
        %2943 = vmatpush1.msra.mxu0 %v2801
        %2944 = vmatprep.subr.mxu0 0.0
        %2945 = vmatpush1.msra.mxu0 %v2802
        %2946 = vmatprep.subr.mxu0 0.0
        %2947 = vmatpush1.msra.mxu0 %v2803
        %2948 = vmatprep.subr.mxu0 0.0
        %2949 = vmatpush1.msra.mxu0 0.0
        %2950 = vmatprep.subr.mxu0 0.0
        %2951 = vmatpush1.msra.mxu0 0.0
        %2952 = vmatprep.subr.mxu0 0.0
        %2953 = vmatpush1.msra.mxu0 0.0
        %2954 = vmatprep.subr.mxu0 0.0
        %2955 = vmatpush1.msra.mxu0 0.0
        %2956 = vmatprep.subr.mxu0 0.0
        %2957 = vmatpush1.msra.mxu0 0.0
        %2958 = vmatprep.subr.mxu0 0.0
        %2959 = vmatpush1.msra.mxu0 0.0
        %2960 = vmatprep.subr.mxu0 0.0
        %2961 = vmatpush1.msra.mxu0 0.0
        %2962 = vmatprep.subr.mxu0 0.0
        %2963 = vmatpush1.msra.mxu0 0.0
        %2964 = vmatprep.subr.mxu0 0.0
        %2965 = vmatpush1.msra.mxu0 0.0
        %2966 = vmatprep.subr.mxu0 0.0
        %2967 = vmatpush1.msra.mxu0 0.0
        %2968 = vmatprep.subr.mxu0 0.0
        %2969 = vmatpush1.msra.mxu0 0.0
        %2970 = vmatprep.subr.mxu0 0.0
        %2971 = vmatpush1.msra.mxu0 0.0
        %2972 = vmatprep.subr.mxu0 0.0
        %2973 = vmatpush1.msra.mxu0 0.0
        %2974 = vmatprep.subr.mxu0 0.0
        %2975 = vmatpush1.msra.mxu0 0.0
        %2976 = vmatprep.subr.mxu0 0.0
        %2977 = vmatpush1.msra.mxu0 0.0
        %2978 = vmatprep.subr.mxu0 0.0
        %2979 = vmatpush1.msra.mxu0 0.0
        %2980 = vmatprep.subr.mxu0 0.0
        %2981 = vmatpush1.msra.mxu0 0.0
        %2982 = vmatprep.subr.mxu0 0.0
        %2983 = vmatpush1.msra.mxu0 0.0
        %2984 = vmatprep.subr.mxu0 0.0
        %2985 = vmatpush1.msra.mxu0 0.0
        %2986 = vmatprep.subr.mxu0 0.0
        %2987 = vmatpush1.msra.mxu0 0.0
        %2988 = vmatprep.subr.mxu0 0.0
        %2989 = vmatpush1.msra.mxu0 0.0
        %2990 = vmatprep.subr.mxu0 0.0
        %2991 = vmatpush1.msra.mxu0 0.0
        %2992 = vmatprep.subr.mxu0 0.0
        %2993 = vmatpush1.msra.mxu0 0.0
        %2994 = vmatprep.subr.mxu0 0.0
        %2995 = vmatpush1.msra.mxu0 0.0
        %2996 = vmatprep.subr.mxu0 0.0
        %2997 = vmatpush1.msra.mxu0 0.0
        %2998 = vmatprep.subr.mxu0 0.0
        %2999 = vmatpush1.msra.mxu0 0.0
        %3000 = vmatprep.subr.mxu0 0.0
        %3001 = vmatpush1.msra.mxu0 0.0
        %3002 = vmatprep.subr.mxu0 0.0
        %3003 = vmatpush1.msra.mxu0 0.0
        %3004 = vmatprep.mubr.f32.mxu0 0.0
        %3005 = vmatmul.mubr.f32.gmra.mrb[0].mxu0 %v2929
        %v3006 = vpop.f32.mrb[0].mxu0
        %v3007 = vadd.f32 0.0, %v3006
        %v3008 = vpop.f32.mrb[0].mxu0
        %3009 = vmatprep.mubr.f32.mxu0 0.0
        %3010 = vmatmul.mubr.f32.gmra.mrb[0].mxu0 %v2932
        %v3011 = vpop.f32.mrb[0].mxu0
        %v3012 = vadd.f32 0.0, %v3011
        %v3013 = vpop.f32.mrb[0].mxu0
        %3014 = vmatprep.mubr.f32.mxu0 0.0
        %3015 = vmatmul.mubr.f32.gmra.mrb[0].mxu0 %v2935
        %v3016 = vpop.f32.mrb[0].mxu0
        %v3017 = vadd.f32 0.0, %v3016
        %v3018 = vpop.f32.mrb[0].mxu0
        %3019 = vmatprep.mubr.f32.mxu0 0.0
        %3020 = vmatmul.mubr.f32.gmra.mrb[0].mxu0 %v2938
        %v3021 = vpop.f32.mrb[0].mxu0
        %v3022 = vadd.f32 0.0, %v3021
        %v3023 = vpop.f32.mrb[0].mxu0
        %3024 = vdwg.mxu0
        %s3025 = scalar_lea.vmem [#allocation4], 1664
        %v3026 = vld [vmem:[%s3025] sm:$0xff]
        %v3027 = vld [vmem:[%s3025 + $0x8] sm:$0xff]
        %v3028 = vld [vmem:[%s3025 + $0x10] sm:$0xff]
        %v3029 = vld [vmem:[%s3025 + $0x18] sm:$0xff]
        %v3030 = vld [vmem:[%s3025 + $0x20] sm:$0xff]
        %v3031 = vld [vmem:[%s3025 + $0x28] sm:$0xff]
        %v3032 = vld [vmem:[%s3025 + $0x30] sm:$0xff]
        %v3033 = vld [vmem:[%s3025 + $0x38] sm:$0xff]
        %v3034 = vld [vmem:[%s3025 + $0x40] sm:$0xff]
        %v3035 = vld [vmem:[%s3025 + $0x48] sm:$0xff]
        %v3036 = vld [vmem:[%s3025 + $0x50] sm:$0xff]
        %v3037 = vld [vmem:[%s3025 + $0x58] sm:$0xff]
        %v3038 = vld [vmem:[%s3025 + $0x60] sm:$0xff]
        %v3039 = vld [vmem:[%s3025 + $0x68] sm:$0xff]
        %v3040 = vld [vmem:[%s3025 + $0x70] sm:$0xff]
        %v3041 = vld [vmem:[%s3025 + $0x78] sm:$0xff]
        %3042 = vmatprep.subr.mxu0 0.0
        %3043 = vmatpush1.msra.mxu0 %v3026
        %3044 = vmatprep.subr.mxu0 0.0
        %3045 = vmatpush1.msra.mxu0 %v3027
        %3046 = vmatprep.subr.mxu0 0.0
        %3047 = vmatpush1.msra.mxu0 %v3028
        %3048 = vmatprep.subr.mxu0 0.0
        %3049 = vmatpush1.msra.mxu0 %v3029
        %3050 = vmatprep.subr.mxu0 0.0
        %3051 = vmatpush1.msra.mxu0 %v3030
        %3052 = vmatprep.subr.mxu0 0.0
        %3053 = vmatpush1.msra.mxu0 %v3031
        %3054 = vmatprep.subr.mxu0 0.0
        %3055 = vmatpush1.msra.mxu0 %v3032
        %3056 = vmatprep.subr.mxu0 0.0
        %3057 = vmatpush1.msra.mxu0 %v3033
        %3058 = vmatprep.subr.mxu0 0.0
        %3059 = vmatpush1.msra.mxu0 %v3034
        %3060 = vmatprep.subr.mxu0 0.0
        %3061 = vmatpush1.msra.mxu0 %v3035
        %3062 = vmatprep.subr.mxu0 0.0
        %3063 = vmatpush1.msra.mxu0 %v3036
        %3064 = vmatprep.subr.mxu0 0.0
        %3065 = vmatpush1.msra.mxu0 %v3037
        %3066 = vmatprep.subr.mxu0 0.0
        %3067 = vmatpush1.msra.mxu0 %v3038
        %3068 = vmatprep.subr.mxu0 0.0
        %3069 = vmatpush1.msra.mxu0 %v3039
        %3070 = vmatprep.subr.mxu0 0.0
        %3071 = vmatpush1.msra.mxu0 %v3040
        %3072 = vmatprep.subr.mxu0 0.0
        %3073 = vmatpush1.msra.mxu0 %v3041
        %3074 = vmatprep.subr.mxu0 0.0
        %3075 = vmatpush1.msra.mxu0 0.0
        %3076 = vmatprep.subr.mxu0 0.0
        %3077 = vmatpush1.msra.mxu0 0.0
        %3078 = vmatprep.subr.mxu0 0.0
        %3079 = vmatpush1.msra.mxu0 0.0
        %3080 = vmatprep.subr.mxu0 0.0
        %3081 = vmatpush1.msra.mxu0 0.0
        %3082 = vmatprep.subr.mxu0 0.0
        %3083 = vmatpush1.msra.mxu0 0.0
        %3084 = vmatprep.subr.mxu0 0.0
        %3085 = vmatpush1.msra.mxu0 0.0
        %3086 = vmatprep.subr.mxu0 0.0
        %3087 = vmatpush1.msra.mxu0 0.0
        %3088 = vmatprep.subr.mxu0 0.0
        %3089 = vmatpush1.msra.mxu0 0.0
        %3090 = vmatprep.subr.mxu0 0.0
        %3091 = vmatpush1.msra.mxu0 0.0
        %3092 = vmatprep.subr.mxu0 0.0
        %3093 = vmatpush1.msra.mxu0 0.0
        %3094 = vmatprep.subr.mxu0 0.0
        %3095 = vmatpush1.msra.mxu0 0.0
        %3096 = vmatprep.subr.mxu0 0.0
        %3097 = vmatpush1.msra.mxu0 0.0
        %3098 = vmatprep.subr.mxu0 0.0
        %3099 = vmatpush1.msra.mxu0 0.0
        %3100 = vmatprep.subr.mxu0 0.0
        %3101 = vmatpush1.msra.mxu0 0.0
        %3102 = vmatprep.subr.mxu0 0.0
        %3103 = vmatpush1.msra.mxu0 0.0
        %3104 = vmatprep.subr.mxu0 0.0
        %3105 = vmatpush1.msra.mxu0 0.0
        %3106 = vmatprep.mubr.f32.mxu0 0.0
        %3107 = vmatmul.mubr.f32.gmra.mrb[0].mxu0 %v3007
        %v3108 = vpop.f32.mrb[0].mxu0
        %v3109 = vadd.f32 0.0, %v3108
        %v3110 = vpop.f32.mrb[0].mxu0
        %3111 = vmatprep.mubr.f32.mxu0 0.0
        %3112 = vmatmul.mubr.f32.gmra.mrb[0].mxu0 %v3012
        %v3113 = vpop.f32.mrb[0].mxu0
        %v3114 = vadd.f32 0.0, %v3113
        %v3115 = vpop.f32.mrb[0].mxu0
        %3116 = vmatprep.mubr.f32.mxu0 0.0
        %3117 = vmatmul.mubr.f32.gmra.mrb[0].mxu0 %v3017
        %v3118 = vpop.f32.mrb[0].mxu0
        %v3119 = vadd.f32 0.0, %v3118
        %v3120 = vpop.f32.mrb[0].mxu0
        %3121 = vmatprep.mubr.f32.mxu0 0.0
        %3122 = vmatmul.mubr.f32.gmra.mrb[0].mxu0 %v3022
        %v3123 = vpop.f32.mrb[0].mxu0
        %v3124 = vadd.f32 0.0, %v3123
        %v3125 = vpop.f32.mrb[0].mxu0
        %3126 = vdwg.mxu0
        %3127 = vmatprep.subr.mxu0 0.0
        %3128 = vmatpush1.msra.mxu0 %v2907
        %3129 = vmatprep.subr.mxu0 0.0
        %3130 = vmatpush1.msra.mxu0 %v2908
        %3131 = vmatprep.subr.mxu0 0.0
        %3132 = vmatpush1.msra.mxu0 %v2909
        %3133 = vmatprep.subr.mxu0 0.0
        %3134 = vmatpush1.msra.mxu0 %v2910
        %3135 = vmatprep.subr.mxu0 0.0
        %3136 = vmatpush1.msra.mxu0 %v2911
        %3137 = vmatprep.subr.mxu0 0.0
        %3138 = vmatpush1.msra.mxu0 %v2912
        %3139 = vmatprep.subr.mxu0 0.0
        %3140 = vmatpush1.msra.mxu0 %v2913
        %3141 = vmatprep.subr.mxu0 0.0
        %3142 = vmatpush1.msra.mxu0 %v2914
        %3143 = vmatprep.subr.mxu0 0.0
        %3144 = vmatpush1.msra.mxu0 %v2915
        %3145 = vmatprep.subr.mxu0 0.0
        %3146 = vmatpush1.msra.mxu0 %v2916
        %3147 = vmatprep.subr.mxu0 0.0
        %3148 = vmatpush1.msra.mxu0 %v2917
        %3149 = vmatprep.subr.mxu0 0.0
        %3150 = vmatpush1.msra.mxu0 %v2918
        %3151 = vmatprep.subr.mxu0 0.0
        %3152 = vmatpush1.msra.mxu0 %v2919
        %3153 = vmatprep.subr.mxu0 0.0
        %3154 = vmatpush1.msra.mxu0 %v2920
        %3155 = vmatprep.subr.mxu0 0.0
        %3156 = vmatpush1.msra.mxu0 %v2921
        %3157 = vmatprep.subr.mxu0 0.0
        %3158 = vmatpush1.msra.mxu0 %v2922
        %3159 = vmatprep.subr.mxu0 0.0
        %3160 = vmatpush1.msra.mxu0 0.0
        %3161 = vmatprep.subr.mxu0 0.0
        %3162 = vmatpush1.msra.mxu0 0.0
        %3163 = vmatprep.subr.mxu0 0.0
        %3164 = vmatpush1.msra.mxu0 0.0
        %3165 = vmatprep.subr.mxu0 0.0
        %3166 = vmatpush1.msra.mxu0 0.0
        %3167 = vmatprep.subr.mxu0 0.0
        %3168 = vmatpush1.msra.mxu0 0.0
        %3169 = vmatprep.subr.mxu0 0.0
        %3170 = vmatpush1.msra.mxu0 0.0
        %3171 = vmatprep.subr.mxu0 0.0
        %3172 = vmatpush1.msra.mxu0 0.0
        %3173 = vmatprep.subr.mxu0 0.0
        %3174 = vmatpush1.msra.mxu0 0.0
        %3175 = vmatprep.subr.mxu0 0.0
        %3176 = vmatpush1.msra.mxu0 0.0
        %3177 = vmatprep.subr.mxu0 0.0
        %3178 = vmatpush1.msra.mxu0 0.0
        %3179 = vmatprep.subr.mxu0 0.0
        %3180 = vmatpush1.msra.mxu0 0.0
        %3181 = vmatprep.subr.mxu0 0.0
        %3182 = vmatpush1.msra.mxu0 0.0
        %3183 = vmatprep.subr.mxu0 0.0
        %3184 = vmatpush1.msra.mxu0 0.0
        %3185 = vmatprep.subr.mxu0 0.0
        %3186 = vmatpush1.msra.mxu0 0.0
        %3187 = vmatprep.subr.mxu0 0.0
        %3188 = vmatpush1.msra.mxu0 0.0
        %3189 = vmatprep.subr.mxu0 0.0
        %3190 = vmatpush1.msra.mxu0 0.0
        %3191 = vmatprep.mubr.f32.mxu0 0.0
        %3192 = vmatmul.mubr.f32.gmra.mrb[0].mxu0 %v2888
        %v3193 = vpop.f32.mrb[0].mxu0
        %v3194 = vadd.f32 %v3109, %v3193
        %v3195 = vpop.f32.mrb[0].mxu0
        %3196 = vmatprep.mubr.f32.mxu0 0.0
        %3197 = vmatmul.mubr.f32.gmra.mrb[0].mxu0 %v2893
        %v3198 = vpop.f32.mrb[0].mxu0
        %v3199 = vadd.f32 %v3114, %v3198
        %v3200 = vpop.f32.mrb[0].mxu0
        %3201 = vmatprep.mubr.f32.mxu0 0.0
        %3202 = vmatmul.mubr.f32.gmra.mrb[0].mxu0 %v2898
        %v3203 = vpop.f32.mrb[0].mxu0
        %v3204 = vadd.f32 %v3119, %v3203
        %v3205 = vpop.f32.mrb[0].mxu0
        %3206 = vmatprep.mubr.f32.mxu0 0.0
        %3207 = vmatmul.mubr.f32.gmra.mrb[0].mxu0 %v2903
        %v3208 = vpop.f32.mrb[0].mxu0
        %v3209 = vadd.f32 %v3124, %v3208
        %v3210 = vpop.f32.mrb[0].mxu0
        %3211 = vdwg.mxu0
        %s3212 = scalar_lea.vmem [#allocation2], 448
        %v3213 = vld [vmem:[%s3212] sm:$0xff]
        %v3214 = vld [vmem:[%s3212 + $0x8] sm:$0xff]
        %v3215 = vld [vmem:[%s3212 + $0x10] sm:$0xff]
        %v3216 = vld [vmem:[%s3212 + $0x18] sm:$0xff]
        %v3218 = vsel %vm250, %v3213, 0
        %v3221 = vsel %vm250, %v3214, 0
        %v3224 = vsel %vm250, %v3215, 0
        %v3227 = vsel %vm250, %v3216, 0
        %3229 = vmatprep.subr.mxu0 0.0
        %3230 = vmatpush1.msra.mxu0 %v2800
        %3231 = vmatprep.subr.mxu0 0.0
        %3232 = vmatpush1.msra.mxu0 %v2801
        %3233 = vmatprep.subr.mxu0 0.0
        %3234 = vmatpush1.msra.mxu0 %v2802
        %3235 = vmatprep.subr.mxu0 0.0
        %3236 = vmatpush1.msra.mxu0 %v2803
        %3237 = vmatprep.subr.mxu0 0.0
        %3238 = vmatpush1.msra.mxu0 0.0
        %3239 = vmatprep.subr.mxu0 0.0
        %3240 = vmatpush1.msra.mxu0 0.0
        %3241 = vmatprep.subr.mxu0 0.0
        %3242 = vmatpush1.msra.mxu0 0.0
        %3243 = vmatprep.subr.mxu0 0.0
        %3244 = vmatpush1.msra.mxu0 0.0
        %3245 = vmatprep.subr.mxu0 0.0
        %3246 = vmatpush1.msra.mxu0 0.0
        %3247 = vmatprep.subr.mxu0 0.0
        %3248 = vmatpush1.msra.mxu0 0.0
        %3249 = vmatprep.subr.mxu0 0.0
        %3250 = vmatpush1.msra.mxu0 0.0
        %3251 = vmatprep.subr.mxu0 0.0
        %3252 = vmatpush1.msra.mxu0 0.0
        %3253 = vmatprep.subr.mxu0 0.0
        %3254 = vmatpush1.msra.mxu0 0.0
        %3255 = vmatprep.subr.mxu0 0.0
        %3256 = vmatpush1.msra.mxu0 0.0
        %3257 = vmatprep.subr.mxu0 0.0
        %3258 = vmatpush1.msra.mxu0 0.0
        %3259 = vmatprep.subr.mxu0 0.0
        %3260 = vmatpush1.msra.mxu0 0.0
        %3261 = vmatprep.subr.mxu0 0.0
        %3262 = vmatpush1.msra.mxu0 0.0
        %3263 = vmatprep.subr.mxu0 0.0
        %3264 = vmatpush1.msra.mxu0 0.0
        %3265 = vmatprep.subr.mxu0 0.0
        %3266 = vmatpush1.msra.mxu0 0.0
        %3267 = vmatprep.subr.mxu0 0.0
        %3268 = vmatpush1.msra.mxu0 0.0
        %3269 = vmatprep.subr.mxu0 0.0
        %3270 = vmatpush1.msra.mxu0 0.0
        %3271 = vmatprep.subr.mxu0 0.0
        %3272 = vmatpush1.msra.mxu0 0.0
        %3273 = vmatprep.subr.mxu0 0.0
        %3274 = vmatpush1.msra.mxu0 0.0
        %3275 = vmatprep.subr.mxu0 0.0
        %3276 = vmatpush1.msra.mxu0 0.0
        %3277 = vmatprep.subr.mxu0 0.0
        %3278 = vmatpush1.msra.mxu0 0.0
        %3279 = vmatprep.subr.mxu0 0.0
        %3280 = vmatpush1.msra.mxu0 0.0
        %3281 = vmatprep.subr.mxu0 0.0
        %3282 = vmatpush1.msra.mxu0 0.0
        %3283 = vmatprep.subr.mxu0 0.0
        %3284 = vmatpush1.msra.mxu0 0.0
        %3285 = vmatprep.subr.mxu0 0.0
        %3286 = vmatpush1.msra.mxu0 0.0
        %3287 = vmatprep.subr.mxu0 0.0
        %3288 = vmatpush1.msra.mxu0 0.0
        %3289 = vmatprep.subr.mxu0 0.0
        %3290 = vmatpush1.msra.mxu0 0.0
        %3291 = vmatprep.subr.mxu0 0.0
        %3292 = vmatpush1.msra.mxu0 0.0
        %3293 = vmatprep.mubr.f32.mxu0 0.0
        %3294 = vmatmul.mubr.f32.gmra.mrb[0].mxu0 %v3218
        %v3295 = vpop.f32.mrb[0].mxu0
        %v3296 = vadd.f32 0.0, %v3295
        %v3297 = vpop.f32.mrb[0].mxu0
        %3298 = vmatprep.mubr.f32.mxu0 0.0
        %3299 = vmatmul.mubr.f32.gmra.mrb[0].mxu0 %v3221
        %v3300 = vpop.f32.mrb[0].mxu0
        %v3301 = vadd.f32 0.0, %v3300
        %v3302 = vpop.f32.mrb[0].mxu0
        %3303 = vmatprep.mubr.f32.mxu0 0.0
        %3304 = vmatmul.mubr.f32.gmra.mrb[0].mxu0 %v3224
        %v3305 = vpop.f32.mrb[0].mxu0
        %v3306 = vadd.f32 0.0, %v3305
        %v3307 = vpop.f32.mrb[0].mxu0
        %3308 = vmatprep.mubr.f32.mxu0 0.0
        %3309 = vmatmul.mubr.f32.gmra.mrb[0].mxu0 %v3227
        %v3310 = vpop.f32.mrb[0].mxu0
        %v3311 = vadd.f32 0.0, %v3310
        %v3312 = vpop.f32.mrb[0].mxu0
        %3313 = vdwg.mxu0
        %s3314 = scalar_lea.vmem [#allocation4], 1792
        %v3315 = vld [vmem:[%s3314] sm:$0xff]
        %v3316 = vld [vmem:[%s3314 + $0x8] sm:$0xff]
        %v3317 = vld [vmem:[%s3314 + $0x10] sm:$0xff]
        %v3318 = vld [vmem:[%s3314 + $0x18] sm:$0xff]
        %v3319 = vld [vmem:[%s3314 + $0x20] sm:$0xff]
        %v3320 = vld [vmem:[%s3314 + $0x28] sm:$0xff]
        %v3321 = vld [vmem:[%s3314 + $0x30] sm:$0xff]
        %v3322 = vld [vmem:[%s3314 + $0x38] sm:$0xff]
        %v3323 = vld [vmem:[%s3314 + $0x40] sm:$0xff]
        %v3324 = vld [vmem:[%s3314 + $0x48] sm:$0xff]
        %v3325 = vld [vmem:[%s3314 + $0x50] sm:$0xff]
        %v3326 = vld [vmem:[%s3314 + $0x58] sm:$0xff]
        %v3327 = vld [vmem:[%s3314 + $0x60] sm:$0xff]
        %v3328 = vld [vmem:[%s3314 + $0x68] sm:$0xff]
        %v3329 = vld [vmem:[%s3314 + $0x70] sm:$0xff]
        %v3330 = vld [vmem:[%s3314 + $0x78] sm:$0xff]
        %3331 = vmatprep.subr.mxu0 0.0
        %3332 = vmatpush1.msra.mxu0 %v3315
        %3333 = vmatprep.subr.mxu0 0.0
        %3334 = vmatpush1.msra.mxu0 %v3316
        %3335 = vmatprep.subr.mxu0 0.0
        %3336 = vmatpush1.msra.mxu0 %v3317
        %3337 = vmatprep.subr.mxu0 0.0
        %3338 = vmatpush1.msra.mxu0 %v3318
        %3339 = vmatprep.subr.mxu0 0.0
        %3340 = vmatpush1.msra.mxu0 %v3319
        %3341 = vmatprep.subr.mxu0 0.0
        %3342 = vmatpush1.msra.mxu0 %v3320
        %3343 = vmatprep.subr.mxu0 0.0
        %3344 = vmatpush1.msra.mxu0 %v3321
        %3345 = vmatprep.subr.mxu0 0.0
        %3346 = vmatpush1.msra.mxu0 %v3322
        %3347 = vmatprep.subr.mxu0 0.0
        %3348 = vmatpush1.msra.mxu0 %v3323
        %3349 = vmatprep.subr.mxu0 0.0
        %3350 = vmatpush1.msra.mxu0 %v3324
        %3351 = vmatprep.subr.mxu0 0.0
        %3352 = vmatpush1.msra.mxu0 %v3325
        %3353 = vmatprep.subr.mxu0 0.0
        %3354 = vmatpush1.msra.mxu0 %v3326
        %3355 = vmatprep.subr.mxu0 0.0
        %3356 = vmatpush1.msra.mxu0 %v3327
        %3357 = vmatprep.subr.mxu0 0.0
        %3358 = vmatpush1.msra.mxu0 %v3328
        %3359 = vmatprep.subr.mxu0 0.0
        %3360 = vmatpush1.msra.mxu0 %v3329
        %3361 = vmatprep.subr.mxu0 0.0
        %3362 = vmatpush1.msra.mxu0 %v3330
        %3363 = vmatprep.subr.mxu0 0.0
        %3364 = vmatpush1.msra.mxu0 0.0
        %3365 = vmatprep.subr.mxu0 0.0
        %3366 = vmatpush1.msra.mxu0 0.0
        %3367 = vmatprep.subr.mxu0 0.0
        %3368 = vmatpush1.msra.mxu0 0.0
        %3369 = vmatprep.subr.mxu0 0.0
        %3370 = vmatpush1.msra.mxu0 0.0
        %3371 = vmatprep.subr.mxu0 0.0
        %3372 = vmatpush1.msra.mxu0 0.0
        %3373 = vmatprep.subr.mxu0 0.0
        %3374 = vmatpush1.msra.mxu0 0.0
        %3375 = vmatprep.subr.mxu0 0.0
        %3376 = vmatpush1.msra.mxu0 0.0
        %3377 = vmatprep.subr.mxu0 0.0
        %3378 = vmatpush1.msra.mxu0 0.0
        %3379 = vmatprep.subr.mxu0 0.0
        %3380 = vmatpush1.msra.mxu0 0.0
        %3381 = vmatprep.subr.mxu0 0.0
        %3382 = vmatpush1.msra.mxu0 0.0
        %3383 = vmatprep.subr.mxu0 0.0
        %3384 = vmatpush1.msra.mxu0 0.0
        %3385 = vmatprep.subr.mxu0 0.0
        %3386 = vmatpush1.msra.mxu0 0.0
        %3387 = vmatprep.subr.mxu0 0.0
        %3388 = vmatpush1.msra.mxu0 0.0
        %3389 = vmatprep.subr.mxu0 0.0
        %3390 = vmatpush1.msra.mxu0 0.0
        %3391 = vmatprep.subr.mxu0 0.0
        %3392 = vmatpush1.msra.mxu0 0.0
        %3393 = vmatprep.subr.mxu0 0.0
        %3394 = vmatpush1.msra.mxu0 0.0
        %3395 = vmatprep.mubr.f32.mxu0 0.0
        %3396 = vmatmul.mubr.f32.gmra.mrb[0].mxu0 %v3296
        %v3397 = vpop.f32.mrb[0].mxu0
        %v3398 = vadd.f32 0.0, %v3397
        %v3399 = vpop.f32.mrb[0].mxu0
        %3400 = vmatprep.mubr.f32.mxu0 0.0
        %3401 = vmatmul.mubr.f32.gmra.mrb[0].mxu0 %v3301
        %v3402 = vpop.f32.mrb[0].mxu0
        %v3403 = vadd.f32 0.0, %v3402
        %v3404 = vpop.f32.mrb[0].mxu0
        %3405 = vmatprep.mubr.f32.mxu0 0.0
        %3406 = vmatmul.mubr.f32.gmra.mrb[0].mxu0 %v3306
        %v3407 = vpop.f32.mrb[0].mxu0
        %v3408 = vadd.f32 0.0, %v3407
        %v3409 = vpop.f32.mrb[0].mxu0
        %3410 = vmatprep.mubr.f32.mxu0 0.0
        %3411 = vmatmul.mubr.f32.gmra.mrb[0].mxu0 %v3311
        %v3412 = vpop.f32.mrb[0].mxu0
        %v3413 = vadd.f32 0.0, %v3412
        %v3414 = vpop.f32.mrb[0].mxu0
        %3415 = vdwg.mxu0
        %v3416 = vadd.f32 %v3194, %v3398
        %v3417 = vadd.f32 %v3199, %v3403
        %v3418 = vadd.f32 %v3204, %v3408
        %v3419 = vadd.f32 %v3209, %v3413
        %s3420 = scalar_lea.vmem [#allocation6], 4
        %v3421 = vld [vmem:[%s3420] sm:$0x1]
        %v3423 = vlaneseq
        %v3424 = vshrl.u32 %v3423, 7
        %v3425 = vsub.s32 0, %v3424
        %v3426 = vrot.slane %v3421, %v3425
        %v3428 = vadd.f32 %v3416, %v3426
        %v3429 = vadd.f32 %v3417, %v3426
        %v3430 = vadd.f32 %v3418, %v3426
        %v3431 = vadd.f32 %v3419, %v3426
        %vm3432 = vcmp.gt.f32.partialorder %v3428, 0.0
        %vm3433 = vcmp.gt.f32.partialorder %v3429, 0.0
        %vm3434 = vcmp.gt.f32.partialorder %v3430, 0.0
        %vm3435 = vcmp.gt.f32.partialorder %v3431, 0.0
        %v3436 = vmul.f32 %v3428, 0.01
        %v3437 = vmul.f32 %v3429, 0.01
        %v3438 = vmul.f32 %v3430, 0.01
        %v3439 = vmul.f32 %v3431, 0.01
        %v3440 = vsel %vm3432, %v3428, %v3436
        %v3441 = vsel %vm3433, %v3429, %v3437
        %v3442 = vsel %vm3434, %v3430, %v3438
        %v3443 = vsel %vm3435, %v3431, %v3439
        %s3444 = scalar_lea.vmem [#allocation2], 480
        %v3445 = vld [vmem:[%s3444] sm:$0xff]
        %v3446 = vld [vmem:[%s3444 + $0x8] sm:$0xff]
        %v3447 = vld [vmem:[%s3444 + $0x10] sm:$0xff]
        %v3448 = vld [vmem:[%s3444 + $0x18] sm:$0xff]
        %v3450 = vsel %vm250, %v3445, 0
        %v3453 = vsel %vm250, %v3446, 0
        %v3456 = vsel %vm250, %v3447, 0
        %v3459 = vsel %vm250, %v3448, 0
        %3461 = vmatprep.subr.mxu0 0.0
        %3462 = vmatpush1.msra.mxu0 %v3440
        %3463 = vmatprep.subr.mxu0 0.0
        %3464 = vmatpush1.msra.mxu0 %v3441
        %3465 = vmatprep.subr.mxu0 0.0
        %3466 = vmatpush1.msra.mxu0 %v3442
        %3467 = vmatprep.subr.mxu0 0.0
        %3468 = vmatpush1.msra.mxu0 %v3443
        %3469 = vmatprep.subr.mxu0 0.0
        %3470 = vmatpush1.msra.mxu0 0.0
        %3471 = vmatprep.subr.mxu0 0.0
        %3472 = vmatpush1.msra.mxu0 0.0
        %3473 = vmatprep.subr.mxu0 0.0
        %3474 = vmatpush1.msra.mxu0 0.0
        %3475 = vmatprep.subr.mxu0 0.0
        %3476 = vmatpush1.msra.mxu0 0.0
        %3477 = vmatprep.subr.mxu0 0.0
        %3478 = vmatpush1.msra.mxu0 0.0
        %3479 = vmatprep.subr.mxu0 0.0
        %3480 = vmatpush1.msra.mxu0 0.0
        %3481 = vmatprep.subr.mxu0 0.0
        %3482 = vmatpush1.msra.mxu0 0.0
        %3483 = vmatprep.subr.mxu0 0.0
        %3484 = vmatpush1.msra.mxu0 0.0
        %3485 = vmatprep.subr.mxu0 0.0
        %3486 = vmatpush1.msra.mxu0 0.0
        %3487 = vmatprep.subr.mxu0 0.0
        %3488 = vmatpush1.msra.mxu0 0.0
        %3489 = vmatprep.subr.mxu0 0.0
        %3490 = vmatpush1.msra.mxu0 0.0
        %3491 = vmatprep.subr.mxu0 0.0
        %3492 = vmatpush1.msra.mxu0 0.0
        %3493 = vmatprep.subr.mxu0 0.0
        %3494 = vmatpush1.msra.mxu0 0.0
        %3495 = vmatprep.subr.mxu0 0.0
        %3496 = vmatpush1.msra.mxu0 0.0
        %3497 = vmatprep.subr.mxu0 0.0
        %3498 = vmatpush1.msra.mxu0 0.0
        %3499 = vmatprep.subr.mxu0 0.0
        %3500 = vmatpush1.msra.mxu0 0.0
        %3501 = vmatprep.subr.mxu0 0.0
        %3502 = vmatpush1.msra.mxu0 0.0
        %3503 = vmatprep.subr.mxu0 0.0
        %3504 = vmatpush1.msra.mxu0 0.0
        %3505 = vmatprep.subr.mxu0 0.0
        %3506 = vmatpush1.msra.mxu0 0.0
        %3507 = vmatprep.subr.mxu0 0.0
        %3508 = vmatpush1.msra.mxu0 0.0
        %3509 = vmatprep.subr.mxu0 0.0
        %3510 = vmatpush1.msra.mxu0 0.0
        %3511 = vmatprep.subr.mxu0 0.0
        %3512 = vmatpush1.msra.mxu0 0.0
        %3513 = vmatprep.subr.mxu0 0.0
        %3514 = vmatpush1.msra.mxu0 0.0
        %3515 = vmatprep.subr.mxu0 0.0
        %3516 = vmatpush1.msra.mxu0 0.0
        %3517 = vmatprep.subr.mxu0 0.0
        %3518 = vmatpush1.msra.mxu0 0.0
        %3519 = vmatprep.subr.mxu0 0.0
        %3520 = vmatpush1.msra.mxu0 0.0
        %3521 = vmatprep.subr.mxu0 0.0
        %3522 = vmatpush1.msra.mxu0 0.0
        %3523 = vmatprep.subr.mxu0 0.0
        %3524 = vmatpush1.msra.mxu0 0.0
        %3525 = vmatprep.mubr.f32.mxu0 0.0
        %3526 = vmatmul.mubr.f32.gmra.mrb[0].mxu0 %v3450
        %v3527 = vpop.f32.mrb[0].mxu0
        %v3528 = vadd.f32 0.0, %v3527
        %v3529 = vpop.f32.mrb[0].mxu0
        %3530 = vmatprep.mubr.f32.mxu0 0.0
        %3531 = vmatmul.mubr.f32.gmra.mrb[0].mxu0 %v3453
        %v3532 = vpop.f32.mrb[0].mxu0
        %v3533 = vadd.f32 0.0, %v3532
        %v3534 = vpop.f32.mrb[0].mxu0
        %3535 = vmatprep.mubr.f32.mxu0 0.0
        %3536 = vmatmul.mubr.f32.gmra.mrb[0].mxu0 %v3456
        %v3537 = vpop.f32.mrb[0].mxu0
        %v3538 = vadd.f32 0.0, %v3537
        %v3539 = vpop.f32.mrb[0].mxu0
        %3540 = vmatprep.mubr.f32.mxu0 0.0
        %3541 = vmatmul.mubr.f32.gmra.mrb[0].mxu0 %v3459
        %v3542 = vpop.f32.mrb[0].mxu0
        %v3543 = vadd.f32 0.0, %v3542
        %v3544 = vpop.f32.mrb[0].mxu0
        %3545 = vdwg.mxu0
        %s3546 = scalar_lea.vmem [#allocation4], 1920
        %v3547 = vld [vmem:[%s3546] sm:$0xff]
        %v3548 = vld [vmem:[%s3546 + $0x8] sm:$0xff]
        %v3549 = vld [vmem:[%s3546 + $0x10] sm:$0xff]
        %v3550 = vld [vmem:[%s3546 + $0x18] sm:$0xff]
        %v3551 = vld [vmem:[%s3546 + $0x20] sm:$0xff]
        %v3552 = vld [vmem:[%s3546 + $0x28] sm:$0xff]
        %v3553 = vld [vmem:[%s3546 + $0x30] sm:$0xff]
        %v3554 = vld [vmem:[%s3546 + $0x38] sm:$0xff]
        %v3555 = vld [vmem:[%s3546 + $0x40] sm:$0xff]
        %v3556 = vld [vmem:[%s3546 + $0x48] sm:$0xff]
        %v3557 = vld [vmem:[%s3546 + $0x50] sm:$0xff]
        %v3558 = vld [vmem:[%s3546 + $0x58] sm:$0xff]
        %v3559 = vld [vmem:[%s3546 + $0x60] sm:$0xff]
        %v3560 = vld [vmem:[%s3546 + $0x68] sm:$0xff]
        %v3561 = vld [vmem:[%s3546 + $0x70] sm:$0xff]
        %v3562 = vld [vmem:[%s3546 + $0x78] sm:$0xff]
        %s3563 = scalar_lea.vmem [#allocation2], 512
        %v3564 = vld [vmem:[%s3563] sm:$0xff]
        %v3565 = vld [vmem:[%s3563 + $0x8] sm:$0xff]
        %v3566 = vld [vmem:[%s3563 + $0x10] sm:$0xff]
        %v3567 = vld [vmem:[%s3563 + $0x18] sm:$0xff]
        %v3569 = vsel %vm250, %v3564, 0
        %v3572 = vsel %vm250, %v3565, 0
        %v3575 = vsel %vm250, %v3566, 0
        %v3578 = vsel %vm250, %v3567, 0
        %3580 = vmatprep.subr.mxu0 0.0
        %3581 = vmatpush1.msra.mxu0 %v3440
        %3582 = vmatprep.subr.mxu0 0.0
        %3583 = vmatpush1.msra.mxu0 %v3441
        %3584 = vmatprep.subr.mxu0 0.0
        %3585 = vmatpush1.msra.mxu0 %v3442
        %3586 = vmatprep.subr.mxu0 0.0
        %3587 = vmatpush1.msra.mxu0 %v3443
        %3588 = vmatprep.subr.mxu0 0.0
        %3589 = vmatpush1.msra.mxu0 0.0
        %3590 = vmatprep.subr.mxu0 0.0
        %3591 = vmatpush1.msra.mxu0 0.0
        %3592 = vmatprep.subr.mxu0 0.0
        %3593 = vmatpush1.msra.mxu0 0.0
        %3594 = vmatprep.subr.mxu0 0.0
        %3595 = vmatpush1.msra.mxu0 0.0
        %3596 = vmatprep.subr.mxu0 0.0
        %3597 = vmatpush1.msra.mxu0 0.0
        %3598 = vmatprep.subr.mxu0 0.0
        %3599 = vmatpush1.msra.mxu0 0.0
        %3600 = vmatprep.subr.mxu0 0.0
        %3601 = vmatpush1.msra.mxu0 0.0
        %3602 = vmatprep.subr.mxu0 0.0
        %3603 = vmatpush1.msra.mxu0 0.0
        %3604 = vmatprep.subr.mxu0 0.0
        %3605 = vmatpush1.msra.mxu0 0.0
        %3606 = vmatprep.subr.mxu0 0.0
        %3607 = vmatpush1.msra.mxu0 0.0
        %3608 = vmatprep.subr.mxu0 0.0
        %3609 = vmatpush1.msra.mxu0 0.0
        %3610 = vmatprep.subr.mxu0 0.0
        %3611 = vmatpush1.msra.mxu0 0.0
        %3612 = vmatprep.subr.mxu0 0.0
        %3613 = vmatpush1.msra.mxu0 0.0
        %3614 = vmatprep.subr.mxu0 0.0
        %3615 = vmatpush1.msra.mxu0 0.0
        %3616 = vmatprep.subr.mxu0 0.0
        %3617 = vmatpush1.msra.mxu0 0.0
        %3618 = vmatprep.subr.mxu0 0.0
        %3619 = vmatpush1.msra.mxu0 0.0
        %3620 = vmatprep.subr.mxu0 0.0
        %3621 = vmatpush1.msra.mxu0 0.0
        %3622 = vmatprep.subr.mxu0 0.0
        %3623 = vmatpush1.msra.mxu0 0.0
        %3624 = vmatprep.subr.mxu0 0.0
        %3625 = vmatpush1.msra.mxu0 0.0
        %3626 = vmatprep.subr.mxu0 0.0
        %3627 = vmatpush1.msra.mxu0 0.0
        %3628 = vmatprep.subr.mxu0 0.0
        %3629 = vmatpush1.msra.mxu0 0.0
        %3630 = vmatprep.subr.mxu0 0.0
        %3631 = vmatpush1.msra.mxu0 0.0
        %3632 = vmatprep.subr.mxu0 0.0
        %3633 = vmatpush1.msra.mxu0 0.0
        %3634 = vmatprep.subr.mxu0 0.0
        %3635 = vmatpush1.msra.mxu0 0.0
        %3636 = vmatprep.subr.mxu0 0.0
        %3637 = vmatpush1.msra.mxu0 0.0
        %3638 = vmatprep.subr.mxu0 0.0
        %3639 = vmatpush1.msra.mxu0 0.0
        %3640 = vmatprep.subr.mxu0 0.0
        %3641 = vmatpush1.msra.mxu0 0.0
        %3642 = vmatprep.subr.mxu0 0.0
        %3643 = vmatpush1.msra.mxu0 0.0
        %3644 = vmatprep.mubr.f32.mxu0 0.0
        %3645 = vmatmul.mubr.f32.gmra.mrb[0].mxu0 %v3569
        %v3646 = vpop.f32.mrb[0].mxu0
        %v3647 = vadd.f32 0.0, %v3646
        %v3648 = vpop.f32.mrb[0].mxu0
        %3649 = vmatprep.mubr.f32.mxu0 0.0
        %3650 = vmatmul.mubr.f32.gmra.mrb[0].mxu0 %v3572
        %v3651 = vpop.f32.mrb[0].mxu0
        %v3652 = vadd.f32 0.0, %v3651
        %v3653 = vpop.f32.mrb[0].mxu0
        %3654 = vmatprep.mubr.f32.mxu0 0.0
        %3655 = vmatmul.mubr.f32.gmra.mrb[0].mxu0 %v3575
        %v3656 = vpop.f32.mrb[0].mxu0
        %v3657 = vadd.f32 0.0, %v3656
        %v3658 = vpop.f32.mrb[0].mxu0
        %3659 = vmatprep.mubr.f32.mxu0 0.0
        %3660 = vmatmul.mubr.f32.gmra.mrb[0].mxu0 %v3578
        %v3661 = vpop.f32.mrb[0].mxu0
        %v3662 = vadd.f32 0.0, %v3661
        %v3663 = vpop.f32.mrb[0].mxu0
        %3664 = vdwg.mxu0
        %s3665 = scalar_lea.vmem [#allocation4], 2048
        %v3666 = vld [vmem:[%s3665] sm:$0xff]
        %v3667 = vld [vmem:[%s3665 + $0x8] sm:$0xff]
        %v3668 = vld [vmem:[%s3665 + $0x10] sm:$0xff]
        %v3669 = vld [vmem:[%s3665 + $0x18] sm:$0xff]
        %v3670 = vld [vmem:[%s3665 + $0x20] sm:$0xff]
        %v3671 = vld [vmem:[%s3665 + $0x28] sm:$0xff]
        %v3672 = vld [vmem:[%s3665 + $0x30] sm:$0xff]
        %v3673 = vld [vmem:[%s3665 + $0x38] sm:$0xff]
        %v3674 = vld [vmem:[%s3665 + $0x40] sm:$0xff]
        %v3675 = vld [vmem:[%s3665 + $0x48] sm:$0xff]
        %v3676 = vld [vmem:[%s3665 + $0x50] sm:$0xff]
        %v3677 = vld [vmem:[%s3665 + $0x58] sm:$0xff]
        %v3678 = vld [vmem:[%s3665 + $0x60] sm:$0xff]
        %v3679 = vld [vmem:[%s3665 + $0x68] sm:$0xff]
        %v3680 = vld [vmem:[%s3665 + $0x70] sm:$0xff]
        %v3681 = vld [vmem:[%s3665 + $0x78] sm:$0xff]
        %3682 = vmatprep.subr.mxu0 0.0
        %3683 = vmatpush1.msra.mxu0 %v3666
        %3684 = vmatprep.subr.mxu0 0.0
        %3685 = vmatpush1.msra.mxu0 %v3667
        %3686 = vmatprep.subr.mxu0 0.0
        %3687 = vmatpush1.msra.mxu0 %v3668
        %3688 = vmatprep.subr.mxu0 0.0
        %3689 = vmatpush1.msra.mxu0 %v3669
        %3690 = vmatprep.subr.mxu0 0.0
        %3691 = vmatpush1.msra.mxu0 %v3670
        %3692 = vmatprep.subr.mxu0 0.0
        %3693 = vmatpush1.msra.mxu0 %v3671
        %3694 = vmatprep.subr.mxu0 0.0
        %3695 = vmatpush1.msra.mxu0 %v3672
        %3696 = vmatprep.subr.mxu0 0.0
        %3697 = vmatpush1.msra.mxu0 %v3673
        %3698 = vmatprep.subr.mxu0 0.0
        %3699 = vmatpush1.msra.mxu0 %v3674
        %3700 = vmatprep.subr.mxu0 0.0
        %3701 = vmatpush1.msra.mxu0 %v3675
        %3702 = vmatprep.subr.mxu0 0.0
        %3703 = vmatpush1.msra.mxu0 %v3676
        %3704 = vmatprep.subr.mxu0 0.0
        %3705 = vmatpush1.msra.mxu0 %v3677
        %3706 = vmatprep.subr.mxu0 0.0
        %3707 = vmatpush1.msra.mxu0 %v3678
        %3708 = vmatprep.subr.mxu0 0.0
        %3709 = vmatpush1.msra.mxu0 %v3679
        %3710 = vmatprep.subr.mxu0 0.0
        %3711 = vmatpush1.msra.mxu0 %v3680
        %3712 = vmatprep.subr.mxu0 0.0
        %3713 = vmatpush1.msra.mxu0 %v3681
        %3714 = vmatprep.subr.mxu0 0.0
        %3715 = vmatpush1.msra.mxu0 0.0
        %3716 = vmatprep.subr.mxu0 0.0
        %3717 = vmatpush1.msra.mxu0 0.0
        %3718 = vmatprep.subr.mxu0 0.0
        %3719 = vmatpush1.msra.mxu0 0.0
        %3720 = vmatprep.subr.mxu0 0.0
        %3721 = vmatpush1.msra.mxu0 0.0
        %3722 = vmatprep.subr.mxu0 0.0
        %3723 = vmatpush1.msra.mxu0 0.0
        %3724 = vmatprep.subr.mxu0 0.0
        %3725 = vmatpush1.msra.mxu0 0.0
        %3726 = vmatprep.subr.mxu0 0.0
        %3727 = vmatpush1.msra.mxu0 0.0
        %3728 = vmatprep.subr.mxu0 0.0
        %3729 = vmatpush1.msra.mxu0 0.0
        %3730 = vmatprep.subr.mxu0 0.0
        %3731 = vmatpush1.msra.mxu0 0.0
        %3732 = vmatprep.subr.mxu0 0.0
        %3733 = vmatpush1.msra.mxu0 0.0
        %3734 = vmatprep.subr.mxu0 0.0
        %3735 = vmatpush1.msra.mxu0 0.0
        %3736 = vmatprep.subr.mxu0 0.0
        %3737 = vmatpush1.msra.mxu0 0.0
        %3738 = vmatprep.subr.mxu0 0.0
        %3739 = vmatpush1.msra.mxu0 0.0
        %3740 = vmatprep.subr.mxu0 0.0
        %3741 = vmatpush1.msra.mxu0 0.0
        %3742 = vmatprep.subr.mxu0 0.0
        %3743 = vmatpush1.msra.mxu0 0.0
        %3744 = vmatprep.subr.mxu0 0.0
        %3745 = vmatpush1.msra.mxu0 0.0
        %3746 = vmatprep.mubr.f32.mxu0 0.0
        %3747 = vmatmul.mubr.f32.gmra.mrb[0].mxu0 %v3647
        %v3748 = vpop.f32.mrb[0].mxu0
        %v3749 = vadd.f32 0.0, %v3748
        %v3750 = vpop.f32.mrb[0].mxu0
        %3751 = vmatprep.mubr.f32.mxu0 0.0
        %3752 = vmatmul.mubr.f32.gmra.mrb[0].mxu0 %v3652
        %v3753 = vpop.f32.mrb[0].mxu0
        %v3754 = vadd.f32 0.0, %v3753
        %v3755 = vpop.f32.mrb[0].mxu0
        %3756 = vmatprep.mubr.f32.mxu0 0.0
        %3757 = vmatmul.mubr.f32.gmra.mrb[0].mxu0 %v3657
        %v3758 = vpop.f32.mrb[0].mxu0
        %v3759 = vadd.f32 0.0, %v3758
        %v3760 = vpop.f32.mrb[0].mxu0
        %3761 = vmatprep.mubr.f32.mxu0 0.0
        %3762 = vmatmul.mubr.f32.gmra.mrb[0].mxu0 %v3662
        %v3763 = vpop.f32.mrb[0].mxu0
        %v3764 = vadd.f32 0.0, %v3763
        %v3765 = vpop.f32.mrb[0].mxu0
        %3766 = vdwg.mxu0
        %3767 = vmatprep.subr.mxu0 0.0
        %3768 = vmatpush1.msra.mxu0 %v3547
        %3769 = vmatprep.subr.mxu0 0.0
        %3770 = vmatpush1.msra.mxu0 %v3548
        %3771 = vmatprep.subr.mxu0 0.0
        %3772 = vmatpush1.msra.mxu0 %v3549
        %3773 = vmatprep.subr.mxu0 0.0
        %3774 = vmatpush1.msra.mxu0 %v3550
        %3775 = vmatprep.subr.mxu0 0.0
        %3776 = vmatpush1.msra.mxu0 %v3551
        %3777 = vmatprep.subr.mxu0 0.0
        %3778 = vmatpush1.msra.mxu0 %v3552
        %3779 = vmatprep.subr.mxu0 0.0
        %3780 = vmatpush1.msra.mxu0 %v3553
        %3781 = vmatprep.subr.mxu0 0.0
        %3782 = vmatpush1.msra.mxu0 %v3554
        %3783 = vmatprep.subr.mxu0 0.0
        %3784 = vmatpush1.msra.mxu0 %v3555
        %3785 = vmatprep.subr.mxu0 0.0
        %3786 = vmatpush1.msra.mxu0 %v3556
        %3787 = vmatprep.subr.mxu0 0.0
        %3788 = vmatpush1.msra.mxu0 %v3557
        %3789 = vmatprep.subr.mxu0 0.0
        %3790 = vmatpush1.msra.mxu0 %v3558
        %3791 = vmatprep.subr.mxu0 0.0
        %3792 = vmatpush1.msra.mxu0 %v3559
        %3793 = vmatprep.subr.mxu0 0.0
        %3794 = vmatpush1.msra.mxu0 %v3560
        %3795 = vmatprep.subr.mxu0 0.0
        %3796 = vmatpush1.msra.mxu0 %v3561
        %3797 = vmatprep.subr.mxu0 0.0
        %3798 = vmatpush1.msra.mxu0 %v3562
        %3799 = vmatprep.subr.mxu0 0.0
        %3800 = vmatpush1.msra.mxu0 0.0
        %3801 = vmatprep.subr.mxu0 0.0
        %3802 = vmatpush1.msra.mxu0 0.0
        %3803 = vmatprep.subr.mxu0 0.0
        %3804 = vmatpush1.msra.mxu0 0.0
        %3805 = vmatprep.subr.mxu0 0.0
        %3806 = vmatpush1.msra.mxu0 0.0
        %3807 = vmatprep.subr.mxu0 0.0
        %3808 = vmatpush1.msra.mxu0 0.0
        %3809 = vmatprep.subr.mxu0 0.0
        %3810 = vmatpush1.msra.mxu0 0.0
        %3811 = vmatprep.subr.mxu0 0.0
        %3812 = vmatpush1.msra.mxu0 0.0
        %3813 = vmatprep.subr.mxu0 0.0
        %3814 = vmatpush1.msra.mxu0 0.0
        %3815 = vmatprep.subr.mxu0 0.0
        %3816 = vmatpush1.msra.mxu0 0.0
        %3817 = vmatprep.subr.mxu0 0.0
        %3818 = vmatpush1.msra.mxu0 0.0
        %3819 = vmatprep.subr.mxu0 0.0
        %3820 = vmatpush1.msra.mxu0 0.0
        %3821 = vmatprep.subr.mxu0 0.0
        %3822 = vmatpush1.msra.mxu0 0.0
        %3823 = vmatprep.subr.mxu0 0.0
        %3824 = vmatpush1.msra.mxu0 0.0
        %3825 = vmatprep.subr.mxu0 0.0
        %3826 = vmatpush1.msra.mxu0 0.0
        %3827 = vmatprep.subr.mxu0 0.0
        %3828 = vmatpush1.msra.mxu0 0.0
        %3829 = vmatprep.subr.mxu0 0.0
        %3830 = vmatpush1.msra.mxu0 0.0
        %3831 = vmatprep.mubr.f32.mxu0 0.0
        %3832 = vmatmul.mubr.f32.gmra.mrb[0].mxu0 %v3528
        %v3833 = vpop.f32.mrb[0].mxu0
        %v3834 = vadd.f32 %v3749, %v3833
        %v3835 = vpop.f32.mrb[0].mxu0
        %3836 = vmatprep.mubr.f32.mxu0 0.0
        %3837 = vmatmul.mubr.f32.gmra.mrb[0].mxu0 %v3533
        %v3838 = vpop.f32.mrb[0].mxu0
        %v3839 = vadd.f32 %v3754, %v3838
        %v3840 = vpop.f32.mrb[0].mxu0
        %3841 = vmatprep.mubr.f32.mxu0 0.0
        %3842 = vmatmul.mubr.f32.gmra.mrb[0].mxu0 %v3538
        %v3843 = vpop.f32.mrb[0].mxu0
        %v3844 = vadd.f32 %v3759, %v3843
        %v3845 = vpop.f32.mrb[0].mxu0
        %3846 = vmatprep.mubr.f32.mxu0 0.0
        %3847 = vmatmul.mubr.f32.gmra.mrb[0].mxu0 %v3543
        %v3848 = vpop.f32.mrb[0].mxu0
        %v3849 = vadd.f32 %v3764, %v3848
        %v3850 = vpop.f32.mrb[0].mxu0
        %3851 = vdwg.mxu0
        %s3852 = scalar_lea.vmem [#allocation2], 544
        %v3853 = vld [vmem:[%s3852] sm:$0xff]
        %v3854 = vld [vmem:[%s3852 + $0x8] sm:$0xff]
        %v3855 = vld [vmem:[%s3852 + $0x10] sm:$0xff]
        %v3856 = vld [vmem:[%s3852 + $0x18] sm:$0xff]
        %v3858 = vsel %vm250, %v3853, 0
        %v3861 = vsel %vm250, %v3854, 0
        %v3864 = vsel %vm250, %v3855, 0
        %v3867 = vsel %vm250, %v3856, 0
        %3869 = vmatprep.subr.mxu0 0.0
        %3870 = vmatpush1.msra.mxu0 %v3440
        %3871 = vmatprep.subr.mxu0 0.0
        %3872 = vmatpush1.msra.mxu0 %v3441
        %3873 = vmatprep.subr.mxu0 0.0
        %3874 = vmatpush1.msra.mxu0 %v3442
        %3875 = vmatprep.subr.mxu0 0.0
        %3876 = vmatpush1.msra.mxu0 %v3443
        %3877 = vmatprep.subr.mxu0 0.0
        %3878 = vmatpush1.msra.mxu0 0.0
        %3879 = vmatprep.subr.mxu0 0.0
        %3880 = vmatpush1.msra.mxu0 0.0
        %3881 = vmatprep.subr.mxu0 0.0
        %3882 = vmatpush1.msra.mxu0 0.0
        %3883 = vmatprep.subr.mxu0 0.0
        %3884 = vmatpush1.msra.mxu0 0.0
        %3885 = vmatprep.subr.mxu0 0.0
        %3886 = vmatpush1.msra.mxu0 0.0
        %3887 = vmatprep.subr.mxu0 0.0
        %3888 = vmatpush1.msra.mxu0 0.0
        %3889 = vmatprep.subr.mxu0 0.0
        %3890 = vmatpush1.msra.mxu0 0.0
        %3891 = vmatprep.subr.mxu0 0.0
        %3892 = vmatpush1.msra.mxu0 0.0
        %3893 = vmatprep.subr.mxu0 0.0
        %3894 = vmatpush1.msra.mxu0 0.0
        %3895 = vmatprep.subr.mxu0 0.0
        %3896 = vmatpush1.msra.mxu0 0.0
        %3897 = vmatprep.subr.mxu0 0.0
        %3898 = vmatpush1.msra.mxu0 0.0
        %3899 = vmatprep.subr.mxu0 0.0
        %3900 = vmatpush1.msra.mxu0 0.0
        %3901 = vmatprep.subr.mxu0 0.0
        %3902 = vmatpush1.msra.mxu0 0.0
        %3903 = vmatprep.subr.mxu0 0.0
        %3904 = vmatpush1.msra.mxu0 0.0
        %3905 = vmatprep.subr.mxu0 0.0
        %3906 = vmatpush1.msra.mxu0 0.0
        %3907 = vmatprep.subr.mxu0 0.0
        %3908 = vmatpush1.msra.mxu0 0.0
        %3909 = vmatprep.subr.mxu0 0.0
        %3910 = vmatpush1.msra.mxu0 0.0
        %3911 = vmatprep.subr.mxu0 0.0
        %3912 = vmatpush1.msra.mxu0 0.0
        %3913 = vmatprep.subr.mxu0 0.0
        %3914 = vmatpush1.msra.mxu0 0.0
        %3915 = vmatprep.subr.mxu0 0.0
        %3916 = vmatpush1.msra.mxu0 0.0
        %3917 = vmatprep.subr.mxu0 0.0
        %3918 = vmatpush1.msra.mxu0 0.0
        %3919 = vmatprep.subr.mxu0 0.0
        %3920 = vmatpush1.msra.mxu0 0.0
        %3921 = vmatprep.subr.mxu0 0.0
        %3922 = vmatpush1.msra.mxu0 0.0
        %3923 = vmatprep.subr.mxu0 0.0
        %3924 = vmatpush1.msra.mxu0 0.0
        %3925 = vmatprep.subr.mxu0 0.0
        %3926 = vmatpush1.msra.mxu0 0.0
        %3927 = vmatprep.subr.mxu0 0.0
        %3928 = vmatpush1.msra.mxu0 0.0
        %3929 = vmatprep.subr.mxu0 0.0
        %3930 = vmatpush1.msra.mxu0 0.0
        %3931 = vmatprep.subr.mxu0 0.0
        %3932 = vmatpush1.msra.mxu0 0.0
        %3933 = vmatprep.mubr.f32.mxu0 0.0
        %3934 = vmatmul.mubr.f32.gmra.mrb[0].mxu0 %v3858
        %v3935 = vpop.f32.mrb[0].mxu0
        %v3936 = vadd.f32 0.0, %v3935
        %v3937 = vpop.f32.mrb[0].mxu0
        %3938 = vmatprep.mubr.f32.mxu0 0.0
        %3939 = vmatmul.mubr.f32.gmra.mrb[0].mxu0 %v3861
        %v3940 = vpop.f32.mrb[0].mxu0
        %v3941 = vadd.f32 0.0, %v3940
        %v3942 = vpop.f32.mrb[0].mxu0
        %3943 = vmatprep.mubr.f32.mxu0 0.0
        %3944 = vmatmul.mubr.f32.gmra.mrb[0].mxu0 %v3864
        %v3945 = vpop.f32.mrb[0].mxu0
        %v3946 = vadd.f32 0.0, %v3945
        %v3947 = vpop.f32.mrb[0].mxu0
        %3948 = vmatprep.mubr.f32.mxu0 0.0
        %3949 = vmatmul.mubr.f32.gmra.mrb[0].mxu0 %v3867
        %v3950 = vpop.f32.mrb[0].mxu0
        %v3951 = vadd.f32 0.0, %v3950
        %v3952 = vpop.f32.mrb[0].mxu0
        %3953 = vdwg.mxu0
        %s3954 = scalar_lea.vmem [#allocation4], 2176
        %v3955 = vld [vmem:[%s3954] sm:$0xff]
        %v3956 = vld [vmem:[%s3954 + $0x8] sm:$0xff]
        %v3957 = vld [vmem:[%s3954 + $0x10] sm:$0xff]
        %v3958 = vld [vmem:[%s3954 + $0x18] sm:$0xff]
        %v3959 = vld [vmem:[%s3954 + $0x20] sm:$0xff]
        %v3960 = vld [vmem:[%s3954 + $0x28] sm:$0xff]
        %v3961 = vld [vmem:[%s3954 + $0x30] sm:$0xff]
        %v3962 = vld [vmem:[%s3954 + $0x38] sm:$0xff]
        %v3963 = vld [vmem:[%s3954 + $0x40] sm:$0xff]
        %v3964 = vld [vmem:[%s3954 + $0x48] sm:$0xff]
        %v3965 = vld [vmem:[%s3954 + $0x50] sm:$0xff]
        %v3966 = vld [vmem:[%s3954 + $0x58] sm:$0xff]
        %v3967 = vld [vmem:[%s3954 + $0x60] sm:$0xff]
        %v3968 = vld [vmem:[%s3954 + $0x68] sm:$0xff]
        %v3969 = vld [vmem:[%s3954 + $0x70] sm:$0xff]
        %v3970 = vld [vmem:[%s3954 + $0x78] sm:$0xff]
        %3971 = vmatprep.subr.mxu0 0.0
        %3972 = vmatpush1.msra.mxu0 %v3955
        %3973 = vmatprep.subr.mxu0 0.0
        %3974 = vmatpush1.msra.mxu0 %v3956
        %3975 = vmatprep.subr.mxu0 0.0
        %3976 = vmatpush1.msra.mxu0 %v3957
        %3977 = vmatprep.subr.mxu0 0.0
        %3978 = vmatpush1.msra.mxu0 %v3958
        %3979 = vmatprep.subr.mxu0 0.0
        %3980 = vmatpush1.msra.mxu0 %v3959
        %3981 = vmatprep.subr.mxu0 0.0
        %3982 = vmatpush1.msra.mxu0 %v3960
        %3983 = vmatprep.subr.mxu0 0.0
        %3984 = vmatpush1.msra.mxu0 %v3961
        %3985 = vmatprep.subr.mxu0 0.0
        %3986 = vmatpush1.msra.mxu0 %v3962
        %3987 = vmatprep.subr.mxu0 0.0
        %3988 = vmatpush1.msra.mxu0 %v3963
        %3989 = vmatprep.subr.mxu0 0.0
        %3990 = vmatpush1.msra.mxu0 %v3964
        %3991 = vmatprep.subr.mxu0 0.0
        %3992 = vmatpush1.msra.mxu0 %v3965
        %3993 = vmatprep.subr.mxu0 0.0
        %3994 = vmatpush1.msra.mxu0 %v3966
        %3995 = vmatprep.subr.mxu0 0.0
        %3996 = vmatpush1.msra.mxu0 %v3967
        %3997 = vmatprep.subr.mxu0 0.0
        %3998 = vmatpush1.msra.mxu0 %v3968
        %3999 = vmatprep.subr.mxu0 0.0
        %4000 = vmatpush1.msra.mxu0 %v3969
        %4001 = vmatprep.subr.mxu0 0.0
        %4002 = vmatpush1.msra.mxu0 %v3970
        %4003 = vmatprep.subr.mxu0 0.0
        %4004 = vmatpush1.msra.mxu0 0.0
        %4005 = vmatprep.subr.mxu0 0.0
        %4006 = vmatpush1.msra.mxu0 0.0
        %4007 = vmatprep.subr.mxu0 0.0
        %4008 = vmatpush1.msra.mxu0 0.0
        %4009 = vmatprep.subr.mxu0 0.0
        %4010 = vmatpush1.msra.mxu0 0.0
        %4011 = vmatprep.subr.mxu0 0.0
        %4012 = vmatpush1.msra.mxu0 0.0
        %4013 = vmatprep.subr.mxu0 0.0
        %4014 = vmatpush1.msra.mxu0 0.0
        %4015 = vmatprep.subr.mxu0 0.0
        %4016 = vmatpush1.msra.mxu0 0.0
        %4017 = vmatprep.subr.mxu0 0.0
        %4018 = vmatpush1.msra.mxu0 0.0
        %4019 = vmatprep.subr.mxu0 0.0
        %4020 = vmatpush1.msra.mxu0 0.0
        %4021 = vmatprep.subr.mxu0 0.0
        %4022 = vmatpush1.msra.mxu0 0.0
        %4023 = vmatprep.subr.mxu0 0.0
        %4024 = vmatpush1.msra.mxu0 0.0
        %4025 = vmatprep.subr.mxu0 0.0
        %4026 = vmatpush1.msra.mxu0 0.0
        %4027 = vmatprep.subr.mxu0 0.0
        %4028 = vmatpush1.msra.mxu0 0.0
        %4029 = vmatprep.subr.mxu0 0.0
        %4030 = vmatpush1.msra.mxu0 0.0
        %4031 = vmatprep.subr.mxu0 0.0
        %4032 = vmatpush1.msra.mxu0 0.0
        %4033 = vmatprep.subr.mxu0 0.0
        %4034 = vmatpush1.msra.mxu0 0.0
        %4035 = vmatprep.mubr.f32.mxu0 0.0
        %4036 = vmatmul.mubr.f32.gmra.mrb[0].mxu0 %v3936
        %v4037 = vpop.f32.mrb[0].mxu0
        %v4038 = vadd.f32 0.0, %v4037
        %v4039 = vpop.f32.mrb[0].mxu0
        %4040 = vmatprep.mubr.f32.mxu0 0.0
        %4041 = vmatmul.mubr.f32.gmra.mrb[0].mxu0 %v3941
        %v4042 = vpop.f32.mrb[0].mxu0
        %v4043 = vadd.f32 0.0, %v4042
        %v4044 = vpop.f32.mrb[0].mxu0
        %4045 = vmatprep.mubr.f32.mxu0 0.0
        %4046 = vmatmul.mubr.f32.gmra.mrb[0].mxu0 %v3946
        %v4047 = vpop.f32.mrb[0].mxu0
        %v4048 = vadd.f32 0.0, %v4047
        %v4049 = vpop.f32.mrb[0].mxu0
        %4050 = vmatprep.mubr.f32.mxu0 0.0
        %4051 = vmatmul.mubr.f32.gmra.mrb[0].mxu0 %v3951
        %v4052 = vpop.f32.mrb[0].mxu0
        %v4053 = vadd.f32 0.0, %v4052
        %v4054 = vpop.f32.mrb[0].mxu0
        %4055 = vdwg.mxu0
        %v4056 = vadd.f32 %v3834, %v4038
        %v4057 = vadd.f32 %v3839, %v4043
        %v4058 = vadd.f32 %v3844, %v4048
        %v4059 = vadd.f32 %v3849, %v4053
        %s4060 = scalar_lea.vmem [#allocation6], 5
        %v4061 = vld [vmem:[%s4060] sm:$0x1]
        %v4063 = vlaneseq
        %v4064 = vshrl.u32 %v4063, 7
        %v4065 = vsub.s32 0, %v4064
        %v4066 = vrot.slane %v4061, %v4065
        %v4068 = vadd.f32 %v4056, %v4066
        %v4069 = vadd.f32 %v4057, %v4066
        %v4070 = vadd.f32 %v4058, %v4066
        %v4071 = vadd.f32 %v4059, %v4066
        %vm4072 = vcmp.gt.f32.partialorder %v4068, 0.0
        %vm4073 = vcmp.gt.f32.partialorder %v4069, 0.0
        %vm4074 = vcmp.gt.f32.partialorder %v4070, 0.0
        %vm4075 = vcmp.gt.f32.partialorder %v4071, 0.0
        %v4076 = vmul.f32 %v4068, 0.01
        %v4077 = vmul.f32 %v4069, 0.01
        %v4078 = vmul.f32 %v4070, 0.01
        %v4079 = vmul.f32 %v4071, 0.01
        %v4080 = vsel %vm4072, %v4068, %v4076
        %v4081 = vsel %vm4073, %v4069, %v4077
        %v4082 = vsel %vm4074, %v4070, %v4078
        %v4083 = vsel %vm4075, %v4071, %v4079
        %4084 = vst [vmem:[%s241] sm:$0xff] %v4080
        %4085 = vst [vmem:[%s241 + $0x8] sm:$0xff] %v4081
        %4086 = vst [vmem:[%s241 + $0x10] sm:$0xff] %v4082
        %4087 = vst [vmem:[%s241 + $0x18] sm:$0xff] %v4083
        %p4088 = scmp.lt.s32.totalorder %s17, 1
        %s4089 = scalar_select %p4088, %s17, 1
        %s4090 = smul.addr %s4089, 4
        %s4091 = smul.addr %s4090, 8
        %s4092 = scalar_lea.vmem %s4, %s4091
        // Predicated region
        $region49: #{forward.1} parent=35 // pred_check
          %p4093 = pneg %p124
        $region50: #{forward.1} parent=35 // pred_check_branch
          %4095 = sbr.rel (%p4093) target = $region52
        $region51: #{forward.1} parent=35 // pred_region
          _
        $region52: #{forward.1} parent=35 // pred_fallthru
          _
      $region36: #{forward.1} parent=5 // pred_fallthru
        _
      %p4096 = scmp.le.s32.totalorder 2, %s12
      // Predicated region
      $region53: #{forward.1} parent=5 // pred_check
        %p4097 = pneg %p4096
      $region54: #{forward.1} parent=5 // pred_check_branch
        %4099 = sbr.rel (%p4097) target = $region56
      $region55: #{forward.1} parent=5 // pred_region
        %s4100 = ssub.s32 %s12, 2
        // Predicated region
        $region57: #{forward.1} parent=55 // pred_check
          %p4101 = pneg %p130
        $region58: #{forward.1} parent=55 // pred_check_branch
          %4103 = sbr.rel (%p4101) target = $region60
        $region59: #{forward.1} parent=55 // pred_region
          %p4104 = scmp.lt.s32.totalorder %s18, 1
          %s4105 = scalar_select %p4104, %s18, 1
          %s4106 = smul.addr %s4105, 4
          %s4107 = smul.addr %s4106, 8
          %s4108 = scalar_lea.vmem %s4, %s4107
        $region60: #{forward.1} parent=55 // pred_fallthru
          _
      $region56: #{forward.1} parent=5 // pred_fallthru
        _
    $region6: #{forward.1} parent=1 // loop_footer
      %s16 = sadd.s32 1, %s12
    $region7: #{forward.1} parent=1 // loop_footer_branch
      %11 = sbr.rel target = $region3
    $region8: #{forward.1} parent=1 // loop_exit
      _
    %4109 = vsyncpa [#allocation3], 1
    %s4110 = scalar_lea.sflag [#allocation3], 1
    %4111 = vsyncpa %s4110, 1
    %4112 = vsyncpa [#allocation5], 1

</llo_original>
